<compile_context>
chip_gen: v7x
topology: tpu7x:2x2x1
jax: 0.10.0
libtpu: 0.0.40
codegen_flags: <defaults>
</compile_context>

<pallas_src>
import math

import numpy as np
import jax
import jax.numpy as jnp
from jax.experimental import pallas as pl
from jax.experimental.pallas import tpu as pltpu


# ----------------------------- Pallas kernels ------------------------------

def _att_fused_kernel(key_ref, qry_ref, val_ref, wk1_ref, wk2_ref, wq1_ref, wq2_ref,
                      dct_ref, out_ref):
    """One body part per grid step: convK + convQ + attention + value DCT, fully fused.

    key_ref : [1, bs, Lk, cmax]        raw key frames (time-major, channels last)
    qry_ref : [1, bs, Lq, cmax]        raw query frames
    val_ref : [1, bs*vl, vn, cmax]     raw value windows (row b*vl+t, n, c = src[b, n+t, c])
    wk1_ref : [1, K1, cmax, dm]        convK conv-1 weight (bf16, time-major layout)
    wk2_ref : [1, K2, dm, dm]          convK conv-2 weight (bf16)
    wq1_ref / wq2_ref                  convQ weights (bf16)
    dct_ref : [dct_n, vl]              DCT rows (f32)
    out_ref : [1, bs, dct_n, cmax]
    """
    f32 = jnp.float32
    bf16 = jnp.bfloat16

    bs = key_ref.shape[1]
    dm = wk1_ref.shape[3]
    vl = dct_ref.shape[1]

    def two_convs(x2d, w1, w2):
        # x2d: [L, cmax] f32 ; w1: [K1, cmax, dm] bf16 ; w2: [K2, dm, dm] bf16
        k1 = w1.shape[0]
        k2 = w2.shape[0]
        l0 = x2d.shape[0]
        l1 = l0 - k1 + 1
        l2 = l1 - k2 + 1
        # Conv1d(k=k1) as k1 shifted-slice matmuls (im2col stays in VMEM).
        h = jnp.dot(x2d[0:l1, :].astype(bf16), w1[0], preferred_element_type=f32)
        for k in range(1, k1):
            h = h + jnp.dot(x2d[k:k + l1, :].astype(bf16), w1[k],
                            preferred_element_type=f32)
        h = jnp.maximum(h, 0.0)                      # ReLU (f32)
        g = jnp.dot(h[0:l2, :].astype(bf16), w2[0], preferred_element_type=f32)
        for k in range(1, k2):
            g = g + jnp.dot(h[k:k + l2, :].astype(bf16), w2[k],
                            preferred_element_type=f32)
        return jnp.maximum(g, 0.0)                   # [l2, dm] f32

    key_x = key_ref[0] / f32(1000.0)                 # [bs, Lk, cmax]
    qry_x = qry_ref[0] / f32(1000.0)                 # [bs, Lq, cmax]
    val = val_ref[0]                                 # [bs*vl, vn, cmax] f32
    dct = dct_ref[...]                               # [dct_n, vl] f32
    wk1 = wk1_ref[0]
    wk2 = wk2_ref[0]
    wq1 = wq1_ref[0]
    wq2 = wq2_ref[0]

    for b in range(bs):                              # bs is small & static
        kb = two_convs(key_x[b], wk1, wk2)           # [vn, dm]  keys (time-major)
        qb = two_convs(qry_x[b], wq1, wq2)           # [1, dm]   single query
        # Score on the VPU (broadcast multiply + lane reduce): no M=1 MXU matmul.
        sc = jnp.sum(kb * qb, axis=-1, keepdims=True) + f32(1e-15)        # [vn, 1]
        attb = sc / jnp.sum(sc, axis=0, keepdims=True)                    # [vn, 1]
        # Attention-weighted raw window, then DCT (linear ops commute with the
        # original "DCT every window, then attend" ordering -> same result, less work).
        val_b = val[b * vl:(b + 1) * vl, :, :]                            # [vl, vn, cmax]
        wgt = jnp.sum(val_b * attb[None, :, :], axis=1)                   # [vl, cmax]
        out_ref[0, b] = jnp.dot(dct, wgt, preferred_element_type=f32)     # [dct_n, cmax]


def _gcn_fused_kernel(*refs):
    """Entire GCN (input DCT + gc1 + BN + tanh + residual blocks + gc7 + skip + iDCT)
    in a single grid step; activations stay VMEM/vreg-resident.

    refs layout (inputs, then the single output ref):
      0: gin   [bs, F, vl]      GCN input frames, feature-major (f32)
      1: datt  [bs, F, dct_n]   attention DCT output, scattered over joints (f32)
      2: dctT  [vl, dct_n]      DCT^T  (f32)
      3: idctT [dct_n, vl]      iDCT^T (f32)
      4..: gc1 (w, att, b, bn_scale, bn_shift)
           per residual block: (wA, attA, bA, sA, tA, wB, attB, bB, sB, tB)
           gc7 (w, att, b)
      -1: out  [bs, F, vl]
    """
    f32 = jnp.float32
    bf16 = jnp.bfloat16

    out_ref = refs[-1]
    n_in = len(refs) - 1
    num_stage = (n_in - 12) // 10

    gin = refs[0][...]                               # [bs, F, vl]
    datt = refs[1][...]                              # [bs, F, dct_n]
    dctT = refs[2][...]                              # [vl, dct_n]
    idctT = refs[3][...]                             # [dct_n, vl]
    bs, F, _ = gin.shape
    dct_n = dctT.shape[1]

    cursor = [4]

    def take(n):
        c = cursor[0]
        cursor[0] = c + n
        return refs[c:c + n]

    def rowcat(lst):
        return lst[0] if len(lst) == 1 else jnp.concatenate(lst, axis=0)

    def att_mm(att, sup_rows, b2):
        # node mixing per batch: att @ support + bias
        return [jnp.dot(att, sup_rows[b * F:(b + 1) * F, :].astype(bf16),
                        preferred_element_type=f32) + b2 for b in range(bs)]

    def gconv(x_list, w_ref, a_ref, b_ref):
        # GraphConvolution: att @ (x @ w) + b ; feature matmul batched to M = bs*node_n.
        sup = jnp.dot(rowcat(x_list).astype(bf16), w_ref[...],
                      preferred_element_type=f32)
        return att_mm(a_ref[...], sup, b_ref[...])

    def bn_tanh(y_list, s_ref, t_ref):
        # eval-mode BatchNorm1d over flattened (node, channel) = per-element affine.
        s = s_ref[...]
        t = t_ref[...]
        return [jnp.tanh(y * s + t) for y in y_list]

    # Input DCT (kept in f32; reused by the final skip connection).
    di = [jnp.dot(gin[b], dctT, preferred_element_type=f32) for b in range(bs)]  # [F, dct_n]
    da = [datt[b] for b in range(bs)]                                            # [F, dct_n]

    # gc1: split the weight along its input dim so concat([dct_in, dct_att], -1) @ w1
    # becomes dct_in @ w1[:dct_n] + dct_att @ w1[dct_n:]  (no lane concat needed).
    w1_ref, a1_ref, b1_ref, s1_ref, t1_ref = take(5)
    w1 = w1_ref[...]
    sup1 = (jnp.dot(rowcat(di).astype(bf16), w1[:dct_n, :], preferred_element_type=f32)
            + jnp.dot(rowcat(da).astype(bf16), w1[dct_n:, :], preferred_element_type=f32))
    y = att_mm(a1_ref[...], sup1, b1_ref[...])
    y = bn_tanh(y, s1_ref, t1_ref)                   # dropout = identity (eval)

    for _ in range(num_stage):                       # GC_Block + residual
        wA, aA, bA, sA, tA, wB, aB, bB, sB, tB = take(10)
        r = y
        y = bn_tanh(gconv(y, wA, aA, bA), sA, tA)
        y = bn_tanh(gconv(y, wB, aB, bB), sB, tB)
        y = [yb + rb for yb, rb in zip(y, r)]

    w7, a7, b7 = take(3)
    y = gconv(y, w7, a7, b7)                         # [F, 2*dct_n] per batch

    # Skip connection + iDCT of the first dct_n coefficients:
    #   (gc7(y) + x)[:, :dct_n] == y7[:, :dct_n] + dct_in
    for b in range(bs):
        coeff = y[b][:, :dct_n] + di[b]                                   # [F, dct_n]
        out_ref[b] = jnp.dot(coeff, idctT, preferred_element_type=f32)    # [F, vl]


# ----------------------------- pallas_call wrappers -------------------------

def _full_spec(arr):
    nd = arr.ndim
    return pl.BlockSpec(arr.shape, lambda *_: (0,) * nd)


def pallas_attention_stage(key_x, qry_x, val_x, wk1, wk2, wq1, wq2, dct_sub):
    P, bs = key_x.shape[0], key_x.shape[1]
    cmax = key_x.shape[3]
    dct_n = dct_sub.shape[0]

    def part_block(a):
        nd = a.ndim
        return pl.BlockSpec((1,) + a.shape[1:], lambda p: (p,) + (0,) * (nd - 1))

    return pl.pallas_call(
        _att_fused_kernel,
        out_shape=jax.ShapeDtypeStruct((P, bs, dct_n, cmax), jnp.float32),
        grid=(P,),
        in_specs=[part_block(key_x), part_block(qry_x), part_block(val_x),
                  part_block(wk1), part_block(wk2), part_block(wq1), part_block(wq2),
                  pl.BlockSpec(dct_sub.shape, lambda p: (0, 0))],
        out_specs=pl.BlockSpec((1, bs, dct_n, cmax), lambda p: (p, 0, 0, 0)),
        compiler_params=pltpu.CompilerParams(dimension_semantics=("parallel",)),
    )(key_x, qry_x, val_x, wk1, wk2, wq1, wq2, dct_sub)


def pallas_gcn_stage(flat_inputs, bs, node_n, vl):
    return pl.pallas_call(
        _gcn_fused_kernel,
        out_shape=jax.ShapeDtypeStruct((bs, node_n, vl), jnp.float32),
        grid=(1,),
        in_specs=[_full_spec(a) for a in flat_inputs],
        out_specs=pl.BlockSpec((bs, node_n, vl), lambda i: (0, 0, 0)),
        compiler_params=pltpu.CompilerParams(dimension_semantics=("arbitrary",)),
    )(*flat_inputs)


# ----------------------------- JAX glue ------------------------------------

def get_dct_matrix(N):
    dct_m = np.eye(N)
    for k in np.arange(N):
        for i in np.arange(N):
            w = np.sqrt(2.0 / N)
            if k == 0:
                w = np.sqrt(1.0 / N)
            dct_m[k, i] = w * np.cos(np.pi * (i + 0.5) * k / N)
    idct_m = np.linalg.inv(dct_m)
    return dct_m, idct_m


def _conv_w_time_major(w, cmax):
    # torch Conv1d weight [cout, cin, K] -> [K, cmax, cout], cin zero-padded to cmax, bf16.
    wr = jnp.transpose(w, (2, 1, 0))
    cin = wr.shape[1]
    if cin < cmax:
        wr = jnp.pad(wr, ((0, 0), (0, cmax - cin), (0, 0)))
    return wr.astype(jnp.bfloat16)


def att_model_per_parts_forward(params, src, *, output_n, input_n, kernel_size, dct_n,
                                in_features, parts_idx, itera=1):
    assert itera == 1  # TODO(synk): itera>1 autoregressive refinement not implemented.
    bs = src.shape[0]
    F = in_features
    cmax = max(len(p) for p in parts_idx)
    d_model = params["convQ"][0]["w1"].shape[0]

    vl = kernel_size + output_n
    vn = input_n - kernel_size - output_n + 1
    Lk = input_n - output_n

    src_tmp = src[:, :input_n].astype(jnp.float32)               # [bs, input_n, F]
    src_t = jnp.transpose(src_tmp, (0, 2, 1))                    # [bs, F, input_n]
    src_key = src_t[:, :, :Lk]                                   # [bs, F, Lk]
    src_qry = src_t[:, :, -kernel_size:]                         # [bs, F, ks]

    dct_m_np, idct_m_np = get_dct_matrix(vl)
    dct_sub = jnp.asarray(dct_m_np[:dct_n], jnp.float32)                    # [dct_n, vl]
    dct_sub_T = jnp.asarray(dct_m_np[:dct_n].T.copy(), jnp.float32)         # [vl, dct_n]
    idct_sub_T = jnp.asarray(idct_m_np[:, :dct_n].T.copy(), jnp.float32)    # [dct_n, vl]

    # raw value windows, time-major: win_t[b, t, n, f] = src[b, n + t, f]
    idx_win = np.arange(vl)[None, :] + np.arange(vn)[:, None]    # [vn, vl]
    src_win_t = jnp.transpose(src_tmp[:, idx_win], (0, 2, 1, 3)) # [bs, vl, vn, F]

    key_x, qry_x, val_x = [], [], []
    wk1s, wk2s, wq1s, wq2s = [], [], [], []
    for ii, pidx in enumerate(parts_idx):
        pidx_pad = np.array(list(pidx) + [0] * (cmax - len(pidx)), dtype=np.int32)
        key_x.append(jnp.transpose(src_key[:, pidx_pad, :], (0, 2, 1)))     # [bs, Lk, cmax]
        qry_x.append(jnp.transpose(src_qry[:, pidx_pad, :], (0, 2, 1)))     # [bs, ks, cmax]
        val_x.append(src_win_t[..., pidx_pad].reshape(bs * vl, vn, cmax))   # [bs*vl, vn, cmax]
        wk1s.append(_conv_w_time_major(params["convK"][ii]["w1"], cmax))
        wk2s.append(_conv_w_time_major(params["convK"][ii]["w2"], d_model))
        wq1s.append(_conv_w_time_major(params["convQ"][ii]["w1"], cmax))
        wq2s.append(_conv_w_time_major(params["convQ"][ii]["w2"], d_model))

    # ---- fused attention stage: ONE pallas_call for all parts -------------
    att_out = pallas_attention_stage(
        jnp.stack(key_x), jnp.stack(qry_x), jnp.stack(val_x),
        jnp.stack(wk1s), jnp.stack(wk2s), jnp.stack(wq1s), jnp.stack(wq2s),
        dct_sub)                                                  # [P, bs, dct_n, cmax]

    att_out = jnp.transpose(att_out, (0, 1, 3, 2))                # [P, bs, cmax, dct_n]
    dct_att = jnp.zeros((bs, F, dct_n), jnp.float32)
    for ii, pidx in enumerate(parts_idx):
        dct_att = dct_att.at[:, np.array(pidx), :].set(att_out[ii, :, :len(pidx), :])

    # ---- fused GCN stage: ONE pallas_call ----------------------------------
    idx_pad = np.mod(np.array(list(range(-kernel_size, 0)) + [-1] * output_n), input_n)
    gin = src_t[:, :, idx_pad]                                    # [bs, F, vl]

    gcn = params["gcn"]

    def bn_affine(bnp):
        scale = bnp["gamma"] / jnp.sqrt(bnp["var"] + 1e-5)
        shift = bnp["beta"] - bnp["mean"] * scale
        return [scale.reshape(F, -1).astype(jnp.float32),
                shift.reshape(F, -1).astype(jnp.float32)]

    def gc_inputs(g):
        return [g["w"].astype(jnp.bfloat16), g["att"].astype(jnp.bfloat16),
                g["b"].reshape(1, -1).astype(jnp.float32)]

    flat = [gin, dct_att, dct_sub_T, idct_sub_T]
    flat += gc_inputs(gcn["gc1"]) + bn_affine(gcn["bn1"])
    for blk in gcn["blocks"]:
        flat += gc_inputs(blk["gc1"]) + bn_affine(blk["bn1"])
        flat += gc_inputs(blk["gc2"]) + bn_affine(blk["bn2"])
    flat += gc_inputs(gcn["gc7"])

    out_T = pallas_gcn_stage(flat, bs, F, vl)                     # [bs, F, vl]
    out_gcn = jnp.transpose(out_T, (0, 2, 1))                     # [bs, vl, F]
    return out_gcn[:, :, None, :]                                 # [bs, vl, itera=1, F]


# ----------------------------- Parameter init (deterministic, synthetic) ----

def init_params(key, in_features, d_model, dct_n, num_stage, parts_idx):
    keys = iter(jax.random.split(key, 256))

    def nrm(shape, scale):
        return jax.random.normal(next(keys), shape, dtype=jnp.float32) * scale

    def conv_branch(cin):
        return {"w1": nrm((d_model, cin, 6), 1.0 / math.sqrt(cin * 6)),
                "w2": nrm((d_model, d_model, 5), 1.0 / math.sqrt(d_model * 5))}

    params = {"convQ": [conv_branch(len(p)) for p in parts_idx],
              "convK": [conv_branch(len(p)) for p in parts_idx]}

    node_n = in_features
    fin = dct_n * 2
    hid = d_model

    def gc(fi, fo):
        stdv = 1.0 / math.sqrt(fo)
        return {"w": jax.random.uniform(next(keys), (fi, fo), jnp.float32, -stdv, stdv),
                "att": jax.random.uniform(next(keys), (node_n, node_n), jnp.float32, -stdv, stdv),
                "b": jax.random.uniform(next(keys), (fo,), jnp.float32, -stdv, stdv)}

    def bn(n):
        return {"gamma": jnp.ones((n,), jnp.float32), "beta": jnp.zeros((n,), jnp.float32),
                "mean": jnp.zeros((n,), jnp.float32), "var": jnp.ones((n,), jnp.float32)}

    gcn = {"gc1": gc(fin, hid), "bn1": bn(node_n * hid),
           "blocks": [{"gc1": gc(hid, hid), "bn1": bn(node_n * hid),
                       "gc2": gc(hid, hid), "bn2": bn(node_n * hid)} for _ in range(num_stage)],
           "gc7": gc(hid, fin)}
    params["gcn"] = gcn
    return params


# ----------------------------- main -----------------------------------------

if __name__ == "__main__":
    # Small shapes consistent with the module's structure (kernel_size must be 10).
    bs = 2
    in_features = 16          # feat_dim / node_n
    kernel_size = 10
    d_model = 32
    num_stage = 1
    dct_n = 8
    parts_idx = [[1, 2, 3], [4, 5, 6]]
    input_n = 30
    output_n = 10

    key = jax.random.PRNGKey(0)
    kp, kx = jax.random.split(key)
    params = init_params(kp, in_features, d_model, dct_n, num_stage, parts_idx)
    src = jax.random.normal(kx, (bs, input_n, in_features), dtype=jnp.float32) * 100.0

    fwd = jax.jit(lambda p, s: att_model_per_parts_forward(
        p, s, output_n=output_n, input_n=input_n, kernel_size=kernel_size,
        dct_n=dct_n, in_features=in_features, parts_idx=parts_idx, itera=1))

    out = jax.block_until_ready(fwd(params, src))

    assert out.shape == (bs, kernel_size + output_n, 1, in_features), out.shape
    assert bool(jnp.all(jnp.isfinite(out)))
    print("KERNEL_OK")
</pallas_src>

<mosaic_0001>
module attributes {stable_mosaic.version = 11 : i64} {
  func.func @_att_fused_kernel(%arg0: i32, %arg1: memref<1x2x20x3xf32, #tpu.memory_space<vmem>>, %arg2: memref<1x2x10x3xf32, #tpu.memory_space<vmem>>, %arg3: memref<1x40x11x3xf32, #tpu.memory_space<vmem>>, %arg4: memref<1x6x3x32xbf16, #tpu.memory_space<vmem>>, %arg5: memref<1x5x32x32xbf16, #tpu.memory_space<vmem>>, %arg6: memref<1x6x3x32xbf16, #tpu.memory_space<vmem>>, %arg7: memref<1x5x32x32xbf16, #tpu.memory_space<vmem>>, %arg8: memref<8x20xf32, #tpu.memory_space<vmem>>, %arg9: memref<1x2x8x3xf32, #tpu.memory_space<vmem>>) attributes {dimension_semantics = [#tpu.dimension_semantics<parallel>], iteration_bounds = array<i64: 2>, scalar_prefetch = 0 : i64, scratch_operands = 0 : i64, tpu.core_type = #tpu.core_type<tc>, window_params = [{transform_indices = @transform_0, window_bounds = array<i64: 1, 2, 20, 3>}, {transform_indices = @transform_1, window_bounds = array<i64: 1, 2, 10, 3>}, {transform_indices = @transform_2, window_bounds = array<i64: 1, 40, 11, 3>}, {transform_indices = @transform_3, window_bounds = array<i64: 1, 6, 3, 32>}, {transform_indices = @transform_4, window_bounds = array<i64: 1, 5, 32, 32>}, {transform_indices = @transform_5, window_bounds = array<i64: 1, 6, 3, 32>}, {transform_indices = @transform_6, window_bounds = array<i64: 1, 5, 32, 32>}, {pipeline_mode = #tpu.pipeline_mode<synchronous>, transform_indices = @transform_7, window_bounds = array<i64: 8, 20>}, {transform_indices = @transform_8, window_bounds = array<i64: 1, 2, 8, 3>}]} {
    %c0 = arith.constant 0 : index
    %c0_0 = arith.constant 0 : index
    %c0_1 = arith.constant 0 : index
    %c0_2 = arith.constant 0 : index
    %0 = vector.load %arg1[%c0, %c0_0, %c0_1, %c0_2] : memref<1x2x20x3xf32, #tpu.memory_space<vmem>>, vector<1x2x20x3xf32>
    %1 = vector.shape_cast %0 : vector<1x2x20x3xf32> to vector<2x20x3xf32>
    %cst = arith.constant 1.000000e+03 : f32
    %2 = vector.broadcast %cst : f32 to vector<2x20x3xf32>
    %3 = arith.divf %1, %2 : vector<2x20x3xf32>
    %c0_3 = arith.constant 0 : index
    %c0_4 = arith.constant 0 : index
    %c0_5 = arith.constant 0 : index
    %c0_6 = arith.constant 0 : index
    %4 = vector.load %arg2[%c0_3, %c0_4, %c0_5, %c0_6] : memref<1x2x10x3xf32, #tpu.memory_space<vmem>>, vector<1x2x10x3xf32>
    %5 = vector.shape_cast %4 : vector<1x2x10x3xf32> to vector<2x10x3xf32>
    %cst_7 = arith.constant 1.000000e+03 : f32
    %6 = vector.broadcast %cst_7 : f32 to vector<2x10x3xf32>
    %7 = arith.divf %5, %6 : vector<2x10x3xf32>
    %c0_8 = arith.constant 0 : index
    %c0_9 = arith.constant 0 : index
    %c0_10 = arith.constant 0 : index
    %c0_11 = arith.constant 0 : index
    %8 = vector.load %arg3[%c0_8, %c0_9, %c0_10, %c0_11] : memref<1x40x11x3xf32, #tpu.memory_space<vmem>>, vector<1x40x11x3xf32>
    %9 = vector.shape_cast %8 : vector<1x40x11x3xf32> to vector<40x11x3xf32>
    %c0_12 = arith.constant 0 : index
    %c0_13 = arith.constant 0 : index
    %10 = vector.load %arg8[%c0_12, %c0_13] : memref<8x20xf32, #tpu.memory_space<vmem>>, vector<8x20xf32>
    %c0_14 = arith.constant 0 : index
    %c0_15 = arith.constant 0 : index
    %c0_16 = arith.constant 0 : index
    %c0_17 = arith.constant 0 : index
    %11 = vector.load %arg4[%c0_14, %c0_15, %c0_16, %c0_17] : memref<1x6x3x32xbf16, #tpu.memory_space<vmem>>, vector<1x6x3x32xbf16>
    %12 = vector.shape_cast %11 : vector<1x6x3x32xbf16> to vector<6x3x32xbf16>
    %c0_18 = arith.constant 0 : index
    %c0_19 = arith.constant 0 : index
    %c0_20 = arith.constant 0 : index
    %c0_21 = arith.constant 0 : index
    %13 = vector.load %arg5[%c0_18, %c0_19, %c0_20, %c0_21] : memref<1x5x32x32xbf16, #tpu.memory_space<vmem>>, vector<1x5x32x32xbf16>
    %14 = vector.shape_cast %13 : vector<1x5x32x32xbf16> to vector<5x32x32xbf16>
    %c0_22 = arith.constant 0 : index
    %c0_23 = arith.constant 0 : index
    %c0_24 = arith.constant 0 : index
    %c0_25 = arith.constant 0 : index
    %15 = vector.load %arg6[%c0_22, %c0_23, %c0_24, %c0_25] : memref<1x6x3x32xbf16, #tpu.memory_space<vmem>>, vector<1x6x3x32xbf16>
    %16 = vector.shape_cast %15 : vector<1x6x3x32xbf16> to vector<6x3x32xbf16>
    %c0_26 = arith.constant 0 : index
    %c0_27 = arith.constant 0 : index
    %c0_28 = arith.constant 0 : index
    %c0_29 = arith.constant 0 : index
    %17 = vector.load %arg7[%c0_26, %c0_27, %c0_28, %c0_29] : memref<1x5x32x32xbf16, #tpu.memory_space<vmem>>, vector<1x5x32x32xbf16>
    %18 = vector.shape_cast %17 : vector<1x5x32x32xbf16> to vector<5x32x32xbf16>
    %19 = vector.extract_strided_slice %3 {offsets = [0, 0, 0], sizes = [1, 20, 3], strides = [1, 1, 1]} : vector<2x20x3xf32> to vector<1x20x3xf32>
    %20 = vector.shape_cast %19 : vector<1x20x3xf32> to vector<20x3xf32>
    %21 = vector.extract_strided_slice %20 {offsets = [0, 0], sizes = [15, 3], strides = [1, 1]} : vector<20x3xf32> to vector<15x3xf32>
    %22 = arith.truncf %21 : vector<15x3xf32> to vector<15x3xbf16>
    %23 = vector.extract_strided_slice %12 {offsets = [0, 0, 0], sizes = [1, 3, 32], strides = [1, 1, 1]} : vector<6x3x32xbf16> to vector<1x3x32xbf16>
    %24 = vector.shape_cast %23 : vector<1x3x32xbf16> to vector<3x32xbf16>
    %cst_30 = arith.constant dense<0.000000e+00> : vector<15x32xf32>
    %25 = tpu.matmul %22, %24, %cst_30 {dimension_numbers = #tpu.dot_dimension_numbers<[1], [0], [0], [1], [0, 0, 1, 1], [], []>} : vector<15x3xbf16>, vector<3x32xbf16>, vector<15x32xf32> -> vector<15x32xf32>
    %26 = vector.extract_strided_slice %20 {offsets = [1, 0], sizes = [15, 3], strides = [1, 1]} : vector<20x3xf32> to vector<15x3xf32>
    %27 = arith.truncf %26 : vector<15x3xf32> to vector<15x3xbf16>
    %28 = vector.extract_strided_slice %12 {offsets = [1, 0, 0], sizes = [1, 3, 32], strides = [1, 1, 1]} : vector<6x3x32xbf16> to vector<1x3x32xbf16>
    %29 = vector.shape_cast %28 : vector<1x3x32xbf16> to vector<3x32xbf16>
    %cst_31 = arith.constant dense<0.000000e+00> : vector<15x32xf32>
    %30 = tpu.matmul %27, %29, %cst_31 {dimension_numbers = #tpu.dot_dimension_numbers<[1], [0], [0], [1], [0, 0, 1, 1], [], []>} : vector<15x3xbf16>, vector<3x32xbf16>, vector<15x32xf32> -> vector<15x32xf32>
    %31 = arith.addf %25, %30 : vector<15x32xf32>
    %32 = vector.extract_strided_slice %20 {offsets = [2, 0], sizes = [15, 3], strides = [1, 1]} : vector<20x3xf32> to vector<15x3xf32>
    %33 = arith.truncf %32 : vector<15x3xf32> to vector<15x3xbf16>
    %34 = vector.extract_strided_slice %12 {offsets = [2, 0, 0], sizes = [1, 3, 32], strides = [1, 1, 1]} : vector<6x3x32xbf16> to vector<1x3x32xbf16>
    %35 = vector.shape_cast %34 : vector<1x3x32xbf16> to vector<3x32xbf16>
    %cst_32 = arith.constant dense<0.000000e+00> : vector<15x32xf32>
    %36 = tpu.matmul %33, %35, %cst_32 {dimension_numbers = #tpu.dot_dimension_numbers<[1], [0], [0], [1], [0, 0, 1, 1], [], []>} : vector<15x3xbf16>, vector<3x32xbf16>, vector<15x32xf32> -> vector<15x32xf32>
    %37 = arith.addf %31, %36 : vector<15x32xf32>
    %38 = vector.extract_strided_slice %20 {offsets = [3, 0], sizes = [15, 3], strides = [1, 1]} : vector<20x3xf32> to vector<15x3xf32>
    %39 = arith.truncf %38 : vector<15x3xf32> to vector<15x3xbf16>
    %40 = vector.extract_strided_slice %12 {offsets = [3, 0, 0], sizes = [1, 3, 32], strides = [1, 1, 1]} : vector<6x3x32xbf16> to vector<1x3x32xbf16>
    %41 = vector.shape_cast %40 : vector<1x3x32xbf16> to vector<3x32xbf16>
    %cst_33 = arith.constant dense<0.000000e+00> : vector<15x32xf32>
    %42 = tpu.matmul %39, %41, %cst_33 {dimension_numbers = #tpu.dot_dimension_numbers<[1], [0], [0], [1], [0, 0, 1, 1], [], []>} : vector<15x3xbf16>, vector<3x32xbf16>, vector<15x32xf32> -> vector<15x32xf32>
    %43 = arith.addf %37, %42 : vector<15x32xf32>
    %44 = vector.extract_strided_slice %20 {offsets = [4, 0], sizes = [15, 3], strides = [1, 1]} : vector<20x3xf32> to vector<15x3xf32>
    %45 = arith.truncf %44 : vector<15x3xf32> to vector<15x3xbf16>
    %46 = vector.extract_strided_slice %12 {offsets = [4, 0, 0], sizes = [1, 3, 32], strides = [1, 1, 1]} : vector<6x3x32xbf16> to vector<1x3x32xbf16>
    %47 = vector.shape_cast %46 : vector<1x3x32xbf16> to vector<3x32xbf16>
    %cst_34 = arith.constant dense<0.000000e+00> : vector<15x32xf32>
    %48 = tpu.matmul %45, %47, %cst_34 {dimension_numbers = #tpu.dot_dimension_numbers<[1], [0], [0], [1], [0, 0, 1, 1], [], []>} : vector<15x3xbf16>, vector<3x32xbf16>, vector<15x32xf32> -> vector<15x32xf32>
    %49 = arith.addf %43, %48 : vector<15x32xf32>
    %50 = vector.extract_strided_slice %20 {offsets = [5, 0], sizes = [15, 3], strides = [1, 1]} : vector<20x3xf32> to vector<15x3xf32>
    %51 = arith.truncf %50 : vector<15x3xf32> to vector<15x3xbf16>
    %52 = vector.extract_strided_slice %12 {offsets = [5, 0, 0], sizes = [1, 3, 32], strides = [1, 1, 1]} : vector<6x3x32xbf16> to vector<1x3x32xbf16>
    %53 = vector.shape_cast %52 : vector<1x3x32xbf16> to vector<3x32xbf16>
    %cst_35 = arith.constant dense<0.000000e+00> : vector<15x32xf32>
    %54 = tpu.matmul %51, %53, %cst_35 {dimension_numbers = #tpu.dot_dimension_numbers<[1], [0], [0], [1], [0, 0, 1, 1], [], []>} : vector<15x3xbf16>, vector<3x32xbf16>, vector<15x32xf32> -> vector<15x32xf32>
    %55 = arith.addf %49, %54 : vector<15x32xf32>
    %cst_36 = arith.constant 0.000000e+00 : f32
    %56 = vector.broadcast %cst_36 : f32 to vector<15x32xf32>
    %57 = arith.maximumf %55, %56 : vector<15x32xf32>
    %58 = vector.extract_strided_slice %57 {offsets = [0, 0], sizes = [11, 32], strides = [1, 1]} : vector<15x32xf32> to vector<11x32xf32>
    %59 = arith.truncf %58 : vector<11x32xf32> to vector<11x32xbf16>
    %60 = vector.extract_strided_slice %14 {offsets = [0, 0, 0], sizes = [1, 32, 32], strides = [1, 1, 1]} : vector<5x32x32xbf16> to vector<1x32x32xbf16>
    %61 = vector.shape_cast %60 : vector<1x32x32xbf16> to vector<32x32xbf16>
    %cst_37 = arith.constant dense<0.000000e+00> : vector<11x32xf32>
    %62 = tpu.matmul %59, %61, %cst_37 {dimension_numbers = #tpu.dot_dimension_numbers<[1], [0], [0], [1], [0, 0, 1, 1], [], []>} : vector<11x32xbf16>, vector<32x32xbf16>, vector<11x32xf32> -> vector<11x32xf32>
    %63 = vector.extract_strided_slice %57 {offsets = [1, 0], sizes = [11, 32], strides = [1, 1]} : vector<15x32xf32> to vector<11x32xf32>
    %64 = arith.truncf %63 : vector<11x32xf32> to vector<11x32xbf16>
    %65 = vector.extract_strided_slice %14 {offsets = [1, 0, 0], sizes = [1, 32, 32], strides = [1, 1, 1]} : vector<5x32x32xbf16> to vector<1x32x32xbf16>
    %66 = vector.shape_cast %65 : vector<1x32x32xbf16> to vector<32x32xbf16>
    %cst_38 = arith.constant dense<0.000000e+00> : vector<11x32xf32>
    %67 = tpu.matmul %64, %66, %cst_38 {dimension_numbers = #tpu.dot_dimension_numbers<[1], [0], [0], [1], [0, 0, 1, 1], [], []>} : vector<11x32xbf16>, vector<32x32xbf16>, vector<11x32xf32> -> vector<11x32xf32>
    %68 = arith.addf %62, %67 : vector<11x32xf32>
    %69 = vector.extract_strided_slice %57 {offsets = [2, 0], sizes = [11, 32], strides = [1, 1]} : vector<15x32xf32> to vector<11x32xf32>
    %70 = arith.truncf %69 : vector<11x32xf32> to vector<11x32xbf16>
    %71 = vector.extract_strided_slice %14 {offsets = [2, 0, 0], sizes = [1, 32, 32], strides = [1, 1, 1]} : vector<5x32x32xbf16> to vector<1x32x32xbf16>
    %72 = vector.shape_cast %71 : vector<1x32x32xbf16> to vector<32x32xbf16>
    %cst_39 = arith.constant dense<0.000000e+00> : vector<11x32xf32>
    %73 = tpu.matmul %70, %72, %cst_39 {dimension_numbers = #tpu.dot_dimension_numbers<[1], [0], [0], [1], [0, 0, 1, 1], [], []>} : vector<11x32xbf16>, vector<32x32xbf16>, vector<11x32xf32> -> vector<11x32xf32>
    %74 = arith.addf %68, %73 : vector<11x32xf32>
    %75 = vector.extract_strided_slice %57 {offsets = [3, 0], sizes = [11, 32], strides = [1, 1]} : vector<15x32xf32> to vector<11x32xf32>
    %76 = arith.truncf %75 : vector<11x32xf32> to vector<11x32xbf16>
    %77 = vector.extract_strided_slice %14 {offsets = [3, 0, 0], sizes = [1, 32, 32], strides = [1, 1, 1]} : vector<5x32x32xbf16> to vector<1x32x32xbf16>
    %78 = vector.shape_cast %77 : vector<1x32x32xbf16> to vector<32x32xbf16>
    %cst_40 = arith.constant dense<0.000000e+00> : vector<11x32xf32>
    %79 = tpu.matmul %76, %78, %cst_40 {dimension_numbers = #tpu.dot_dimension_numbers<[1], [0], [0], [1], [0, 0, 1, 1], [], []>} : vector<11x32xbf16>, vector<32x32xbf16>, vector<11x32xf32> -> vector<11x32xf32>
    %80 = arith.addf %74, %79 : vector<11x32xf32>
    %81 = vector.extract_strided_slice %57 {offsets = [4, 0], sizes = [11, 32], strides = [1, 1]} : vector<15x32xf32> to vector<11x32xf32>
    %82 = arith.truncf %81 : vector<11x32xf32> to vector<11x32xbf16>
    %83 = vector.extract_strided_slice %14 {offsets = [4, 0, 0], sizes = [1, 32, 32], strides = [1, 1, 1]} : vector<5x32x32xbf16> to vector<1x32x32xbf16>
    %84 = vector.shape_cast %83 : vector<1x32x32xbf16> to vector<32x32xbf16>
    %cst_41 = arith.constant dense<0.000000e+00> : vector<11x32xf32>
    %85 = tpu.matmul %82, %84, %cst_41 {dimension_numbers = #tpu.dot_dimension_numbers<[1], [0], [0], [1], [0, 0, 1, 1], [], []>} : vector<11x32xbf16>, vector<32x32xbf16>, vector<11x32xf32> -> vector<11x32xf32>
    %86 = arith.addf %80, %85 : vector<11x32xf32>
    %cst_42 = arith.constant 0.000000e+00 : f32
    %87 = vector.broadcast %cst_42 : f32 to vector<11x32xf32>
    %88 = arith.maximumf %86, %87 : vector<11x32xf32>
    %89 = vector.extract_strided_slice %7 {offsets = [0, 0, 0], sizes = [1, 10, 3], strides = [1, 1, 1]} : vector<2x10x3xf32> to vector<1x10x3xf32>
    %90 = vector.shape_cast %89 : vector<1x10x3xf32> to vector<10x3xf32>
    %91 = vector.extract_strided_slice %90 {offsets = [0, 0], sizes = [5, 3], strides = [1, 1]} : vector<10x3xf32> to vector<5x3xf32>
    %92 = arith.truncf %91 : vector<5x3xf32> to vector<5x3xbf16>
    %93 = vector.extract_strided_slice %16 {offsets = [0, 0, 0], sizes = [1, 3, 32], strides = [1, 1, 1]} : vector<6x3x32xbf16> to vector<1x3x32xbf16>
    %94 = vector.shape_cast %93 : vector<1x3x32xbf16> to vector<3x32xbf16>
    %cst_43 = arith.constant dense<0.000000e+00> : vector<5x32xf32>
    %95 = tpu.matmul %92, %94, %cst_43 {dimension_numbers = #tpu.dot_dimension_numbers<[1], [0], [0], [1], [0, 0, 1, 1], [], []>} : vector<5x3xbf16>, vector<3x32xbf16>, vector<5x32xf32> -> vector<5x32xf32>
    %96 = vector.extract_strided_slice %90 {offsets = [1, 0], sizes = [5, 3], strides = [1, 1]} : vector<10x3xf32> to vector<5x3xf32>
    %97 = arith.truncf %96 : vector<5x3xf32> to vector<5x3xbf16>
    %98 = vector.extract_strided_slice %16 {offsets = [1, 0, 0], sizes = [1, 3, 32], strides = [1, 1, 1]} : vector<6x3x32xbf16> to vector<1x3x32xbf16>
    %99 = vector.shape_cast %98 : vector<1x3x32xbf16> to vector<3x32xbf16>
    %cst_44 = arith.constant dense<0.000000e+00> : vector<5x32xf32>
    %100 = tpu.matmul %97, %99, %cst_44 {dimension_numbers = #tpu.dot_dimension_numbers<[1], [0], [0], [1], [0, 0, 1, 1], [], []>} : vector<5x3xbf16>, vector<3x32xbf16>, vector<5x32xf32> -> vector<5x32xf32>
    %101 = arith.addf %95, %100 : vector<5x32xf32>
    %102 = vector.extract_strided_slice %90 {offsets = [2, 0], sizes = [5, 3], strides = [1, 1]} : vector<10x3xf32> to vector<5x3xf32>
    %103 = arith.truncf %102 : vector<5x3xf32> to vector<5x3xbf16>
    %104 = vector.extract_strided_slice %16 {offsets = [2, 0, 0], sizes = [1, 3, 32], strides = [1, 1, 1]} : vector<6x3x32xbf16> to vector<1x3x32xbf16>
    %105 = vector.shape_cast %104 : vector<1x3x32xbf16> to vector<3x32xbf16>
    %cst_45 = arith.constant dense<0.000000e+00> : vector<5x32xf32>
    %106 = tpu.matmul %103, %105, %cst_45 {dimension_numbers = #tpu.dot_dimension_numbers<[1], [0], [0], [1], [0, 0, 1, 1], [], []>} : vector<5x3xbf16>, vector<3x32xbf16>, vector<5x32xf32> -> vector<5x32xf32>
    %107 = arith.addf %101, %106 : vector<5x32xf32>
    %108 = vector.extract_strided_slice %90 {offsets = [3, 0], sizes = [5, 3], strides = [1, 1]} : vector<10x3xf32> to vector<5x3xf32>
    %109 = arith.truncf %108 : vector<5x3xf32> to vector<5x3xbf16>
    %110 = vector.extract_strided_slice %16 {offsets = [3, 0, 0], sizes = [1, 3, 32], strides = [1, 1, 1]} : vector<6x3x32xbf16> to vector<1x3x32xbf16>
    %111 = vector.shape_cast %110 : vector<1x3x32xbf16> to vector<3x32xbf16>
    %cst_46 = arith.constant dense<0.000000e+00> : vector<5x32xf32>
    %112 = tpu.matmul %109, %111, %cst_46 {dimension_numbers = #tpu.dot_dimension_numbers<[1], [0], [0], [1], [0, 0, 1, 1], [], []>} : vector<5x3xbf16>, vector<3x32xbf16>, vector<5x32xf32> -> vector<5x32xf32>
    %113 = arith.addf %107, %112 : vector<5x32xf32>
    %114 = vector.extract_strided_slice %90 {offsets = [4, 0], sizes = [5, 3], strides = [1, 1]} : vector<10x3xf32> to vector<5x3xf32>
    %115 = arith.truncf %114 : vector<5x3xf32> to vector<5x3xbf16>
    %116 = vector.extract_strided_slice %16 {offsets = [4, 0, 0], sizes = [1, 3, 32], strides = [1, 1, 1]} : vector<6x3x32xbf16> to vector<1x3x32xbf16>
    %117 = vector.shape_cast %116 : vector<1x3x32xbf16> to vector<3x32xbf16>
    %cst_47 = arith.constant dense<0.000000e+00> : vector<5x32xf32>
    %118 = tpu.matmul %115, %117, %cst_47 {dimension_numbers = #tpu.dot_dimension_numbers<[1], [0], [0], [1], [0, 0, 1, 1], [], []>} : vector<5x3xbf16>, vector<3x32xbf16>, vector<5x32xf32> -> vector<5x32xf32>
    %119 = arith.addf %113, %118 : vector<5x32xf32>
    %120 = vector.extract_strided_slice %90 {offsets = [5, 0], sizes = [5, 3], strides = [1, 1]} : vector<10x3xf32> to vector<5x3xf32>
    %121 = arith.truncf %120 : vector<5x3xf32> to vector<5x3xbf16>
    %122 = vector.extract_strided_slice %16 {offsets = [5, 0, 0], sizes = [1, 3, 32], strides = [1, 1, 1]} : vector<6x3x32xbf16> to vector<1x3x32xbf16>
    %123 = vector.shape_cast %122 : vector<1x3x32xbf16> to vector<3x32xbf16>
    %cst_48 = arith.constant dense<0.000000e+00> : vector<5x32xf32>
    %124 = tpu.matmul %121, %123, %cst_48 {dimension_numbers = #tpu.dot_dimension_numbers<[1], [0], [0], [1], [0, 0, 1, 1], [], []>} : vector<5x3xbf16>, vector<3x32xbf16>, vector<5x32xf32> -> vector<5x32xf32>
    %125 = arith.addf %119, %124 : vector<5x32xf32>
    %cst_49 = arith.constant 0.000000e+00 : f32
    %126 = vector.broadcast %cst_49 : f32 to vector<5x32xf32>
    %127 = arith.maximumf %125, %126 : vector<5x32xf32>
    %128 = vector.extract_strided_slice %127 {offsets = [0, 0], sizes = [1, 32], strides = [1, 1]} : vector<5x32xf32> to vector<1x32xf32>
    %129 = arith.truncf %128 : vector<1x32xf32> to vector<1x32xbf16>
    %130 = vector.extract_strided_slice %18 {offsets = [0, 0, 0], sizes = [1, 32, 32], strides = [1, 1, 1]} : vector<5x32x32xbf16> to vector<1x32x32xbf16>
    %131 = vector.shape_cast %130 : vector<1x32x32xbf16> to vector<32x32xbf16>
    %cst_50 = arith.constant dense<0.000000e+00> : vector<1x32xf32>
    %132 = tpu.matmul %129, %131, %cst_50 {dimension_numbers = #tpu.dot_dimension_numbers<[1], [0], [0], [1], [0, 0, 1, 1], [], []>} : vector<1x32xbf16>, vector<32x32xbf16>, vector<1x32xf32> -> vector<1x32xf32>
    %133 = vector.extract_strided_slice %127 {offsets = [1, 0], sizes = [1, 32], strides = [1, 1]} : vector<5x32xf32> to vector<1x32xf32>
    %134 = arith.truncf %133 : vector<1x32xf32> to vector<1x32xbf16>
    %135 = vector.extract_strided_slice %18 {offsets = [1, 0, 0], sizes = [1, 32, 32], strides = [1, 1, 1]} : vector<5x32x32xbf16> to vector<1x32x32xbf16>
    %136 = vector.shape_cast %135 : vector<1x32x32xbf16> to vector<32x32xbf16>
    %cst_51 = arith.constant dense<0.000000e+00> : vector<1x32xf32>
    %137 = tpu.matmul %134, %136, %cst_51 {dimension_numbers = #tpu.dot_dimension_numbers<[1], [0], [0], [1], [0, 0, 1, 1], [], []>} : vector<1x32xbf16>, vector<32x32xbf16>, vector<1x32xf32> -> vector<1x32xf32>
    %138 = arith.addf %132, %137 : vector<1x32xf32>
    %139 = vector.extract_strided_slice %127 {offsets = [2, 0], sizes = [1, 32], strides = [1, 1]} : vector<5x32xf32> to vector<1x32xf32>
    %140 = arith.truncf %139 : vector<1x32xf32> to vector<1x32xbf16>
    %141 = vector.extract_strided_slice %18 {offsets = [2, 0, 0], sizes = [1, 32, 32], strides = [1, 1, 1]} : vector<5x32x32xbf16> to vector<1x32x32xbf16>
    %142 = vector.shape_cast %141 : vector<1x32x32xbf16> to vector<32x32xbf16>
    %cst_52 = arith.constant dense<0.000000e+00> : vector<1x32xf32>
    %143 = tpu.matmul %140, %142, %cst_52 {dimension_numbers = #tpu.dot_dimension_numbers<[1], [0], [0], [1], [0, 0, 1, 1], [], []>} : vector<1x32xbf16>, vector<32x32xbf16>, vector<1x32xf32> -> vector<1x32xf32>
    %144 = arith.addf %138, %143 : vector<1x32xf32>
    %145 = vector.extract_strided_slice %127 {offsets = [3, 0], sizes = [1, 32], strides = [1, 1]} : vector<5x32xf32> to vector<1x32xf32>
    %146 = arith.truncf %145 : vector<1x32xf32> to vector<1x32xbf16>
    %147 = vector.extract_strided_slice %18 {offsets = [3, 0, 0], sizes = [1, 32, 32], strides = [1, 1, 1]} : vector<5x32x32xbf16> to vector<1x32x32xbf16>
    %148 = vector.shape_cast %147 : vector<1x32x32xbf16> to vector<32x32xbf16>
    %cst_53 = arith.constant dense<0.000000e+00> : vector<1x32xf32>
    %149 = tpu.matmul %146, %148, %cst_53 {dimension_numbers = #tpu.dot_dimension_numbers<[1], [0], [0], [1], [0, 0, 1, 1], [], []>} : vector<1x32xbf16>, vector<32x32xbf16>, vector<1x32xf32> -> vector<1x32xf32>
    %150 = arith.addf %144, %149 : vector<1x32xf32>
    %151 = vector.extract_strided_slice %127 {offsets = [4, 0], sizes = [1, 32], strides = [1, 1]} : vector<5x32xf32> to vector<1x32xf32>
    %152 = arith.truncf %151 : vector<1x32xf32> to vector<1x32xbf16>
    %153 = vector.extract_strided_slice %18 {offsets = [4, 0, 0], sizes = [1, 32, 32], strides = [1, 1, 1]} : vector<5x32x32xbf16> to vector<1x32x32xbf16>
    %154 = vector.shape_cast %153 : vector<1x32x32xbf16> to vector<32x32xbf16>
    %cst_54 = arith.constant dense<0.000000e+00> : vector<1x32xf32>
    %155 = tpu.matmul %152, %154, %cst_54 {dimension_numbers = #tpu.dot_dimension_numbers<[1], [0], [0], [1], [0, 0, 1, 1], [], []>} : vector<1x32xbf16>, vector<32x32xbf16>, vector<1x32xf32> -> vector<1x32xf32>
    %156 = arith.addf %150, %155 : vector<1x32xf32>
    %cst_55 = arith.constant 0.000000e+00 : f32
    %157 = vector.broadcast %cst_55 : f32 to vector<1x32xf32>
    %158 = arith.maximumf %156, %157 : vector<1x32xf32>
    %159 = vector.broadcast %158 : vector<1x32xf32> to vector<11x32xf32>
    %160 = arith.mulf %88, %159 : vector<11x32xf32>
    %cst_56 = arith.constant dense<0.000000e+00> : vector<11xf32>
    %161 = vector.multi_reduction <add>, %160, %cst_56 [1] : vector<11x32xf32> to vector<11xf32>
    %162 = vector.shape_cast %161 : vector<11xf32> to vector<11x1xf32>
    %cst_57 = arith.constant 1.000000e-15 : f32
    %163 = vector.broadcast %cst_57 : f32 to vector<11x1xf32>
    %164 = arith.addf %162, %163 : vector<11x1xf32>
    %cst_58 = arith.constant dense<0.000000e+00> : vector<1xf32>
    %165 = vector.multi_reduction <add>, %164, %cst_58 [0] : vector<11x1xf32> to vector<1xf32>
    %166 = vector.shape_cast %165 : vector<1xf32> to vector<1x1xf32>
    %167 = vector.broadcast %166 : vector<1x1xf32> to vector<11x1xf32>
    %168 = arith.divf %164, %167 : vector<11x1xf32>
    %169 = vector.extract_strided_slice %9 {offsets = [0, 0, 0], sizes = [20, 11, 3], strides = [1, 1, 1]} : vector<40x11x3xf32> to vector<20x11x3xf32>
    %170 = vector.shape_cast %168 : vector<11x1xf32> to vector<1x11x1xf32>
    %171 = vector.broadcast %170 : vector<1x11x1xf32> to vector<20x11x3xf32>
    %172 = arith.mulf %169, %171 : vector<20x11x3xf32>
    %cst_59 = arith.constant dense<0.000000e+00> : vector<20x3xf32>
    %173 = vector.multi_reduction <add>, %172, %cst_59 [1] : vector<20x11x3xf32> to vector<20x3xf32>
    %cst_60 = arith.constant dense<0.000000e+00> : vector<8x3xf32>
    %174 = tpu.matmul %10, %173, %cst_60 {dimension_numbers = #tpu.dot_dimension_numbers<[1], [0], [0], [1], [0, 0, 1, 1], [], []>} : vector<8x20xf32>, vector<20x3xf32>, vector<8x3xf32> -> vector<8x3xf32>
    %c0_61 = arith.constant 0 : index
    %c0_62 = arith.constant 0 : index
    %c0_63 = arith.constant 0 : index
    %c0_64 = arith.constant 0 : index
    %175 = vector.load %arg9[%c0_61, %c0_62, %c0_63, %c0_64] : memref<1x2x8x3xf32, #tpu.memory_space<vmem>>, vector<1x1x8x3xf32>
    %176 = vector.shape_cast %175 : vector<1x1x8x3xf32> to vector<8x3xf32>
    %177 = vector.shape_cast %174 : vector<8x3xf32> to vector<1x1x8x3xf32>
    tpu.vector_store %arg9[%c0_61, %c0_62, %c0_63, %c0_64], %177 {strides = array<i32>} : memref<1x2x8x3xf32, #tpu.memory_space<vmem>>, vector<1x1x8x3xf32>,
    %178 = vector.extract_strided_slice %3 {offsets = [1, 0, 0], sizes = [1, 20, 3], strides = [1, 1, 1]} : vector<2x20x3xf32> to vector<1x20x3xf32>
    %179 = vector.shape_cast %178 : vector<1x20x3xf32> to vector<20x3xf32>
    %180 = vector.extract_strided_slice %179 {offsets = [0, 0], sizes = [15, 3], strides = [1, 1]} : vector<20x3xf32> to vector<15x3xf32>
    %181 = arith.truncf %180 : vector<15x3xf32> to vector<15x3xbf16>
    %182 = vector.extract_strided_slice %12 {offsets = [0, 0, 0], sizes = [1, 3, 32], strides = [1, 1, 1]} : vector<6x3x32xbf16> to vector<1x3x32xbf16>
    %183 = vector.shape_cast %182 : vector<1x3x32xbf16> to vector<3x32xbf16>
    %cst_65 = arith.constant dense<0.000000e+00> : vector<15x32xf32>
    %184 = tpu.matmul %181, %183, %cst_65 {dimension_numbers = #tpu.dot_dimension_numbers<[1], [0], [0], [1], [0, 0, 1, 1], [], []>} : vector<15x3xbf16>, vector<3x32xbf16>, vector<15x32xf32> -> vector<15x32xf32>
    %185 = vector.extract_strided_slice %179 {offsets = [1, 0], sizes = [15, 3], strides = [1, 1]} : vector<20x3xf32> to vector<15x3xf32>
    %186 = arith.truncf %185 : vector<15x3xf32> to vector<15x3xbf16>
    %187 = vector.extract_strided_slice %12 {offsets = [1, 0, 0], sizes = [1, 3, 32], strides = [1, 1, 1]} : vector<6x3x32xbf16> to vector<1x3x32xbf16>
    %188 = vector.shape_cast %187 : vector<1x3x32xbf16> to vector<3x32xbf16>
    %cst_66 = arith.constant dense<0.000000e+00> : vector<15x32xf32>
    %189 = tpu.matmul %186, %188, %cst_66 {dimension_numbers = #tpu.dot_dimension_numbers<[1], [0], [0], [1], [0, 0, 1, 1], [], []>} : vector<15x3xbf16>, vector<3x32xbf16>, vector<15x32xf32> -> vector<15x32xf32>
    %190 = arith.addf %184, %189 : vector<15x32xf32>
    %191 = vector.extract_strided_slice %179 {offsets = [2, 0], sizes = [15, 3], strides = [1, 1]} : vector<20x3xf32> to vector<15x3xf32>
    %192 = arith.truncf %191 : vector<15x3xf32> to vector<15x3xbf16>
    %193 = vector.extract_strided_slice %12 {offsets = [2, 0, 0], sizes = [1, 3, 32], strides = [1, 1, 1]} : vector<6x3x32xbf16> to vector<1x3x32xbf16>
    %194 = vector.shape_cast %193 : vector<1x3x32xbf16> to vector<3x32xbf16>
    %cst_67 = arith.constant dense<0.000000e+00> : vector<15x32xf32>
    %195 = tpu.matmul %192, %194, %cst_67 {dimension_numbers = #tpu.dot_dimension_numbers<[1], [0], [0], [1], [0, 0, 1, 1], [], []>} : vector<15x3xbf16>, vector<3x32xbf16>, vector<15x32xf32> -> vector<15x32xf32>
    %196 = arith.addf %190, %195 : vector<15x32xf32>
    %197 = vector.extract_strided_slice %179 {offsets = [3, 0], sizes = [15, 3], strides = [1, 1]} : vector<20x3xf32> to vector<15x3xf32>
    %198 = arith.truncf %197 : vector<15x3xf32> to vector<15x3xbf16>
    %199 = vector.extract_strided_slice %12 {offsets = [3, 0, 0], sizes = [1, 3, 32], strides = [1, 1, 1]} : vector<6x3x32xbf16> to vector<1x3x32xbf16>
    %200 = vector.shape_cast %199 : vector<1x3x32xbf16> to vector<3x32xbf16>
    %cst_68 = arith.constant dense<0.000000e+00> : vector<15x32xf32>
    %201 = tpu.matmul %198, %200, %cst_68 {dimension_numbers = #tpu.dot_dimension_numbers<[1], [0], [0], [1], [0, 0, 1, 1], [], []>} : vector<15x3xbf16>, vector<3x32xbf16>, vector<15x32xf32> -> vector<15x32xf32>
    %202 = arith.addf %196, %201 : vector<15x32xf32>
    %203 = vector.extract_strided_slice %179 {offsets = [4, 0], sizes = [15, 3], strides = [1, 1]} : vector<20x3xf32> to vector<15x3xf32>
    %204 = arith.truncf %203 : vector<15x3xf32> to vector<15x3xbf16>
    %205 = vector.extract_strided_slice %12 {offsets = [4, 0, 0], sizes = [1, 3, 32], strides = [1, 1, 1]} : vector<6x3x32xbf16> to vector<1x3x32xbf16>
    %206 = vector.shape_cast %205 : vector<1x3x32xbf16> to vector<3x32xbf16>
    %cst_69 = arith.constant dense<0.000000e+00> : vector<15x32xf32>
    %207 = tpu.matmul %204, %206, %cst_69 {dimension_numbers = #tpu.dot_dimension_numbers<[1], [0], [0], [1], [0, 0, 1, 1], [], []>} : vector<15x3xbf16>, vector<3x32xbf16>, vector<15x32xf32> -> vector<15x32xf32>
    %208 = arith.addf %202, %207 : vector<15x32xf32>
    %209 = vector.extract_strided_slice %179 {offsets = [5, 0], sizes = [15, 3], strides = [1, 1]} : vector<20x3xf32> to vector<15x3xf32>
    %210 = arith.truncf %209 : vector<15x3xf32> to vector<15x3xbf16>
    %211 = vector.extract_strided_slice %12 {offsets = [5, 0, 0], sizes = [1, 3, 32], strides = [1, 1, 1]} : vector<6x3x32xbf16> to vector<1x3x32xbf16>
    %212 = vector.shape_cast %211 : vector<1x3x32xbf16> to vector<3x32xbf16>
    %cst_70 = arith.constant dense<0.000000e+00> : vector<15x32xf32>
    %213 = tpu.matmul %210, %212, %cst_70 {dimension_numbers = #tpu.dot_dimension_numbers<[1], [0], [0], [1], [0, 0, 1, 1], [], []>} : vector<15x3xbf16>, vector<3x32xbf16>, vector<15x32xf32> -> vector<15x32xf32>
    %214 = arith.addf %208, %213 : vector<15x32xf32>
    %cst_71 = arith.constant 0.000000e+00 : f32
    %215 = vector.broadcast %cst_71 : f32 to vector<15x32xf32>
    %216 = arith.maximumf %214, %215 : vector<15x32xf32>
    %217 = vector.extract_strided_slice %216 {offsets = [0, 0], sizes = [11, 32], strides = [1, 1]} : vector<15x32xf32> to vector<11x32xf32>
    %218 = arith.truncf %217 : vector<11x32xf32> to vector<11x32xbf16>
    %219 = vector.extract_strided_slice %14 {offsets = [0, 0, 0], sizes = [1, 32, 32], strides = [1, 1, 1]} : vector<5x32x32xbf16> to vector<1x32x32xbf16>
    %220 = vector.shape_cast %219 : vector<1x32x32xbf16> to vector<32x32xbf16>
    %cst_72 = arith.constant dense<0.000000e+00> : vector<11x32xf32>
    %221 = tpu.matmul %218, %220, %cst_72 {dimension_numbers = #tpu.dot_dimension_numbers<[1], [0], [0], [1], [0, 0, 1, 1], [], []>} : vector<11x32xbf16>, vector<32x32xbf16>, vector<11x32xf32> -> vector<11x32xf32>
    %222 = vector.extract_strided_slice %216 {offsets = [1, 0], sizes = [11, 32], strides = [1, 1]} : vector<15x32xf32> to vector<11x32xf32>
    %223 = arith.truncf %222 : vector<11x32xf32> to vector<11x32xbf16>
    %224 = vector.extract_strided_slice %14 {offsets = [1, 0, 0], sizes = [1, 32, 32], strides = [1, 1, 1]} : vector<5x32x32xbf16> to vector<1x32x32xbf16>
    %225 = vector.shape_cast %224 : vector<1x32x32xbf16> to vector<32x32xbf16>
    %cst_73 = arith.constant dense<0.000000e+00> : vector<11x32xf32>
    %226 = tpu.matmul %223, %225, %cst_73 {dimension_numbers = #tpu.dot_dimension_numbers<[1], [0], [0], [1], [0, 0, 1, 1], [], []>} : vector<11x32xbf16>, vector<32x32xbf16>, vector<11x32xf32> -> vector<11x32xf32>
    %227 = arith.addf %221, %226 : vector<11x32xf32>
    %228 = vector.extract_strided_slice %216 {offsets = [2, 0], sizes = [11, 32], strides = [1, 1]} : vector<15x32xf32> to vector<11x32xf32>
    %229 = arith.truncf %228 : vector<11x32xf32> to vector<11x32xbf16>
    %230 = vector.extract_strided_slice %14 {offsets = [2, 0, 0], sizes = [1, 32, 32], strides = [1, 1, 1]} : vector<5x32x32xbf16> to vector<1x32x32xbf16>
    %231 = vector.shape_cast %230 : vector<1x32x32xbf16> to vector<32x32xbf16>
    %cst_74 = arith.constant dense<0.000000e+00> : vector<11x32xf32>
    %232 = tpu.matmul %229, %231, %cst_74 {dimension_numbers = #tpu.dot_dimension_numbers<[1], [0], [0], [1], [0, 0, 1, 1], [], []>} : vector<11x32xbf16>, vector<32x32xbf16>, vector<11x32xf32> -> vector<11x32xf32>
    %233 = arith.addf %227, %232 : vector<11x32xf32>
    %234 = vector.extract_strided_slice %216 {offsets = [3, 0], sizes = [11, 32], strides = [1, 1]} : vector<15x32xf32> to vector<11x32xf32>
    %235 = arith.truncf %234 : vector<11x32xf32> to vector<11x32xbf16>
    %236 = vector.extract_strided_slice %14 {offsets = [3, 0, 0], sizes = [1, 32, 32], strides = [1, 1, 1]} : vector<5x32x32xbf16> to vector<1x32x32xbf16>
    %237 = vector.shape_cast %236 : vector<1x32x32xbf16> to vector<32x32xbf16>
    %cst_75 = arith.constant dense<0.000000e+00> : vector<11x32xf32>
    %238 = tpu.matmul %235, %237, %cst_75 {dimension_numbers = #tpu.dot_dimension_numbers<[1], [0], [0], [1], [0, 0, 1, 1], [], []>} : vector<11x32xbf16>, vector<32x32xbf16>, vector<11x32xf32> -> vector<11x32xf32>
    %239 = arith.addf %233, %238 : vector<11x32xf32>
    %240 = vector.extract_strided_slice %216 {offsets = [4, 0], sizes = [11, 32], strides = [1, 1]} : vector<15x32xf32> to vector<11x32xf32>
    %241 = arith.truncf %240 : vector<11x32xf32> to vector<11x32xbf16>
    %242 = vector.extract_strided_slice %14 {offsets = [4, 0, 0], sizes = [1, 32, 32], strides = [1, 1, 1]} : vector<5x32x32xbf16> to vector<1x32x32xbf16>
    %243 = vector.shape_cast %242 : vector<1x32x32xbf16> to vector<32x32xbf16>
    %cst_76 = arith.constant dense<0.000000e+00> : vector<11x32xf32>
    %244 = tpu.matmul %241, %243, %cst_76 {dimension_numbers = #tpu.dot_dimension_numbers<[1], [0], [0], [1], [0, 0, 1, 1], [], []>} : vector<11x32xbf16>, vector<32x32xbf16>, vector<11x32xf32> -> vector<11x32xf32>
    %245 = arith.addf %239, %244 : vector<11x32xf32>
    %cst_77 = arith.constant 0.000000e+00 : f32
    %246 = vector.broadcast %cst_77 : f32 to vector<11x32xf32>
    %247 = arith.maximumf %245, %246 : vector<11x32xf32>
    %248 = vector.extract_strided_slice %7 {offsets = [1, 0, 0], sizes = [1, 10, 3], strides = [1, 1, 1]} : vector<2x10x3xf32> to vector<1x10x3xf32>
    %249 = vector.shape_cast %248 : vector<1x10x3xf32> to vector<10x3xf32>
    %250 = vector.extract_strided_slice %249 {offsets = [0, 0], sizes = [5, 3], strides = [1, 1]} : vector<10x3xf32> to vector<5x3xf32>
    %251 = arith.truncf %250 : vector<5x3xf32> to vector<5x3xbf16>
    %252 = vector.extract_strided_slice %16 {offsets = [0, 0, 0], sizes = [1, 3, 32], strides = [1, 1, 1]} : vector<6x3x32xbf16> to vector<1x3x32xbf16>
    %253 = vector.shape_cast %252 : vector<1x3x32xbf16> to vector<3x32xbf16>
    %cst_78 = arith.constant dense<0.000000e+00> : vector<5x32xf32>
    %254 = tpu.matmul %251, %253, %cst_78 {dimension_numbers = #tpu.dot_dimension_numbers<[1], [0], [0], [1], [0, 0, 1, 1], [], []>} : vector<5x3xbf16>, vector<3x32xbf16>, vector<5x32xf32> -> vector<5x32xf32>
    %255 = vector.extract_strided_slice %249 {offsets = [1, 0], sizes = [5, 3], strides = [1, 1]} : vector<10x3xf32> to vector<5x3xf32>
    %256 = arith.truncf %255 : vector<5x3xf32> to vector<5x3xbf16>
    %257 = vector.extract_strided_slice %16 {offsets = [1, 0, 0], sizes = [1, 3, 32], strides = [1, 1, 1]} : vector<6x3x32xbf16> to vector<1x3x32xbf16>
    %258 = vector.shape_cast %257 : vector<1x3x32xbf16> to vector<3x32xbf16>
    %cst_79 = arith.constant dense<0.000000e+00> : vector<5x32xf32>
    %259 = tpu.matmul %256, %258, %cst_79 {dimension_numbers = #tpu.dot_dimension_numbers<[1], [0], [0], [1], [0, 0, 1, 1], [], []>} : vector<5x3xbf16>, vector<3x32xbf16>, vector<5x32xf32> -> vector<5x32xf32>
    %260 = arith.addf %254, %259 : vector<5x32xf32>
    %261 = vector.extract_strided_slice %249 {offsets = [2, 0], sizes = [5, 3], strides = [1, 1]} : vector<10x3xf32> to vector<5x3xf32>
    %262 = arith.truncf %261 : vector<5x3xf32> to vector<5x3xbf16>
    %263 = vector.extract_strided_slice %16 {offsets = [2, 0, 0], sizes = [1, 3, 32], strides = [1, 1, 1]} : vector<6x3x32xbf16> to vector<1x3x32xbf16>
    %264 = vector.shape_cast %263 : vector<1x3x32xbf16> to vector<3x32xbf16>
    %cst_80 = arith.constant dense<0.000000e+00> : vector<5x32xf32>
    %265 = tpu.matmul %262, %264, %cst_80 {dimension_numbers = #tpu.dot_dimension_numbers<[1], [0], [0], [1], [0, 0, 1, 1], [], []>} : vector<5x3xbf16>, vector<3x32xbf16>, vector<5x32xf32> -> vector<5x32xf32>
    %266 = arith.addf %260, %265 : vector<5x32xf32>
    %267 = vector.extract_strided_slice %249 {offsets = [3, 0], sizes = [5, 3], strides = [1, 1]} : vector<10x3xf32> to vector<5x3xf32>
    %268 = arith.truncf %267 : vector<5x3xf32> to vector<5x3xbf16>
    %269 = vector.extract_strided_slice %16 {offsets = [3, 0, 0], sizes = [1, 3, 32], strides = [1, 1, 1]} : vector<6x3x32xbf16> to vector<1x3x32xbf16>
    %270 = vector.shape_cast %269 : vector<1x3x32xbf16> to vector<3x32xbf16>
    %cst_81 = arith.constant dense<0.000000e+00> : vector<5x32xf32>
    %271 = tpu.matmul %268, %270, %cst_81 {dimension_numbers = #tpu.dot_dimension_numbers<[1], [0], [0], [1], [0, 0, 1, 1], [], []>} : vector<5x3xbf16>, vector<3x32xbf16>, vector<5x32xf32> -> vector<5x32xf32>
    %272 = arith.addf %266, %271 : vector<5x32xf32>
    %273 = vector.extract_strided_slice %249 {offsets = [4, 0], sizes = [5, 3], strides = [1, 1]} : vector<10x3xf32> to vector<5x3xf32>
    %274 = arith.truncf %273 : vector<5x3xf32> to vector<5x3xbf16>
    %275 = vector.extract_strided_slice %16 {offsets = [4, 0, 0], sizes = [1, 3, 32], strides = [1, 1, 1]} : vector<6x3x32xbf16> to vector<1x3x32xbf16>
    %276 = vector.shape_cast %275 : vector<1x3x32xbf16> to vector<3x32xbf16>
    %cst_82 = arith.constant dense<0.000000e+00> : vector<5x32xf32>
    %277 = tpu.matmul %274, %276, %cst_82 {dimension_numbers = #tpu.dot_dimension_numbers<[1], [0], [0], [1], [0, 0, 1, 1], [], []>} : vector<5x3xbf16>, vector<3x32xbf16>, vector<5x32xf32> -> vector<5x32xf32>
    %278 = arith.addf %272, %277 : vector<5x32xf32>
    %279 = vector.extract_strided_slice %249 {offsets = [5, 0], sizes = [5, 3], strides = [1, 1]} : vector<10x3xf32> to vector<5x3xf32>
    %280 = arith.truncf %279 : vector<5x3xf32> to vector<5x3xbf16>
    %281 = vector.extract_strided_slice %16 {offsets = [5, 0, 0], sizes = [1, 3, 32], strides = [1, 1, 1]} : vector<6x3x32xbf16> to vector<1x3x32xbf16>
    %282 = vector.shape_cast %281 : vector<1x3x32xbf16> to vector<3x32xbf16>
    %cst_83 = arith.constant dense<0.000000e+00> : vector<5x32xf32>
    %283 = tpu.matmul %280, %282, %cst_83 {dimension_numbers = #tpu.dot_dimension_numbers<[1], [0], [0], [1], [0, 0, 1, 1], [], []>} : vector<5x3xbf16>, vector<3x32xbf16>, vector<5x32xf32> -> vector<5x32xf32>
    %284 = arith.addf %278, %283 : vector<5x32xf32>
    %cst_84 = arith.constant 0.000000e+00 : f32
    %285 = vector.broadcast %cst_84 : f32 to vector<5x32xf32>
    %286 = arith.maximumf %284, %285 : vector<5x32xf32>
    %287 = vector.extract_strided_slice %286 {offsets = [0, 0], sizes = [1, 32], strides = [1, 1]} : vector<5x32xf32> to vector<1x32xf32>
    %288 = arith.truncf %287 : vector<1x32xf32> to vector<1x32xbf16>
    %289 = vector.extract_strided_slice %18 {offsets = [0, 0, 0], sizes = [1, 32, 32], strides = [1, 1, 1]} : vector<5x32x32xbf16> to vector<1x32x32xbf16>
    %290 = vector.shape_cast %289 : vector<1x32x32xbf16> to vector<32x32xbf16>
    %cst_85 = arith.constant dense<0.000000e+00> : vector<1x32xf32>
    %291 = tpu.matmul %288, %290, %cst_85 {dimension_numbers = #tpu.dot_dimension_numbers<[1], [0], [0], [1], [0, 0, 1, 1], [], []>} : vector<1x32xbf16>, vector<32x32xbf16>, vector<1x32xf32> -> vector<1x32xf32>
    %292 = vector.extract_strided_slice %286 {offsets = [1, 0], sizes = [1, 32], strides = [1, 1]} : vector<5x32xf32> to vector<1x32xf32>
    %293 = arith.truncf %292 : vector<1x32xf32> to vector<1x32xbf16>
    %294 = vector.extract_strided_slice %18 {offsets = [1, 0, 0], sizes = [1, 32, 32], strides = [1, 1, 1]} : vector<5x32x32xbf16> to vector<1x32x32xbf16>
    %295 = vector.shape_cast %294 : vector<1x32x32xbf16> to vector<32x32xbf16>
    %cst_86 = arith.constant dense<0.000000e+00> : vector<1x32xf32>
    %296 = tpu.matmul %293, %295, %cst_86 {dimension_numbers = #tpu.dot_dimension_numbers<[1], [0], [0], [1], [0, 0, 1, 1], [], []>} : vector<1x32xbf16>, vector<32x32xbf16>, vector<1x32xf32> -> vector<1x32xf32>
    %297 = arith.addf %291, %296 : vector<1x32xf32>
    %298 = vector.extract_strided_slice %286 {offsets = [2, 0], sizes = [1, 32], strides = [1, 1]} : vector<5x32xf32> to vector<1x32xf32>
    %299 = arith.truncf %298 : vector<1x32xf32> to vector<1x32xbf16>
    %300 = vector.extract_strided_slice %18 {offsets = [2, 0, 0], sizes = [1, 32, 32], strides = [1, 1, 1]} : vector<5x32x32xbf16> to vector<1x32x32xbf16>
    %301 = vector.shape_cast %300 : vector<1x32x32xbf16> to vector<32x32xbf16>
    %cst_87 = arith.constant dense<0.000000e+00> : vector<1x32xf32>
    %302 = tpu.matmul %299, %301, %cst_87 {dimension_numbers = #tpu.dot_dimension_numbers<[1], [0], [0], [1], [0, 0, 1, 1], [], []>} : vector<1x32xbf16>, vector<32x32xbf16>, vector<1x32xf32> -> vector<1x32xf32>
    %303 = arith.addf %297, %302 : vector<1x32xf32>
    %304 = vector.extract_strided_slice %286 {offsets = [3, 0], sizes = [1, 32], strides = [1, 1]} : vector<5x32xf32> to vector<1x32xf32>
    %305 = arith.truncf %304 : vector<1x32xf32> to vector<1x32xbf16>
    %306 = vector.extract_strided_slice %18 {offsets = [3, 0, 0], sizes = [1, 32, 32], strides = [1, 1, 1]} : vector<5x32x32xbf16> to vector<1x32x32xbf16>
    %307 = vector.shape_cast %306 : vector<1x32x32xbf16> to vector<32x32xbf16>
    %cst_88 = arith.constant dense<0.000000e+00> : vector<1x32xf32>
    %308 = tpu.matmul %305, %307, %cst_88 {dimension_numbers = #tpu.dot_dimension_numbers<[1], [0], [0], [1], [0, 0, 1, 1], [], []>} : vector<1x32xbf16>, vector<32x32xbf16>, vector<1x32xf32> -> vector<1x32xf32>
    %309 = arith.addf %303, %308 : vector<1x32xf32>
    %310 = vector.extract_strided_slice %286 {offsets = [4, 0], sizes = [1, 32], strides = [1, 1]} : vector<5x32xf32> to vector<1x32xf32>
    %311 = arith.truncf %310 : vector<1x32xf32> to vector<1x32xbf16>
    %312 = vector.extract_strided_slice %18 {offsets = [4, 0, 0], sizes = [1, 32, 32], strides = [1, 1, 1]} : vector<5x32x32xbf16> to vector<1x32x32xbf16>
    %313 = vector.shape_cast %312 : vector<1x32x32xbf16> to vector<32x32xbf16>
    %cst_89 = arith.constant dense<0.000000e+00> : vector<1x32xf32>
    %314 = tpu.matmul %311, %313, %cst_89 {dimension_numbers = #tpu.dot_dimension_numbers<[1], [0], [0], [1], [0, 0, 1, 1], [], []>} : vector<1x32xbf16>, vector<32x32xbf16>, vector<1x32xf32> -> vector<1x32xf32>
    %315 = arith.addf %309, %314 : vector<1x32xf32>
    %cst_90 = arith.constant 0.000000e+00 : f32
    %316 = vector.broadcast %cst_90 : f32 to vector<1x32xf32>
    %317 = arith.maximumf %315, %316 : vector<1x32xf32>
    %318 = vector.broadcast %317 : vector<1x32xf32> to vector<11x32xf32>
    %319 = arith.mulf %247, %318 : vector<11x32xf32>
    %cst_91 = arith.constant dense<0.000000e+00> : vector<11xf32>
    %320 = vector.multi_reduction <add>, %319, %cst_91 [1] : vector<11x32xf32> to vector<11xf32>
    %321 = vector.shape_cast %320 : vector<11xf32> to vector<11x1xf32>
    %cst_92 = arith.constant 1.000000e-15 : f32
    %322 = vector.broadcast %cst_92 : f32 to vector<11x1xf32>
    %323 = arith.addf %321, %322 : vector<11x1xf32>
    %cst_93 = arith.constant dense<0.000000e+00> : vector<1xf32>
    %324 = vector.multi_reduction <add>, %323, %cst_93 [0] : vector<11x1xf32> to vector<1xf32>
    %325 = vector.shape_cast %324 : vector<1xf32> to vector<1x1xf32>
    %326 = vector.broadcast %325 : vector<1x1xf32> to vector<11x1xf32>
    %327 = arith.divf %323, %326 : vector<11x1xf32>
    %328 = vector.extract_strided_slice %9 {offsets = [20, 0, 0], sizes = [20, 11, 3], strides = [1, 1, 1]} : vector<40x11x3xf32> to vector<20x11x3xf32>
    %329 = vector.shape_cast %327 : vector<11x1xf32> to vector<1x11x1xf32>
    %330 = vector.broadcast %329 : vector<1x11x1xf32> to vector<20x11x3xf32>
    %331 = arith.mulf %328, %330 : vector<20x11x3xf32>
    %cst_94 = arith.constant dense<0.000000e+00> : vector<20x3xf32>
    %332 = vector.multi_reduction <add>, %331, %cst_94 [1] : vector<20x11x3xf32> to vector<20x3xf32>
    %cst_95 = arith.constant dense<0.000000e+00> : vector<8x3xf32>
    %333 = tpu.matmul %10, %332, %cst_95 {dimension_numbers = #tpu.dot_dimension_numbers<[1], [0], [0], [1], [0, 0, 1, 1], [], []>} : vector<8x20xf32>, vector<20x3xf32>, vector<8x3xf32> -> vector<8x3xf32>
    %c0_96 = arith.constant 0 : index
    %c1 = arith.constant 1 : index
    %c0_97 = arith.constant 0 : index
    %c0_98 = arith.constant 0 : index
    %334 = vector.load %arg9[%c0_96, %c1, %c0_97, %c0_98] : memref<1x2x8x3xf32, #tpu.memory_space<vmem>>, vector<1x1x8x3xf32>
    %335 = vector.shape_cast %334 : vector<1x1x8x3xf32> to vector<8x3xf32>
    %336 = vector.shape_cast %333 : vector<8x3xf32> to vector<1x1x8x3xf32>
    tpu.vector_store %arg9[%c0_96, %c1, %c0_97, %c0_98], %336 {strides = array<i32>} : memref<1x2x8x3xf32, #tpu.memory_space<vmem>>, vector<1x1x8x3xf32>,
    return
  }
  func.func @transform_0(%arg0: i32) -> (i32, i32, i32, i32) {
    %c0_i32 = arith.constant 0 : i32
    %c0_i32_0 = arith.constant 0 : i32
    %c0_i32_1 = arith.constant 0 : i32
    %c0_i32_2 = arith.constant 0 : i32
    return %arg0, %c0_i32, %c0_i32_0, %c0_i32_1 : i32, i32, i32, i32
  }
  func.func @transform_1(%arg0: i32) -> (i32, i32, i32, i32) {
    %c0_i32 = arith.constant 0 : i32
    %c0_i32_0 = arith.constant 0 : i32
    %c0_i32_1 = arith.constant 0 : i32
    %c0_i32_2 = arith.constant 0 : i32
    return %arg0, %c0_i32, %c0_i32_0, %c0_i32_1 : i32, i32, i32, i32
  }
  func.func @transform_2(%arg0: i32) -> (i32, i32, i32, i32) {
    %c0_i32 = arith.constant 0 : i32
    %c0_i32_0 = arith.constant 0 : i32
    %c0_i32_1 = arith.constant 0 : i32
    %c0_i32_2 = arith.constant 0 : i32
    return %arg0, %c0_i32, %c0_i32_0, %c0_i32_1 : i32, i32, i32, i32
  }
  func.func @transform_3(%arg0: i32) -> (i32, i32, i32, i32) {
    %c0_i32 = arith.constant 0 : i32
    %c0_i32_0 = arith.constant 0 : i32
    %c0_i32_1 = arith.constant 0 : i32
    %c0_i32_2 = arith.constant 0 : i32
    return %arg0, %c0_i32, %c0_i32_0, %c0_i32_1 : i32, i32, i32, i32
  }
  func.func @transform_4(%arg0: i32) -> (i32, i32, i32, i32) {
    %c0_i32 = arith.constant 0 : i32
    %c0_i32_0 = arith.constant 0 : i32
    %c0_i32_1 = arith.constant 0 : i32
    %c0_i32_2 = arith.constant 0 : i32
    return %arg0, %c0_i32, %c0_i32_0, %c0_i32_1 : i32, i32, i32, i32
  }
  func.func @transform_5(%arg0: i32) -> (i32, i32, i32, i32) {
    %c0_i32 = arith.constant 0 : i32
    %c0_i32_0 = arith.constant 0 : i32
    %c0_i32_1 = arith.constant 0 : i32
    %c0_i32_2 = arith.constant 0 : i32
    return %arg0, %c0_i32, %c0_i32_0, %c0_i32_1 : i32, i32, i32, i32
  }
  func.func @transform_6(%arg0: i32) -> (i32, i32, i32, i32) {
    %c0_i32 = arith.constant 0 : i32
    %c0_i32_0 = arith.constant 0 : i32
    %c0_i32_1 = arith.constant 0 : i32
    %c0_i32_2 = arith.constant 0 : i32
    return %arg0, %c0_i32, %c0_i32_0, %c0_i32_1 : i32, i32, i32, i32
  }
  func.func @transform_7(%arg0: i32) -> (i32, i32) {
    %c0_i32 = arith.constant 0 : i32
    %c0_i32_0 = arith.constant 0 : i32
    %c0_i32_1 = arith.constant 0 : i32
    return %c0_i32, %c0_i32_0 : i32, i32
  }
  func.func @transform_8(%arg0: i32) -> (i32, i32, i32, i32) {
    %c0_i32 = arith.constant 0 : i32
    %c0_i32_0 = arith.constant 0 : i32
    %c0_i32_1 = arith.constant 0 : i32
    %c0_i32_2 = arith.constant 0 : i32
    return %arg0, %c0_i32, %c0_i32_0, %c0_i32_1 : i32, i32, i32, i32
  }
}

module attributes {stable_mosaic.version = 11 : i64} {
  func.func @_gcn_fused_kernel(%arg0: i32, %arg1: memref<2x16x20xf32, #tpu.memory_space<vmem>>, %arg2: memref<2x16x8xf32, #tpu.memory_space<vmem>>, %arg3: memref<20x8xf32, #tpu.memory_space<vmem>>, %arg4: memref<8x20xf32, #tpu.memory_space<vmem>>, %arg5: memref<16x32xbf16, #tpu.memory_space<vmem>>, %arg6: memref<16x16xbf16, #tpu.memory_space<vmem>>, %arg7: memref<1x32xf32, #tpu.memory_space<vmem>>, %arg8: memref<16x32xf32, #tpu.memory_space<vmem>>, %arg9: memref<16x32xf32, #tpu.memory_space<vmem>>, %arg10: memref<32x32xbf16, #tpu.memory_space<vmem>>, %arg11: memref<16x16xbf16, #tpu.memory_space<vmem>>, %arg12: memref<1x32xf32, #tpu.memory_space<vmem>>, %arg13: memref<16x32xf32, #tpu.memory_space<vmem>>, %arg14: memref<16x32xf32, #tpu.memory_space<vmem>>, %arg15: memref<32x32xbf16, #tpu.memory_space<vmem>>, %arg16: memref<16x16xbf16, #tpu.memory_space<vmem>>, %arg17: memref<1x32xf32, #tpu.memory_space<vmem>>, %arg18: memref<16x32xf32, #tpu.memory_space<vmem>>, %arg19: memref<16x32xf32, #tpu.memory_space<vmem>>, %arg20: memref<32x16xbf16, #tpu.memory_space<vmem>>, %arg21: memref<16x16xbf16, #tpu.memory_space<vmem>>, %arg22: memref<1x16xf32, #tpu.memory_space<vmem>>, %arg23: memref<2x16x20xf32, #tpu.memory_space<vmem>>) attributes {dimension_semantics = [#tpu.dimension_semantics<arbitrary>], iteration_bounds = array<i64: 1>, scalar_prefetch = 0 : i64, scratch_operands = 0 : i64, tpu.core_type = #tpu.core_type<tc>, window_params = [{pipeline_mode = #tpu.pipeline_mode<synchronous>, transform_indices = @transform_0, window_bounds = array<i64: 2, 16, 20>}, {pipeline_mode = #tpu.pipeline_mode<synchronous>, transform_indices = @transform_1, window_bounds = array<i64: 2, 16, 8>}, {pipeline_mode = #tpu.pipeline_mode<synchronous>, transform_indices = @transform_2, window_bounds = array<i64: 20, 8>}, {pipeline_mode = #tpu.pipeline_mode<synchronous>, transform_indices = @transform_3, window_bounds = array<i64: 8, 20>}, {pipeline_mode = #tpu.pipeline_mode<synchronous>, transform_indices = @transform_4, window_bounds = array<i64: 16, 32>}, {pipeline_mode = #tpu.pipeline_mode<synchronous>, transform_indices = @transform_5, window_bounds = array<i64: 16, 16>}, {pipeline_mode = #tpu.pipeline_mode<synchronous>, transform_indices = @transform_6, window_bounds = array<i64: 1, 32>}, {pipeline_mode = #tpu.pipeline_mode<synchronous>, transform_indices = @transform_7, window_bounds = array<i64: 16, 32>}, {pipeline_mode = #tpu.pipeline_mode<synchronous>, transform_indices = @transform_8, window_bounds = array<i64: 16, 32>}, {pipeline_mode = #tpu.pipeline_mode<synchronous>, transform_indices = @transform_9, window_bounds = array<i64: 32, 32>}, {pipeline_mode = #tpu.pipeline_mode<synchronous>, transform_indices = @transform_10, window_bounds = array<i64: 16, 16>}, {pipeline_mode = #tpu.pipeline_mode<synchronous>, transform_indices = @transform_11, window_bounds = array<i64: 1, 32>}, {pipeline_mode = #tpu.pipeline_mode<synchronous>, transform_indices = @transform_12, window_bounds = array<i64: 16, 32>}, {pipeline_mode = #tpu.pipeline_mode<synchronous>, transform_indices = @transform_13, window_bounds = array<i64: 16, 32>}, {pipeline_mode = #tpu.pipeline_mode<synchronous>, transform_indices = @transform_14, window_bounds = array<i64: 32, 32>}, {pipeline_mode = #tpu.pipeline_mode<synchronous>, transform_indices = @transform_15, window_bounds = array<i64: 16, 16>}, {pipeline_mode = #tpu.pipeline_mode<synchronous>, transform_indices = @transform_16, window_bounds = array<i64: 1, 32>}, {pipeline_mode = #tpu.pipeline_mode<synchronous>, transform_indices = @transform_17, window_bounds = array<i64: 16, 32>}, {pipeline_mode = #tpu.pipeline_mode<synchronous>, transform_indices = @transform_18, window_bounds = array<i64: 16, 32>}, {pipeline_mode = #tpu.pipeline_mode<synchronous>, transform_indices = @transform_19, window_bounds = array<i64: 32, 16>}, {pipeline_mode = #tpu.pipeline_mode<synchronous>, transform_indices = @transform_20, window_bounds = array<i64: 16, 16>}, {pipeline_mode = #tpu.pipeline_mode<synchronous>, transform_indices = @transform_21, window_bounds = array<i64: 1, 16>}, {pipeline_mode = #tpu.pipeline_mode<synchronous>, transform_indices = @transform_22, window_bounds = array<i64: 2, 16, 20>}]} {
    %c0 = arith.constant 0 : index
    %c0_0 = arith.constant 0 : index
    %c0_1 = arith.constant 0 : index
    %0 = vector.load %arg1[%c0, %c0_0, %c0_1] : memref<2x16x20xf32, #tpu.memory_space<vmem>>, vector<2x16x20xf32>
    %c0_2 = arith.constant 0 : index
    %c0_3 = arith.constant 0 : index
    %c0_4 = arith.constant 0 : index
    %1 = vector.load %arg2[%c0_2, %c0_3, %c0_4] : memref<2x16x8xf32, #tpu.memory_space<vmem>>, vector<2x16x8xf32>
    %c0_5 = arith.constant 0 : index
    %c0_6 = arith.constant 0 : index
    %2 = vector.load %arg3[%c0_5, %c0_6] : memref<20x8xf32, #tpu.memory_space<vmem>>, vector<20x8xf32>
    %c0_7 = arith.constant 0 : index
    %c0_8 = arith.constant 0 : index
    %3 = vector.load %arg4[%c0_7, %c0_8] : memref<8x20xf32, #tpu.memory_space<vmem>>, vector<8x20xf32>
    %4 = vector.extract_strided_slice %0 {offsets = [0, 0, 0], sizes = [1, 16, 20], strides = [1, 1, 1]} : vector<2x16x20xf32> to vector<1x16x20xf32>
    %5 = vector.shape_cast %4 : vector<1x16x20xf32> to vector<16x20xf32>
    %cst = arith.constant dense<0.000000e+00> : vector<16x8xf32>
    %6 = tpu.matmul %5, %2, %cst {dimension_numbers = #tpu.dot_dimension_numbers<[1], [0], [0], [1], [0, 0, 1, 1], [], []>} : vector<16x20xf32>, vector<20x8xf32>, vector<16x8xf32> -> vector<16x8xf32>
    %7 = vector.extract_strided_slice %0 {offsets = [1, 0, 0], sizes = [1, 16, 20], strides = [1, 1, 1]} : vector<2x16x20xf32> to vector<1x16x20xf32>
    %8 = vector.shape_cast %7 : vector<1x16x20xf32> to vector<16x20xf32>
    %cst_9 = arith.constant dense<0.000000e+00> : vector<16x8xf32>
    %9 = tpu.matmul %8, %2, %cst_9 {dimension_numbers = #tpu.dot_dimension_numbers<[1], [0], [0], [1], [0, 0, 1, 1], [], []>} : vector<16x20xf32>, vector<20x8xf32>, vector<16x8xf32> -> vector<16x8xf32>
    %10 = vector.extract_strided_slice %1 {offsets = [0, 0, 0], sizes = [1, 16, 8], strides = [1, 1, 1]} : vector<2x16x8xf32> to vector<1x16x8xf32>
    %11 = vector.shape_cast %10 : vector<1x16x8xf32> to vector<16x8xf32>
    %12 = vector.extract_strided_slice %1 {offsets = [1, 0, 0], sizes = [1, 16, 8], strides = [1, 1, 1]} : vector<2x16x8xf32> to vector<1x16x8xf32>
    %13 = vector.shape_cast %12 : vector<1x16x8xf32> to vector<16x8xf32>
    %c0_10 = arith.constant 0 : index
    %c0_11 = arith.constant 0 : index
    %14 = vector.load %arg5[%c0_10, %c0_11] : memref<16x32xbf16, #tpu.memory_space<vmem>>, vector<16x32xbf16>
    %15 = tpu.concatenate %6, %9 in 0 : vector<16x8xf32>, vector<16x8xf32> -> vector<32x8xf32>
    %16 = arith.truncf %15 : vector<32x8xf32> to vector<32x8xbf16>
    %17 = vector.extract_strided_slice %14 {offsets = [0, 0], sizes = [8, 32], strides = [1, 1]} : vector<16x32xbf16> to vector<8x32xbf16>
    %cst_12 = arith.constant dense<0.000000e+00> : vector<32x32xf32>
    %18 = tpu.matmul %16, %17, %cst_12 {dimension_numbers = #tpu.dot_dimension_numbers<[1], [0], [0], [1], [0, 0, 1, 1], [], []>} : vector<32x8xbf16>, vector<8x32xbf16>, vector<32x32xf32> -> vector<32x32xf32>
    %19 = tpu.concatenate %11, %13 in 0 : vector<16x8xf32>, vector<16x8xf32> -> vector<32x8xf32>
    %20 = arith.truncf %19 : vector<32x8xf32> to vector<32x8xbf16>
    %21 = vector.extract_strided_slice %14 {offsets = [8, 0], sizes = [8, 32], strides = [1, 1]} : vector<16x32xbf16> to vector<8x32xbf16>
    %cst_13 = arith.constant dense<0.000000e+00> : vector<32x32xf32>
    %22 = tpu.matmul %20, %21, %cst_13 {dimension_numbers = #tpu.dot_dimension_numbers<[1], [0], [0], [1], [0, 0, 1, 1], [], []>} : vector<32x8xbf16>, vector<8x32xbf16>, vector<32x32xf32> -> vector<32x32xf32>
    %23 = arith.addf %18, %22 : vector<32x32xf32>
    %c0_14 = arith.constant 0 : index
    %c0_15 = arith.constant 0 : index
    %24 = vector.load %arg6[%c0_14, %c0_15] : memref<16x16xbf16, #tpu.memory_space<vmem>>, vector<16x16xbf16>
    %c0_16 = arith.constant 0 : index
    %c0_17 = arith.constant 0 : index
    %25 = vector.load %arg7[%c0_16, %c0_17] : memref<1x32xf32, #tpu.memory_space<vmem>>, vector<1x32xf32>
    %26 = vector.extract_strided_slice %23 {offsets = [0, 0], sizes = [16, 32], strides = [1, 1]} : vector<32x32xf32> to vector<16x32xf32>
    %27 = arith.truncf %26 : vector<16x32xf32> to vector<16x32xbf16>
    %cst_18 = arith.constant dense<0.000000e+00> : vector<16x32xf32>
    %28 = tpu.matmul %24, %27, %cst_18 {dimension_numbers = #tpu.dot_dimension_numbers<[1], [0], [0], [1], [0, 0, 1, 1], [], []>} : vector<16x16xbf16>, vector<16x32xbf16>, vector<16x32xf32> -> vector<16x32xf32>
    %29 = vector.broadcast %25 : vector<1x32xf32> to vector<16x32xf32>
    %30 = arith.addf %28, %29 : vector<16x32xf32>
    %31 = vector.extract_strided_slice %23 {offsets = [16, 0], sizes = [16, 32], strides = [1, 1]} : vector<32x32xf32> to vector<16x32xf32>
    %32 = arith.truncf %31 : vector<16x32xf32> to vector<16x32xbf16>
    %cst_19 = arith.constant dense<0.000000e+00> : vector<16x32xf32>
    %33 = tpu.matmul %24, %32, %cst_19 {dimension_numbers = #tpu.dot_dimension_numbers<[1], [0], [0], [1], [0, 0, 1, 1], [], []>} : vector<16x16xbf16>, vector<16x32xbf16>, vector<16x32xf32> -> vector<16x32xf32>
    %34 = vector.broadcast %25 : vector<1x32xf32> to vector<16x32xf32>
    %35 = arith.addf %33, %34 : vector<16x32xf32>
    %c0_20 = arith.constant 0 : index
    %c0_21 = arith.constant 0 : index
    %36 = vector.load %arg8[%c0_20, %c0_21] : memref<16x32xf32, #tpu.memory_space<vmem>>, vector<16x32xf32>
    %c0_22 = arith.constant 0 : index
    %c0_23 = arith.constant 0 : index
    %37 = vector.load %arg9[%c0_22, %c0_23] : memref<16x32xf32, #tpu.memory_space<vmem>>, vector<16x32xf32>
    %38 = arith.mulf %30, %36 : vector<16x32xf32>
    %39 = arith.addf %38, %37 : vector<16x32xf32>
    %40 = math.tanh %39 : vector<16x32xf32>
    %41 = arith.mulf %35, %36 : vector<16x32xf32>
    %42 = arith.addf %41, %37 : vector<16x32xf32>
    %43 = math.tanh %42 : vector<16x32xf32>
    %44 = tpu.concatenate %40, %43 in 0 : vector<16x32xf32>, vector<16x32xf32> -> vector<32x32xf32>
    %45 = arith.truncf %44 : vector<32x32xf32> to vector<32x32xbf16>
    %c0_24 = arith.constant 0 : index
    %c0_25 = arith.constant 0 : index
    %46 = vector.load %arg10[%c0_24, %c0_25] : memref<32x32xbf16, #tpu.memory_space<vmem>>, vector<32x32xbf16>
    %cst_26 = arith.constant dense<0.000000e+00> : vector<32x32xf32>
    %47 = tpu.matmul %45, %46, %cst_26 {dimension_numbers = #tpu.dot_dimension_numbers<[1], [0], [0], [1], [0, 0, 1, 1], [], []>} : vector<32x32xbf16>, vector<32x32xbf16>, vector<32x32xf32> -> vector<32x32xf32>
    %c0_27 = arith.constant 0 : index
    %c0_28 = arith.constant 0 : index
    %48 = vector.load %arg11[%c0_27, %c0_28] : memref<16x16xbf16, #tpu.memory_space<vmem>>, vector<16x16xbf16>
    %c0_29 = arith.constant 0 : index
    %c0_30 = arith.constant 0 : index
    %49 = vector.load %arg12[%c0_29, %c0_30] : memref<1x32xf32, #tpu.memory_space<vmem>>, vector<1x32xf32>
    %50 = vector.extract_strided_slice %47 {offsets = [0, 0], sizes = [16, 32], strides = [1, 1]} : vector<32x32xf32> to vector<16x32xf32>
    %51 = arith.truncf %50 : vector<16x32xf32> to vector<16x32xbf16>
    %cst_31 = arith.constant dense<0.000000e+00> : vector<16x32xf32>
    %52 = tpu.matmul %48, %51, %cst_31 {dimension_numbers = #tpu.dot_dimension_numbers<[1], [0], [0], [1], [0, 0, 1, 1], [], []>} : vector<16x16xbf16>, vector<16x32xbf16>, vector<16x32xf32> -> vector<16x32xf32>
    %53 = vector.broadcast %49 : vector<1x32xf32> to vector<16x32xf32>
    %54 = arith.addf %52, %53 : vector<16x32xf32>
    %55 = vector.extract_strided_slice %47 {offsets = [16, 0], sizes = [16, 32], strides = [1, 1]} : vector<32x32xf32> to vector<16x32xf32>
    %56 = arith.truncf %55 : vector<16x32xf32> to vector<16x32xbf16>
    %cst_32 = arith.constant dense<0.000000e+00> : vector<16x32xf32>
    %57 = tpu.matmul %48, %56, %cst_32 {dimension_numbers = #tpu.dot_dimension_numbers<[1], [0], [0], [1], [0, 0, 1, 1], [], []>} : vector<16x16xbf16>, vector<16x32xbf16>, vector<16x32xf32> -> vector<16x32xf32>
    %58 = vector.broadcast %49 : vector<1x32xf32> to vector<16x32xf32>
    %59 = arith.addf %57, %58 : vector<16x32xf32>
    %c0_33 = arith.constant 0 : index
    %c0_34 = arith.constant 0 : index
    %60 = vector.load %arg13[%c0_33, %c0_34] : memref<16x32xf32, #tpu.memory_space<vmem>>, vector<16x32xf32>
    %c0_35 = arith.constant 0 : index
    %c0_36 = arith.constant 0 : index
    %61 = vector.load %arg14[%c0_35, %c0_36] : memref<16x32xf32, #tpu.memory_space<vmem>>, vector<16x32xf32>
    %62 = arith.mulf %54, %60 : vector<16x32xf32>
    %63 = arith.addf %62, %61 : vector<16x32xf32>
    %64 = math.tanh %63 : vector<16x32xf32>
    %65 = arith.mulf %59, %60 : vector<16x32xf32>
    %66 = arith.addf %65, %61 : vector<16x32xf32>
    %67 = math.tanh %66 : vector<16x32xf32>
    %68 = tpu.concatenate %64, %67 in 0 : vector<16x32xf32>, vector<16x32xf32> -> vector<32x32xf32>
    %69 = arith.truncf %68 : vector<32x32xf32> to vector<32x32xbf16>
    %c0_37 = arith.constant 0 : index
    %c0_38 = arith.constant 0 : index
    %70 = vector.load %arg15[%c0_37, %c0_38] : memref<32x32xbf16, #tpu.memory_space<vmem>>, vector<32x32xbf16>
    %cst_39 = arith.constant dense<0.000000e+00> : vector<32x32xf32>
    %71 = tpu.matmul %69, %70, %cst_39 {dimension_numbers = #tpu.dot_dimension_numbers<[1], [0], [0], [1], [0, 0, 1, 1], [], []>} : vector<32x32xbf16>, vector<32x32xbf16>, vector<32x32xf32> -> vector<32x32xf32>
    %c0_40 = arith.constant 0 : index
    %c0_41 = arith.constant 0 : index
    %72 = vector.load %arg16[%c0_40, %c0_41] : memref<16x16xbf16, #tpu.memory_space<vmem>>, vector<16x16xbf16>
    %c0_42 = arith.constant 0 : index
    %c0_43 = arith.constant 0 : index
    %73 = vector.load %arg17[%c0_42, %c0_43] : memref<1x32xf32, #tpu.memory_space<vmem>>, vector<1x32xf32>
    %74 = vector.extract_strided_slice %71 {offsets = [0, 0], sizes = [16, 32], strides = [1, 1]} : vector<32x32xf32> to vector<16x32xf32>
    %75 = arith.truncf %74 : vector<16x32xf32> to vector<16x32xbf16>
    %cst_44 = arith.constant dense<0.000000e+00> : vector<16x32xf32>
    %76 = tpu.matmul %72, %75, %cst_44 {dimension_numbers = #tpu.dot_dimension_numbers<[1], [0], [0], [1], [0, 0, 1, 1], [], []>} : vector<16x16xbf16>, vector<16x32xbf16>, vector<16x32xf32> -> vector<16x32xf32>
    %77 = vector.broadcast %73 : vector<1x32xf32> to vector<16x32xf32>
    %78 = arith.addf %76, %77 : vector<16x32xf32>
    %79 = vector.extract_strided_slice %71 {offsets = [16, 0], sizes = [16, 32], strides = [1, 1]} : vector<32x32xf32> to vector<16x32xf32>
    %80 = arith.truncf %79 : vector<16x32xf32> to vector<16x32xbf16>
    %cst_45 = arith.constant dense<0.000000e+00> : vector<16x32xf32>
    %81 = tpu.matmul %72, %80, %cst_45 {dimension_numbers = #tpu.dot_dimension_numbers<[1], [0], [0], [1], [0, 0, 1, 1], [], []>} : vector<16x16xbf16>, vector<16x32xbf16>, vector<16x32xf32> -> vector<16x32xf32>
    %82 = vector.broadcast %73 : vector<1x32xf32> to vector<16x32xf32>
    %83 = arith.addf %81, %82 : vector<16x32xf32>
    %c0_46 = arith.constant 0 : index
    %c0_47 = arith.constant 0 : index
    %84 = vector.load %arg18[%c0_46, %c0_47] : memref<16x32xf32, #tpu.memory_space<vmem>>, vector<16x32xf32>
    %c0_48 = arith.constant 0 : index
    %c0_49 = arith.constant 0 : index
    %85 = vector.load %arg19[%c0_48, %c0_49] : memref<16x32xf32, #tpu.memory_space<vmem>>, vector<16x32xf32>
    %86 = arith.mulf %78, %84 : vector<16x32xf32>
    %87 = arith.addf %86, %85 : vector<16x32xf32>
    %88 = math.tanh %87 : vector<16x32xf32>
    %89 = arith.mulf %83, %84 : vector<16x32xf32>
    %90 = arith.addf %89, %85 : vector<16x32xf32>
    %91 = math.tanh %90 : vector<16x32xf32>
    %92 = arith.addf %88, %40 : vector<16x32xf32>
    %93 = arith.addf %91, %43 : vector<16x32xf32>
    %94 = tpu.concatenate %92, %93 in 0 : vector<16x32xf32>, vector<16x32xf32> -> vector<32x32xf32>
    %95 = arith.truncf %94 : vector<32x32xf32> to vector<32x32xbf16>
    %c0_50 = arith.constant 0 : index
    %c0_51 = arith.constant 0 : index
    %96 = vector.load %arg20[%c0_50, %c0_51] : memref<32x16xbf16, #tpu.memory_space<vmem>>, vector<32x16xbf16>
    %cst_52 = arith.constant dense<0.000000e+00> : vector<32x16xf32>
    %97 = tpu.matmul %95, %96, %cst_52 {dimension_numbers = #tpu.dot_dimension_numbers<[1], [0], [0], [1], [0, 0, 1, 1], [], []>} : vector<32x32xbf16>, vector<32x16xbf16>, vector<32x16xf32> -> vector<32x16xf32>
    %c0_53 = arith.constant 0 : index
    %c0_54 = arith.constant 0 : index
    %98 = vector.load %arg21[%c0_53, %c0_54] : memref<16x16xbf16, #tpu.memory_space<vmem>>, vector<16x16xbf16>
    %c0_55 = arith.constant 0 : index
    %c0_56 = arith.constant 0 : index
    %99 = vector.load %arg22[%c0_55, %c0_56] : memref<1x16xf32, #tpu.memory_space<vmem>>, vector<1x16xf32>
    %100 = vector.extract_strided_slice %97 {offsets = [0, 0], sizes = [16, 16], strides = [1, 1]} : vector<32x16xf32> to vector<16x16xf32>
    %101 = arith.truncf %100 : vector<16x16xf32> to vector<16x16xbf16>
    %cst_57 = arith.constant dense<0.000000e+00> : vector<16x16xf32>
    %102 = tpu.matmul %98, %101, %cst_57 {dimension_numbers = #tpu.dot_dimension_numbers<[1], [0], [0], [1], [0, 0, 1, 1], [], []>} : vector<16x16xbf16>, vector<16x16xbf16>, vector<16x16xf32> -> vector<16x16xf32>
    %103 = vector.broadcast %99 : vector<1x16xf32> to vector<16x16xf32>
    %104 = arith.addf %102, %103 : vector<16x16xf32>
    %105 = vector.extract_strided_slice %97 {offsets = [16, 0], sizes = [16, 16], strides = [1, 1]} : vector<32x16xf32> to vector<16x16xf32>
    %106 = arith.truncf %105 : vector<16x16xf32> to vector<16x16xbf16>
    %cst_58 = arith.constant dense<0.000000e+00> : vector<16x16xf32>
    %107 = tpu.matmul %98, %106, %cst_58 {dimension_numbers = #tpu.dot_dimension_numbers<[1], [0], [0], [1], [0, 0, 1, 1], [], []>} : vector<16x16xbf16>, vector<16x16xbf16>, vector<16x16xf32> -> vector<16x16xf32>
    %108 = vector.broadcast %99 : vector<1x16xf32> to vector<16x16xf32>
    %109 = arith.addf %107, %108 : vector<16x16xf32>
    %110 = vector.extract_strided_slice %104 {offsets = [0, 0], sizes = [16, 8], strides = [1, 1]} : vector<16x16xf32> to vector<16x8xf32>
    %111 = arith.addf %110, %6 : vector<16x8xf32>
    %cst_59 = arith.constant dense<0.000000e+00> : vector<16x20xf32>
    %112 = tpu.matmul %111, %3, %cst_59 {dimension_numbers = #tpu.dot_dimension_numbers<[1], [0], [0], [1], [0, 0, 1, 1], [], []>} : vector<16x8xf32>, vector<8x20xf32>, vector<16x20xf32> -> vector<16x20xf32>
    %c0_60 = arith.constant 0 : index
    %c0_61 = arith.constant 0 : index
    %c0_62 = arith.constant 0 : index
    %113 = vector.load %arg23[%c0_60, %c0_61, %c0_62] : memref<2x16x20xf32, #tpu.memory_space<vmem>>, vector<1x16x20xf32>
    %114 = vector.shape_cast %113 : vector<1x16x20xf32> to vector<16x20xf32>
    %115 = vector.shape_cast %112 : vector<16x20xf32> to vector<1x16x20xf32>
    tpu.vector_store %arg23[%c0_60, %c0_61, %c0_62], %115 {strides = array<i32>} : memref<2x16x20xf32, #tpu.memory_space<vmem>>, vector<1x16x20xf32>,
    %116 = vector.extract_strided_slice %109 {offsets = [0, 0], sizes = [16, 8], strides = [1, 1]} : vector<16x16xf32> to vector<16x8xf32>
    %117 = arith.addf %116, %9 : vector<16x8xf32>
    %cst_63 = arith.constant dense<0.000000e+00> : vector<16x20xf32>
    %118 = tpu.matmul %117, %3, %cst_63 {dimension_numbers = #tpu.dot_dimension_numbers<[1], [0], [0], [1], [0, 0, 1, 1], [], []>} : vector<16x8xf32>, vector<8x20xf32>, vector<16x20xf32> -> vector<16x20xf32>
    %c1 = arith.constant 1 : index
    %c0_64 = arith.constant 0 : index
    %c0_65 = arith.constant 0 : index
    %119 = vector.load %arg23[%c1, %c0_64, %c0_65] : memref<2x16x20xf32, #tpu.memory_space<vmem>>, vector<1x16x20xf32>
    %120 = vector.shape_cast %119 : vector<1x16x20xf32> to vector<16x20xf32>
    %121 = vector.shape_cast %118 : vector<16x20xf32> to vector<1x16x20xf32>
    tpu.vector_store %arg23[%c1, %c0_64, %c0_65], %121 {strides = array<i32>} : memref<2x16x20xf32, #tpu.memory_space<vmem>>, vector<1x16x20xf32>,
    return
  }
  func.func @transform_0(%arg0: i32) -> (i32, i32, i32) {
    %c0_i32 = arith.constant 0 : i32
    %c0_i32_0 = arith.constant 0 : i32
    %c0_i32_1 = arith.constant 0 : i32
    %c0_i32_2 = arith.constant 0 : i32
    return %c0_i32, %c0_i32_0, %c0_i32_1 : i32, i32, i32
  }
  func.func @transform_1(%arg0: i32) -> (i32, i32, i32) {
    %c0_i32 = arith.constant 0 : i32
    %c0_i32_0 = arith.constant 0 : i32
    %c0_i32_1 = arith.constant 0 : i32
    %c0_i32_2 = arith.constant 0 : i32
    return %c0_i32, %c0_i32_0, %c0_i32_1 : i32, i32, i32
  }
  func.func @transform_2(%arg0: i32) -> (i32, i32) {
    %c0_i32 = arith.constant 0 : i32
    %c0_i32_0 = arith.constant 0 : i32
    %c0_i32_1 = arith.constant 0 : i32
    return %c0_i32, %c0_i32_0 : i32, i32
  }
  func.func @transform_3(%arg0: i32) -> (i32, i32) {
    %c0_i32 = arith.constant 0 : i32
    %c0_i32_0 = arith.constant 0 : i32
    %c0_i32_1 = arith.constant 0 : i32
    return %c0_i32, %c0_i32_0 : i32, i32
  }
  func.func @transform_4(%arg0: i32) -> (i32, i32) {
    %c0_i32 = arith.constant 0 : i32
    %c0_i32_0 = arith.constant 0 : i32
    %c0_i32_1 = arith.constant 0 : i32
    return %c0_i32, %c0_i32_0 : i32, i32
  }
  func.func @transform_5(%arg0: i32) -> (i32, i32) {
    %c0_i32 = arith.constant 0 : i32
    %c0_i32_0 = arith.constant 0 : i32
    %c0_i32_1 = arith.constant 0 : i32
    return %c0_i32, %c0_i32_0 : i32, i32
  }
  func.func @transform_6(%arg0: i32) -> (i32, i32) {
    %c0_i32 = arith.constant 0 : i32
    %c0_i32_0 = arith.constant 0 : i32
    %c0_i32_1 = arith.constant 0 : i32
    return %c0_i32, %c0_i32_0 : i32, i32
  }
  func.func @transform_7(%arg0: i32) -> (i32, i32) {
    %c0_i32 = arith.constant 0 : i32
    %c0_i32_0 = arith.constant 0 : i32
    %c0_i32_1 = arith.constant 0 : i32
    return %c0_i32, %c0_i32_0 : i32, i32
  }
  func.func @transform_8(%arg0: i32) -> (i32, i32) {
    %c0_i32 = arith.constant 0 : i32
    %c0_i32_0 = arith.constant 0 : i32
    %c0_i32_1 = arith.constant 0 : i32
    return %c0_i32, %c0_i32_0 : i32, i32
  }
  func.func @transform_9(%arg0: i32) -> (i32, i32) {
    %c0_i32 = arith.constant 0 : i32
    %c0_i32_0 = arith.constant 0 : i32
    %c0_i32_1 = arith.constant 0 : i32
    return %c0_i32, %c0_i32_0 : i32, i32
  }
  func.func @transform_10(%arg0: i32) -> (i32, i32) {
    %c0_i32 = arith.constant 0 : i32
    %c0_i32_0 = arith.constant 0 : i32
    %c0_i32_1 = arith.constant 0 : i32
    return %c0_i32, %c0_i32_0 : i32, i32
  }
  func.func @transform_11(%arg0: i32) -> (i32, i32) {
    %c0_i32 = arith.constant 0 : i32
    %c0_i32_0 = arith.constant 0 : i32
    %c0_i32_1 = arith.constant 0 : i32
    return %c0_i32, %c0_i32_0 : i32, i32
  }
  func.func @transform_12(%arg0: i32) -> (i32, i32) {
    %c0_i32 = arith.constant 0 : i32
    %c0_i32_0 = arith.constant 0 : i32
    %c0_i32_1 = arith.constant 0 : i32
    return %c0_i32, %c0_i32_0 : i32, i32
  }
  func.func @transform_13(%arg0: i32) -> (i32, i32) {
    %c0_i32 = arith.constant 0 : i32
    %c0_i32_0 = arith.constant 0 : i32
    %c0_i32_1 = arith.constant 0 : i32
    return %c0_i32, %c0_i32_0 : i32, i32
  }
  func.func @transform_14(%arg0: i32) -> (i32, i32) {
    %c0_i32 = arith.constant 0 : i32
    %c0_i32_0 = arith.constant 0 : i32
    %c0_i32_1 = arith.constant 0 : i32
    return %c0_i32, %c0_i32_0 : i32, i32
  }
  func.func @transform_15(%arg0: i32) -> (i32, i32) {
    %c0_i32 = arith.constant 0 : i32
    %c0_i32_0 = arith.constant 0 : i32
    %c0_i32_1 = arith.constant 0 : i32
    return %c0_i32, %c0_i32_0 : i32, i32
  }
  func.func @transform_16(%arg0: i32) -> (i32, i32) {
    %c0_i32 = arith.constant 0 : i32
    %c0_i32_0 = arith.constant 0 : i32
    %c0_i32_1 = arith.constant 0 : i32
    return %c0_i32, %c0_i32_0 : i32, i32
  }
  func.func @transform_17(%arg0: i32) -> (i32, i32) {
    %c0_i32 = arith.constant 0 : i32
    %c0_i32_0 = arith.constant 0 : i32
    %c0_i32_1 = arith.constant 0 : i32
    return %c0_i32, %c0_i32_0 : i32, i32
  }
  func.func @transform_18(%arg0: i32) -> (i32, i32) {
    %c0_i32 = arith.constant 0 : i32
    %c0_i32_0 = arith.constant 0 : i32
    %c0_i32_1 = arith.constant 0 : i32
    return %c0_i32, %c0_i32_0 : i32, i32
  }
  func.func @transform_19(%arg0: i32) -> (i32, i32) {
    %c0_i32 = arith.constant 0 : i32
    %c0_i32_0 = arith.constant 0 : i32
    %c0_i32_1 = arith.constant 0 : i32
    return %c0_i32, %c0_i32_0 : i32, i32
  }
  func.func @transform_20(%arg0: i32) -> (i32, i32) {
    %c0_i32 = arith.constant 0 : i32
    %c0_i32_0 = arith.constant 0 : i32
    %c0_i32_1 = arith.constant 0 : i32
    return %c0_i32, %c0_i32_0 : i32, i32
  }
  func.func @transform_21(%arg0: i32) -> (i32, i32) {
    %c0_i32 = arith.constant 0 : i32
    %c0_i32_0 = arith.constant 0 : i32
    %c0_i32_1 = arith.constant 0 : i32
    return %c0_i32, %c0_i32_0 : i32, i32
  }
  func.func @transform_22(%arg0: i32) -> (i32, i32, i32) {
    %c0_i32 = arith.constant 0 : i32
    %c0_i32_0 = arith.constant 0 : i32
    %c0_i32_1 = arith.constant 0 : i32
    %c0_i32_2 = arith.constant 0 : i32
    return %c0_i32, %c0_i32_0, %c0_i32_1 : i32, i32, i32
  }
}

</mosaic_0001>

<llo_original>
// kernel: _lambda_.3
$region0: #{_lambda_.3}
  #allocation0 [shape = 'u32[]', space=smem, size = 0x4, offset = 0x4, fixed_abs, tag = 'smem constant byte address 0x4 - core index']
  #allocation1 [shape = 'u32[144,128]{1,0:T(1,128)}', space=vmem, size = 0x12000, scoped, tag = 'internal scratch']
  %s0 = inlined_call_operand.vmem [shape: f32[2,16,20], index: 0, kind: input, shape index: {}]
  %s1 = inlined_call_operand.vmem [shape: f32[2,16,8], index: 1, kind: input, shape index: {}]
  %s2 = inlined_call_operand.vmem [shape: f32[20,8], index: 2, kind: input, shape index: {}]
  %s3 = inlined_call_operand.vmem [shape: f32[8,20], index: 3, kind: input, shape index: {}]
  %s4 = inlined_call_operand.vmem [shape: bf16[16,32], index: 4, kind: input, shape index: {}]
  %s5 = inlined_call_operand.vmem [shape: bf16[16,16], index: 5, kind: input, shape index: {}]
  %s6 = inlined_call_operand.vmem [shape: f32[1,32], index: 6, kind: input, shape index: {}]
  %s7 = inlined_call_operand.vmem [shape: f32[16,32], index: 7, kind: input, shape index: {}]
  %s8 = inlined_call_operand.vmem [shape: f32[16,32], index: 8, kind: input, shape index: {}]
  %s9 = inlined_call_operand.vmem [shape: bf16[32,32], index: 9, kind: input, shape index: {}]
  %s10 = inlined_call_operand.vmem [shape: bf16[16,16], index: 10, kind: input, shape index: {}]
  %s11 = inlined_call_operand.vmem [shape: f32[1,32], index: 11, kind: input, shape index: {}]
  %s12 = inlined_call_operand.vmem [shape: f32[16,32], index: 12, kind: input, shape index: {}]
  %s13 = inlined_call_operand.vmem [shape: f32[16,32], index: 13, kind: input, shape index: {}]
  %s14 = inlined_call_operand.vmem [shape: bf16[32,32], index: 14, kind: input, shape index: {}]
  %s15 = inlined_call_operand.vmem [shape: bf16[16,16], index: 15, kind: input, shape index: {}]
  %s16 = inlined_call_operand.vmem [shape: f32[1,32], index: 16, kind: input, shape index: {}]
  %s17 = inlined_call_operand.vmem [shape: f32[16,32], index: 17, kind: input, shape index: {}]
  %s18 = inlined_call_operand.vmem [shape: f32[16,32], index: 18, kind: input, shape index: {}]
  %s19 = inlined_call_operand.vmem [shape: bf16[32,16], index: 19, kind: input, shape index: {}]
  %s20 = inlined_call_operand.vmem [shape: bf16[16,16], index: 20, kind: input, shape index: {}]
  %s21 = inlined_call_operand.vmem [shape: f32[1,16], index: 21, kind: input, shape index: {}]
  %s22 = inlined_call_operand.hbm [shape: f32[2,16,20], index: 22, kind: output, shape index: {}]
  %s23 = sld [smem:[#allocation0]]
  $region98: #{_lambda_.3} parent=0
    _
  %s25 = ssub.s32 1, %s23
  %s26 = scalar_select 0, %s25, %s23
  $region1: #{_lambda_.3} parent=0
    #allocation2 [shape = 'u8[16384]{0}', space=vmem, size = 0x4000, scoped, tag = 'output window, operand 0, single buffered']
    #allocation3 [shape = 's32[1]{0}', space=sflag, size = 0x4, scoped, tag = 'scoped memory for _lambda_.3']
    %27 = vsyncpa [#allocation3], 0
    // Predicated region
    $region2: #{_lambda_.3} parent=1 // pred_check
      _
    $region3: #{_lambda_.3} parent=1 // pred_check_branch
      %29 = sbr.rel (0) target = $region5
    $region4: #{_lambda_.3} parent=1 // pred_region
      _
    $region5: #{_lambda_.3} parent=1 // pred_fallthru
      _
    // Predicated region
    $region6: #{_lambda_.3} parent=1 // pred_check
      _
    $region7: #{_lambda_.3} parent=1 // pred_check_branch
      %31 = sbr.rel (0) target = $region9
    $region8: #{_lambda_.3} parent=1 // pred_region
      _
    $region9: #{_lambda_.3} parent=1 // pred_fallthru
      _
    // Predicated region
    $region10: #{_lambda_.3} parent=1 // pred_check
      _
    $region11: #{_lambda_.3} parent=1 // pred_check_branch
      %33 = sbr.rel (0) target = $region13
    $region12: #{_lambda_.3} parent=1 // pred_region
      _
    $region13: #{_lambda_.3} parent=1 // pred_fallthru
      _
    // Predicated region
    $region14: #{_lambda_.3} parent=1 // pred_check
      _
    $region15: #{_lambda_.3} parent=1 // pred_check_branch
      %35 = sbr.rel (0) target = $region17
    $region16: #{_lambda_.3} parent=1 // pred_region
      _
    $region17: #{_lambda_.3} parent=1 // pred_fallthru
      _
    // Predicated region
    $region18: #{_lambda_.3} parent=1 // pred_check
      _
    $region19: #{_lambda_.3} parent=1 // pred_check_branch
      %37 = sbr.rel (0) target = $region21
    $region20: #{_lambda_.3} parent=1 // pred_region
      _
    $region21: #{_lambda_.3} parent=1 // pred_fallthru
      _
    // Predicated region
    $region22: #{_lambda_.3} parent=1 // pred_check
      _
    $region23: #{_lambda_.3} parent=1 // pred_check_branch
      %39 = sbr.rel (0) target = $region25
    $region24: #{_lambda_.3} parent=1 // pred_region
      _
    $region25: #{_lambda_.3} parent=1 // pred_fallthru
      _
    // Predicated region
    $region26: #{_lambda_.3} parent=1 // pred_check
      _
    $region27: #{_lambda_.3} parent=1 // pred_check_branch
      %41 = sbr.rel (0) target = $region29
    $region28: #{_lambda_.3} parent=1 // pred_region
      _
    $region29: #{_lambda_.3} parent=1 // pred_fallthru
      _
    // Predicated region
    $region30: #{_lambda_.3} parent=1 // pred_check
      _
    $region31: #{_lambda_.3} parent=1 // pred_check_branch
      %43 = sbr.rel (0) target = $region33
    $region32: #{_lambda_.3} parent=1 // pred_region
      _
    $region33: #{_lambda_.3} parent=1 // pred_fallthru
      _
    // Predicated region
    $region34: #{_lambda_.3} parent=1 // pred_check
      _
    $region35: #{_lambda_.3} parent=1 // pred_check_branch
      %45 = sbr.rel (0) target = $region37
    $region36: #{_lambda_.3} parent=1 // pred_region
      _
    $region37: #{_lambda_.3} parent=1 // pred_fallthru
      _
    // Predicated region
    $region38: #{_lambda_.3} parent=1 // pred_check
      _
    $region39: #{_lambda_.3} parent=1 // pred_check_branch
      %47 = sbr.rel (0) target = $region41
    $region40: #{_lambda_.3} parent=1 // pred_region
      _
    $region41: #{_lambda_.3} parent=1 // pred_fallthru
      _
    // Predicated region
    $region42: #{_lambda_.3} parent=1 // pred_check
      _
    $region43: #{_lambda_.3} parent=1 // pred_check_branch
      %49 = sbr.rel (0) target = $region45
    $region44: #{_lambda_.3} parent=1 // pred_region
      _
    $region45: #{_lambda_.3} parent=1 // pred_fallthru
      _
    // Predicated region
    $region46: #{_lambda_.3} parent=1 // pred_check
      _
    $region47: #{_lambda_.3} parent=1 // pred_check_branch
      %51 = sbr.rel (0) target = $region49
    $region48: #{_lambda_.3} parent=1 // pred_region
      _
    $region49: #{_lambda_.3} parent=1 // pred_fallthru
      _
    // Predicated region
    $region50: #{_lambda_.3} parent=1 // pred_check
      _
    $region51: #{_lambda_.3} parent=1 // pred_check_branch
      %53 = sbr.rel (0) target = $region53
    $region52: #{_lambda_.3} parent=1 // pred_region
      _
    $region53: #{_lambda_.3} parent=1 // pred_fallthru
      _
    // Predicated region
    $region54: #{_lambda_.3} parent=1 // pred_check
      _
    $region55: #{_lambda_.3} parent=1 // pred_check_branch
      %55 = sbr.rel (0) target = $region57
    $region56: #{_lambda_.3} parent=1 // pred_region
      _
    $region57: #{_lambda_.3} parent=1 // pred_fallthru
      _
    // Predicated region
    $region58: #{_lambda_.3} parent=1 // pred_check
      _
    $region59: #{_lambda_.3} parent=1 // pred_check_branch
      %57 = sbr.rel (0) target = $region61
    $region60: #{_lambda_.3} parent=1 // pred_region
      _
    $region61: #{_lambda_.3} parent=1 // pred_fallthru
      _
    // Predicated region
    $region62: #{_lambda_.3} parent=1 // pred_check
      _
    $region63: #{_lambda_.3} parent=1 // pred_check_branch
      %59 = sbr.rel (0) target = $region65
    $region64: #{_lambda_.3} parent=1 // pred_region
      _
    $region65: #{_lambda_.3} parent=1 // pred_fallthru
      _
    // Predicated region
    $region66: #{_lambda_.3} parent=1 // pred_check
      _
    $region67: #{_lambda_.3} parent=1 // pred_check_branch
      %61 = sbr.rel (0) target = $region69
    $region68: #{_lambda_.3} parent=1 // pred_region
      _
    $region69: #{_lambda_.3} parent=1 // pred_fallthru
      _
    // Predicated region
    $region70: #{_lambda_.3} parent=1 // pred_check
      _
    $region71: #{_lambda_.3} parent=1 // pred_check_branch
      %63 = sbr.rel (0) target = $region73
    $region72: #{_lambda_.3} parent=1 // pred_region
      _
    $region73: #{_lambda_.3} parent=1 // pred_fallthru
      _
    // Predicated region
    $region74: #{_lambda_.3} parent=1 // pred_check
      _
    $region75: #{_lambda_.3} parent=1 // pred_check_branch
      %65 = sbr.rel (0) target = $region77
    $region76: #{_lambda_.3} parent=1 // pred_region
      _
    $region77: #{_lambda_.3} parent=1 // pred_fallthru
      _
    // Predicated region
    $region78: #{_lambda_.3} parent=1 // pred_check
      _
    $region79: #{_lambda_.3} parent=1 // pred_check_branch
      %67 = sbr.rel (0) target = $region81
    $region80: #{_lambda_.3} parent=1 // pred_region
      _
    $region81: #{_lambda_.3} parent=1 // pred_fallthru
      _
    // Predicated region
    $region82: #{_lambda_.3} parent=1 // pred_check
      _
    $region83: #{_lambda_.3} parent=1 // pred_check_branch
      %69 = sbr.rel (0) target = $region85
    $region84: #{_lambda_.3} parent=1 // pred_region
      _
    $region85: #{_lambda_.3} parent=1 // pred_fallthru
      _
    // Predicated region
    $region86: #{_lambda_.3} parent=1 // pred_check
      _
    $region87: #{_lambda_.3} parent=1 // pred_check_branch
      %71 = sbr.rel (0) target = $region89
    $region88: #{_lambda_.3} parent=1 // pred_region
      _
    $region89: #{_lambda_.3} parent=1 // pred_fallthru
      _
    %v73 = vld [vmem:[%s0] sm:$0xff]
    %v74 = vld [vmem:[%s0 + $0x8] sm:$0xff]
    %v75 = vld [vmem:[%s0 + $0x10] sm:$0xff]
    %v76 = vld [vmem:[%s0 + $0x18] sm:$0xff]
    %v77 = vld [vmem:[%s1] sm:$0xff]
    %v78 = vld [vmem:[%s1 + $0x8] sm:$0xff]
    %v79 = vld [vmem:[%s1 + $0x10] sm:$0xff]
    %v80 = vld [vmem:[%s1 + $0x18] sm:$0xff]
    %v81 = vld [vmem:[%s2] sm:$0xff]
    %v82 = vld [vmem:[%s2 + $0x8] sm:$0xff]
    %v83 = vld [vmem:[%s2 + $0x10] sm:$0xf]
    %v84 = vld [vmem:[%s3] sm:$0xff]
    %vm85 = vcmask 162816
    %v87 = vsel %vm85, %v73, 0
    %v90 = vsel %vm85, %v74, 0
    %vm92 = vcmask 1043456
    %v94 = vsel %vm92, %v83, 0
    %96 = vmatprep.subr.mxu0 0.0
    %97 = vmatpush1.msra.mxu0 %v81
    %98 = vmatprep.subr.mxu0 0.0
    %99 = vmatpush1.msra.mxu0 %v82
    %100 = vmatprep.subr.mxu0 0.0
    %101 = vmatpush1.msra.mxu0 %v94
    %102 = vmatprep.subr.mxu0 0.0
    %103 = vmatpush1.msra.mxu0 0.0
    %104 = vmatprep.subr.mxu0 0.0
    %105 = vmatpush1.msra.mxu0 0.0
    %106 = vmatprep.subr.mxu0 0.0
    %107 = vmatpush1.msra.mxu0 0.0
    %108 = vmatprep.subr.mxu0 0.0
    %109 = vmatpush1.msra.mxu0 0.0
    %110 = vmatprep.subr.mxu0 0.0
    %111 = vmatpush1.msra.mxu0 0.0
    %112 = vmatprep.subr.mxu0 0.0
    %113 = vmatpush1.msra.mxu0 0.0
    %114 = vmatprep.subr.mxu0 0.0
    %115 = vmatpush1.msra.mxu0 0.0
    %116 = vmatprep.subr.mxu0 0.0
    %117 = vmatpush1.msra.mxu0 0.0
    %118 = vmatprep.subr.mxu0 0.0
    %119 = vmatpush1.msra.mxu0 0.0
    %120 = vmatprep.subr.mxu0 0.0
    %121 = vmatpush1.msra.mxu0 0.0
    %122 = vmatprep.subr.mxu0 0.0
    %123 = vmatpush1.msra.mxu0 0.0
    %124 = vmatprep.subr.mxu0 0.0
    %125 = vmatpush1.msra.mxu0 0.0
    %126 = vmatprep.subr.mxu0 0.0
    %127 = vmatpush1.msra.mxu0 0.0
    %128 = vmatprep.subr.mxu0 0.0
    %129 = vmatpush1.msra.mxu0 0.0
    %130 = vmatprep.subr.mxu0 0.0
    %131 = vmatpush1.msra.mxu0 0.0
    %132 = vmatprep.subr.mxu0 0.0
    %133 = vmatpush1.msra.mxu0 0.0
    %134 = vmatprep.subr.mxu0 0.0
    %135 = vmatpush1.msra.mxu0 0.0
    %136 = vmatprep.subr.mxu0 0.0
    %137 = vmatpush1.msra.mxu0 0.0
    %138 = vmatprep.subr.mxu0 0.0
    %139 = vmatpush1.msra.mxu0 0.0
    %140 = vmatprep.subr.mxu0 0.0
    %141 = vmatpush1.msra.mxu0 0.0
    %142 = vmatprep.subr.mxu0 0.0
    %143 = vmatpush1.msra.mxu0 0.0
    %144 = vmatprep.subr.mxu0 0.0
    %145 = vmatpush1.msra.mxu0 0.0
    %146 = vmatprep.subr.mxu0 0.0
    %147 = vmatpush1.msra.mxu0 0.0
    %148 = vmatprep.subr.mxu0 0.0
    %149 = vmatpush1.msra.mxu0 0.0
    %150 = vmatprep.subr.mxu0 0.0
    %151 = vmatpush1.msra.mxu0 0.0
    %152 = vmatprep.subr.mxu0 0.0
    %153 = vmatpush1.msra.mxu0 0.0
    %154 = vmatprep.subr.mxu0 0.0
    %155 = vmatpush1.msra.mxu0 0.0
    %156 = vmatprep.subr.mxu0 0.0
    %157 = vmatpush1.msra.mxu0 0.0
    %158 = vmatprep.subr.mxu0 0.0
    %159 = vmatpush1.msra.mxu0 0.0
    %160 = vmatprep.mubr.f32.mxu0 0.0
    %161 = vmatmul.mubr.f32.gmra.mrb[0].mxu0 %v87
    %v162 = vpop.f32.mrb[0].mxu0
    %v163 = vadd.f32 0.0, %v162
    %v164 = vpop.f32.mrb[0].mxu0
    %165 = vmatprep.mubr.f32.mxu0 0.0
    %166 = vmatmul.mubr.f32.gmra.mrb[0].mxu0 %v90
    %v167 = vpop.f32.mrb[0].mxu0
    %v168 = vadd.f32 0.0, %v167
    %v169 = vpop.f32.mrb[0].mxu0
    %170 = vdwg.mxu0
    %v172 = vsel %vm85, %v75, 0
    %v175 = vsel %vm85, %v76, 0
    %177 = vmatprep.subr.mxu0 0.0
    %178 = vmatpush1.msra.mxu0 %v81
    %179 = vmatprep.subr.mxu0 0.0
    %180 = vmatpush1.msra.mxu0 %v82
    %181 = vmatprep.subr.mxu0 0.0
    %182 = vmatpush1.msra.mxu0 %v94
    %183 = vmatprep.subr.mxu0 0.0
    %184 = vmatpush1.msra.mxu0 0.0
    %185 = vmatprep.subr.mxu0 0.0
    %186 = vmatpush1.msra.mxu0 0.0
    %187 = vmatprep.subr.mxu0 0.0
    %188 = vmatpush1.msra.mxu0 0.0
    %189 = vmatprep.subr.mxu0 0.0
    %190 = vmatpush1.msra.mxu0 0.0
    %191 = vmatprep.subr.mxu0 0.0
    %192 = vmatpush1.msra.mxu0 0.0
    %193 = vmatprep.subr.mxu0 0.0
    %194 = vmatpush1.msra.mxu0 0.0
    %195 = vmatprep.subr.mxu0 0.0
    %196 = vmatpush1.msra.mxu0 0.0
    %197 = vmatprep.subr.mxu0 0.0
    %198 = vmatpush1.msra.mxu0 0.0
    %199 = vmatprep.subr.mxu0 0.0
    %200 = vmatpush1.msra.mxu0 0.0
    %201 = vmatprep.subr.mxu0 0.0
    %202 = vmatpush1.msra.mxu0 0.0
    %203 = vmatprep.subr.mxu0 0.0
    %204 = vmatpush1.msra.mxu0 0.0
    %205 = vmatprep.subr.mxu0 0.0
    %206 = vmatpush1.msra.mxu0 0.0
    %207 = vmatprep.subr.mxu0 0.0
    %208 = vmatpush1.msra.mxu0 0.0
    %209 = vmatprep.subr.mxu0 0.0
    %210 = vmatpush1.msra.mxu0 0.0
    %211 = vmatprep.subr.mxu0 0.0
    %212 = vmatpush1.msra.mxu0 0.0
    %213 = vmatprep.subr.mxu0 0.0
    %214 = vmatpush1.msra.mxu0 0.0
    %215 = vmatprep.subr.mxu0 0.0
    %216 = vmatpush1.msra.mxu0 0.0
    %217 = vmatprep.subr.mxu0 0.0
    %218 = vmatpush1.msra.mxu0 0.0
    %219 = vmatprep.subr.mxu0 0.0
    %220 = vmatpush1.msra.mxu0 0.0
    %221 = vmatprep.subr.mxu0 0.0
    %222 = vmatpush1.msra.mxu0 0.0
    %223 = vmatprep.subr.mxu0 0.0
    %224 = vmatpush1.msra.mxu0 0.0
    %225 = vmatprep.subr.mxu0 0.0
    %226 = vmatpush1.msra.mxu0 0.0
    %227 = vmatprep.subr.mxu0 0.0
    %228 = vmatpush1.msra.mxu0 0.0
    %229 = vmatprep.subr.mxu0 0.0
    %230 = vmatpush1.msra.mxu0 0.0
    %231 = vmatprep.subr.mxu0 0.0
    %232 = vmatpush1.msra.mxu0 0.0
    %233 = vmatprep.subr.mxu0 0.0
    %234 = vmatpush1.msra.mxu0 0.0
    %235 = vmatprep.subr.mxu0 0.0
    %236 = vmatpush1.msra.mxu0 0.0
    %237 = vmatprep.subr.mxu0 0.0
    %238 = vmatpush1.msra.mxu0 0.0
    %239 = vmatprep.subr.mxu0 0.0
    %240 = vmatpush1.msra.mxu0 0.0
    %241 = vmatprep.mubr.f32.mxu0 0.0
    %242 = vmatmul.mubr.f32.gmra.mrb[0].mxu0 %v172
    %v243 = vpop.f32.mrb[0].mxu0
    %v244 = vadd.f32 0.0, %v243
    %v245 = vpop.f32.mrb[0].mxu0
    %246 = vmatprep.mubr.f32.mxu0 0.0
    %247 = vmatmul.mubr.f32.gmra.mrb[0].mxu0 %v175
    %v248 = vpop.f32.mrb[0].mxu0
    %v249 = vadd.f32 0.0, %v248
    %v250 = vpop.f32.mrb[0].mxu0
    %251 = vdwg.mxu0
    %v252 = vld [vmem:[%s4] sm:$0xf]
    %v253 = vld [vmem:[%s4 + $0x4] sm:$0xf]
    %v254 = vpack.c.bf16 %v168, %v163
    %v255 = vpack.c.bf16 %v249, %v244
    %v256 = vpack.c.bf16 %v78, %v77
    %v257 = vpack.c.bf16 %v80, %v79
    %vm258 = vcmask 64512
    %v260 = vsel %vm258, %v256, 0
    %v263 = vsel %vm258, %v257, 0
    %v266 = vsel %vm92, %v253, 0
    %268 = vmatprep.subr.bf16.mxu0 0
    %269 = vmatpush1.bf16.msra.mxu0 %v266
    %270 = vmatprep.subr.bf16.mxu0 0
    %271 = vmatpush1.bf16.msra.mxu0 0
    %272 = vmatprep.subr.bf16.mxu0 0
    %273 = vmatpush1.bf16.msra.mxu0 0
    %274 = vmatprep.subr.bf16.mxu0 0
    %275 = vmatpush1.bf16.msra.mxu0 0
    %276 = vmatprep.subr.bf16.mxu0 0
    %277 = vmatpush1.bf16.msra.mxu0 0
    %278 = vmatprep.subr.bf16.mxu0 0
    %279 = vmatpush1.bf16.msra.mxu0 0
    %280 = vmatprep.subr.bf16.mxu0 0
    %281 = vmatpush1.bf16.msra.mxu0 0
    %282 = vmatprep.subr.bf16.mxu0 0
    %283 = vmatpush1.bf16.msra.mxu0 0
    %284 = vmatprep.subr.bf16.mxu0 0
    %285 = vmatpush1.bf16.msra.mxu0 0
    %286 = vmatprep.subr.bf16.mxu0 0
    %287 = vmatpush1.bf16.msra.mxu0 0
    %288 = vmatprep.subr.bf16.mxu0 0
    %289 = vmatpush1.bf16.msra.mxu0 0
    %290 = vmatprep.subr.bf16.mxu0 0
    %291 = vmatpush1.bf16.msra.mxu0 0
    %292 = vmatprep.subr.bf16.mxu0 0
    %293 = vmatpush1.bf16.msra.mxu0 0
    %294 = vmatprep.subr.bf16.mxu0 0
    %295 = vmatpush1.bf16.msra.mxu0 0
    %296 = vmatprep.subr.bf16.mxu0 0
    %297 = vmatpush1.bf16.msra.mxu0 0
    %298 = vmatprep.subr.bf16.mxu0 0
    %299 = vmatpush1.bf16.msra.mxu0 0
    %300 = vmatprep.mubr.bf16.mxu0 0
    %301 = vmatmul.mubr.bf16.gmra.mrb[0].mxu0 %v260
    %v302 = vpop.f32.mrb[0].mxu0
    %v303 = vadd.f32 0.0, %v302
    %v304 = vpop.f32.mrb[0].mxu0
    %v305 = vpop.f32.mrb[0].mxu0
    %v306 = vadd.f32 0.0, %v305
    %v307 = vpop.f32.mrb[0].mxu0
    %308 = vmatprep.mubr.bf16.mxu0 0
    %309 = vmatmul.mubr.bf16.gmra.mrb[0].mxu0 %v263
    %v310 = vpop.f32.mrb[0].mxu0
    %v311 = vadd.f32 0.0, %v310
    %v312 = vpop.f32.mrb[0].mxu0
    %v313 = vpop.f32.mrb[0].mxu0
    %v314 = vadd.f32 0.0, %v313
    %v315 = vpop.f32.mrb[0].mxu0
    %316 = vdwg.mxu0
    %v318 = vsel %vm258, %v254, 0
    %v321 = vsel %vm258, %v255, 0
    %v324 = vsel %vm92, %v252, 0
    %326 = vmatprep.subr.bf16.mxu0 0
    %327 = vmatpush1.bf16.msra.mxu0 %v324
    %328 = vmatprep.subr.bf16.mxu0 0
    %329 = vmatpush1.bf16.msra.mxu0 0
    %330 = vmatprep.subr.bf16.mxu0 0
    %331 = vmatpush1.bf16.msra.mxu0 0
    %332 = vmatprep.subr.bf16.mxu0 0
    %333 = vmatpush1.bf16.msra.mxu0 0
    %334 = vmatprep.subr.bf16.mxu0 0
    %335 = vmatpush1.bf16.msra.mxu0 0
    %336 = vmatprep.subr.bf16.mxu0 0
    %337 = vmatpush1.bf16.msra.mxu0 0
    %338 = vmatprep.subr.bf16.mxu0 0
    %339 = vmatpush1.bf16.msra.mxu0 0
    %340 = vmatprep.subr.bf16.mxu0 0
    %341 = vmatpush1.bf16.msra.mxu0 0
    %342 = vmatprep.subr.bf16.mxu0 0
    %343 = vmatpush1.bf16.msra.mxu0 0
    %344 = vmatprep.subr.bf16.mxu0 0
    %345 = vmatpush1.bf16.msra.mxu0 0
    %346 = vmatprep.subr.bf16.mxu0 0
    %347 = vmatpush1.bf16.msra.mxu0 0
    %348 = vmatprep.subr.bf16.mxu0 0
    %349 = vmatpush1.bf16.msra.mxu0 0
    %350 = vmatprep.subr.bf16.mxu0 0
    %351 = vmatpush1.bf16.msra.mxu0 0
    %352 = vmatprep.subr.bf16.mxu0 0
    %353 = vmatpush1.bf16.msra.mxu0 0
    %354 = vmatprep.subr.bf16.mxu0 0
    %355 = vmatpush1.bf16.msra.mxu0 0
    %356 = vmatprep.subr.bf16.mxu0 0
    %357 = vmatpush1.bf16.msra.mxu0 0
    %358 = vmatprep.mubr.bf16.mxu0 0
    %359 = vmatmul.mubr.bf16.gmra.mrb[0].mxu0 %v318
    %v360 = vpop.f32.mrb[0].mxu0
    %v361 = vadd.f32 %v303, %v360
    %v362 = vpop.f32.mrb[0].mxu0
    %v363 = vpop.f32.mrb[0].mxu0
    %v364 = vadd.f32 %v306, %v363
    %v365 = vpop.f32.mrb[0].mxu0
    %366 = vmatprep.mubr.bf16.mxu0 0
    %367 = vmatmul.mubr.bf16.gmra.mrb[0].mxu0 %v321
    %v368 = vpop.f32.mrb[0].mxu0
    %v369 = vadd.f32 %v311, %v368
    %v370 = vpop.f32.mrb[0].mxu0
    %v371 = vpop.f32.mrb[0].mxu0
    %v372 = vadd.f32 %v314, %v371
    %v373 = vpop.f32.mrb[0].mxu0
    %374 = vdwg.mxu0
    %v375 = vld [vmem:[%s5] sm:$0xf]
    %v376 = vld [vmem:[%s5 + $0x4] sm:$0xf]
    %v377 = vld [vmem:[%s6] sm:$0x1]
    %v378 = vpack.c.bf16 %v364, %v361
    %v380 = vlaneseq
    %v381 = vshrl.u32 %v380, 7
    %v382 = vsub.s32 0, %v381
    %v383 = vrot.slane %v377, %v382
    %v387 = vunpack.c.l.b16 %v375
    %v388 = vunpack.c.l.b16 %v376
    %v389 = vpack.c.b16 %v388, %v387
    %vm390 = vcmask 130048
    %v392 = vsel %vm390, %v389, 0
    %394 = vmatprep.subr.bf16.mxu0 0
    %395 = vmatpush1.bf16.msra.mxu0 %v378
    %396 = vmatprep.subr.bf16.mxu0 0
    %397 = vmatpush1.bf16.msra.mxu0 0
    %398 = vmatprep.subr.bf16.mxu0 0
    %399 = vmatpush1.bf16.msra.mxu0 0
    %400 = vmatprep.subr.bf16.mxu0 0
    %401 = vmatpush1.bf16.msra.mxu0 0
    %402 = vmatprep.subr.bf16.mxu0 0
    %403 = vmatpush1.bf16.msra.mxu0 0
    %404 = vmatprep.subr.bf16.mxu0 0
    %405 = vmatpush1.bf16.msra.mxu0 0
    %406 = vmatprep.subr.bf16.mxu0 0
    %407 = vmatpush1.bf16.msra.mxu0 0
    %408 = vmatprep.subr.bf16.mxu0 0
    %409 = vmatpush1.bf16.msra.mxu0 0
    %410 = vmatprep.subr.bf16.mxu0 0
    %411 = vmatpush1.bf16.msra.mxu0 0
    %412 = vmatprep.subr.bf16.mxu0 0
    %413 = vmatpush1.bf16.msra.mxu0 0
    %414 = vmatprep.subr.bf16.mxu0 0
    %415 = vmatpush1.bf16.msra.mxu0 0
    %416 = vmatprep.subr.bf16.mxu0 0
    %417 = vmatpush1.bf16.msra.mxu0 0
    %418 = vmatprep.subr.bf16.mxu0 0
    %419 = vmatpush1.bf16.msra.mxu0 0
    %420 = vmatprep.subr.bf16.mxu0 0
    %421 = vmatpush1.bf16.msra.mxu0 0
    %422 = vmatprep.subr.bf16.mxu0 0
    %423 = vmatpush1.bf16.msra.mxu0 0
    %424 = vmatprep.subr.bf16.mxu0 0
    %425 = vmatpush1.bf16.msra.mxu0 0
    %426 = vmatprep.mubr.bf16.mxu0 0
    %427 = vmatmul.mubr.bf16.gmra.mrb[0].mxu0 %v392
    %v428 = vpop.f32.mrb[0].mxu0
    %v429 = vadd.f32 %v383, %v428
    %v430 = vpop.f32.mrb[0].mxu0
    %v431 = vpop.f32.mrb[0].mxu0
    %v432 = vadd.f32 %v383, %v431
    %v433 = vpop.f32.mrb[0].mxu0
    %434 = vdwg.mxu0
    %v435 = vpack.c.bf16 %v372, %v369
    %436 = vmatprep.subr.bf16.mxu0 0
    %437 = vmatpush1.bf16.msra.mxu0 %v435
    %438 = vmatprep.subr.bf16.mxu0 0
    %439 = vmatpush1.bf16.msra.mxu0 0
    %440 = vmatprep.subr.bf16.mxu0 0
    %441 = vmatpush1.bf16.msra.mxu0 0
    %442 = vmatprep.subr.bf16.mxu0 0
    %443 = vmatpush1.bf16.msra.mxu0 0
    %444 = vmatprep.subr.bf16.mxu0 0
    %445 = vmatpush1.bf16.msra.mxu0 0
    %446 = vmatprep.subr.bf16.mxu0 0
    %447 = vmatpush1.bf16.msra.mxu0 0
    %448 = vmatprep.subr.bf16.mxu0 0
    %449 = vmatpush1.bf16.msra.mxu0 0
    %450 = vmatprep.subr.bf16.mxu0 0
    %451 = vmatpush1.bf16.msra.mxu0 0
    %452 = vmatprep.subr.bf16.mxu0 0
    %453 = vmatpush1.bf16.msra.mxu0 0
    %454 = vmatprep.subr.bf16.mxu0 0
    %455 = vmatpush1.bf16.msra.mxu0 0
    %456 = vmatprep.subr.bf16.mxu0 0
    %457 = vmatpush1.bf16.msra.mxu0 0
    %458 = vmatprep.subr.bf16.mxu0 0
    %459 = vmatpush1.bf16.msra.mxu0 0
    %460 = vmatprep.subr.bf16.mxu0 0
    %461 = vmatpush1.bf16.msra.mxu0 0
    %462 = vmatprep.subr.bf16.mxu0 0
    %463 = vmatpush1.bf16.msra.mxu0 0
    %464 = vmatprep.subr.bf16.mxu0 0
    %465 = vmatpush1.bf16.msra.mxu0 0
    %466 = vmatprep.subr.bf16.mxu0 0
    %467 = vmatpush1.bf16.msra.mxu0 0
    %468 = vmatprep.mubr.bf16.mxu0 0
    %469 = vmatmul.mubr.bf16.gmra.mrb[0].mxu0 %v392
    %v470 = vpop.f32.mrb[0].mxu0
    %v471 = vadd.f32 %v383, %v470
    %v472 = vpop.f32.mrb[0].mxu0
    %v473 = vpop.f32.mrb[0].mxu0
    %v474 = vadd.f32 %v383, %v473
    %v475 = vpop.f32.mrb[0].mxu0
    %476 = vdwg.mxu0
    %v477 = vld [vmem:[%s7] sm:$0xff]
    %v478 = vld [vmem:[%s7 + $0x8] sm:$0xff]
    %v479 = vld [vmem:[%s8] sm:$0xff]
    %v480 = vld [vmem:[%s8 + $0x8] sm:$0xff]
    %v481 = vmul.f32 %v429, %v477
    %v482 = vmul.f32 %v432, %v478
    %v483 = vadd.f32 %v481, %v479
    %v484 = vadd.f32 %v482, %v480
    %v485 = vtanh.pop %v483
    %v486 = vtanh.pop %v484
    %v487 = vmul.f32 %v471, %v477
    %v488 = vmul.f32 %v474, %v478
    %v489 = vadd.f32 %v487, %v479
    %v490 = vadd.f32 %v488, %v480
    %v491 = vtanh.pop %v489
    %v492 = vtanh.pop %v490
    %v493 = vpack.c.bf16 %v486, %v485
    %v494 = vpack.c.bf16 %v492, %v491
    %v495 = vld [vmem:[%s9] sm:$0xf]
    %v496 = vld [vmem:[%s9 + $0x4] sm:$0xf]
    %v497 = vld [vmem:[%s9 + $0x8] sm:$0xf]
    %v498 = vld [vmem:[%s9 + $0xc] sm:$0xf]
    %v503 = vunpack.c.l.b16 %v495
    %v504 = vunpack.c.l.b16 %v496
    %v505 = vunpack.c.l.b16 %v497
    %v506 = vunpack.c.l.b16 %v498
    %v507 = vpack.c.b16 %v504, %v503
    %v508 = vpack.c.b16 %v506, %v505
    %vm511 = vcmask 261120
    %v513 = vsel %vm511, %v493, 0
    %v516 = vsel %vm511, %v494, 0
    %518 = vmatprep.subr.bf16.mxu0 0
    %519 = vmatpush1.bf16.msra.mxu0 %v507
    %520 = vmatprep.subr.bf16.mxu0 0
    %521 = vmatpush1.bf16.msra.mxu0 %v508
    %522 = vmatprep.subr.bf16.mxu0 0
    %523 = vmatpush1.bf16.msra.mxu0 0
    %524 = vmatprep.subr.bf16.mxu0 0
    %525 = vmatpush1.bf16.msra.mxu0 0
    %526 = vmatprep.subr.bf16.mxu0 0
    %527 = vmatpush1.bf16.msra.mxu0 0
    %528 = vmatprep.subr.bf16.mxu0 0
    %529 = vmatpush1.bf16.msra.mxu0 0
    %530 = vmatprep.subr.bf16.mxu0 0
    %531 = vmatpush1.bf16.msra.mxu0 0
    %532 = vmatprep.subr.bf16.mxu0 0
    %533 = vmatpush1.bf16.msra.mxu0 0
    %534 = vmatprep.subr.bf16.mxu0 0
    %535 = vmatpush1.bf16.msra.mxu0 0
    %536 = vmatprep.subr.bf16.mxu0 0
    %537 = vmatpush1.bf16.msra.mxu0 0
    %538 = vmatprep.subr.bf16.mxu0 0
    %539 = vmatpush1.bf16.msra.mxu0 0
    %540 = vmatprep.subr.bf16.mxu0 0
    %541 = vmatpush1.bf16.msra.mxu0 0
    %542 = vmatprep.subr.bf16.mxu0 0
    %543 = vmatpush1.bf16.msra.mxu0 0
    %544 = vmatprep.subr.bf16.mxu0 0
    %545 = vmatpush1.bf16.msra.mxu0 0
    %546 = vmatprep.subr.bf16.mxu0 0
    %547 = vmatpush1.bf16.msra.mxu0 0
    %548 = vmatprep.subr.bf16.mxu0 0
    %549 = vmatpush1.bf16.msra.mxu0 0
    %550 = vmatprep.mubr.bf16.mxu0 0
    %551 = vmatmul.mubr.bf16.gmra.mrb[0].mxu0 %v513
    %v552 = vpop.f32.mrb[0].mxu0
    %v553 = vadd.f32 0.0, %v552
    %v554 = vpop.f32.mrb[0].mxu0
    %v555 = vpop.f32.mrb[0].mxu0
    %v556 = vadd.f32 0.0, %v555
    %v557 = vpop.f32.mrb[0].mxu0
    %558 = vmatprep.mubr.bf16.mxu0 0
    %559 = vmatmul.mubr.bf16.gmra.mrb[0].mxu0 %v516
    %v560 = vpop.f32.mrb[0].mxu0
    %v561 = vadd.f32 0.0, %v560
    %v562 = vpop.f32.mrb[0].mxu0
    %v563 = vpop.f32.mrb[0].mxu0
    %v564 = vadd.f32 0.0, %v563
    %v565 = vpop.f32.mrb[0].mxu0
    %566 = vdwg.mxu0
    %v567 = vld [vmem:[%s10] sm:$0xf]
    %v568 = vld [vmem:[%s10 + $0x4] sm:$0xf]
    %v569 = vld [vmem:[%s11] sm:$0x1]
    %v570 = vpack.c.bf16 %v556, %v553
    %v572 = vlaneseq
    %v573 = vshrl.u32 %v572, 7
    %v574 = vsub.s32 0, %v573
    %v575 = vrot.slane %v569, %v574
    %v579 = vunpack.c.l.b16 %v567
    %v580 = vunpack.c.l.b16 %v568
    %v581 = vpack.c.b16 %v580, %v579
    %v583 = vsel %vm390, %v581, 0
    %585 = vmatprep.subr.bf16.mxu0 0
    %586 = vmatpush1.bf16.msra.mxu0 %v570
    %587 = vmatprep.subr.bf16.mxu0 0
    %588 = vmatpush1.bf16.msra.mxu0 0
    %589 = vmatprep.subr.bf16.mxu0 0
    %590 = vmatpush1.bf16.msra.mxu0 0
    %591 = vmatprep.subr.bf16.mxu0 0
    %592 = vmatpush1.bf16.msra.mxu0 0
    %593 = vmatprep.subr.bf16.mxu0 0
    %594 = vmatpush1.bf16.msra.mxu0 0
    %595 = vmatprep.subr.bf16.mxu0 0
    %596 = vmatpush1.bf16.msra.mxu0 0
    %597 = vmatprep.subr.bf16.mxu0 0
    %598 = vmatpush1.bf16.msra.mxu0 0
    %599 = vmatprep.subr.bf16.mxu0 0
    %600 = vmatpush1.bf16.msra.mxu0 0
    %601 = vmatprep.subr.bf16.mxu0 0
    %602 = vmatpush1.bf16.msra.mxu0 0
    %603 = vmatprep.subr.bf16.mxu0 0
    %604 = vmatpush1.bf16.msra.mxu0 0
    %605 = vmatprep.subr.bf16.mxu0 0
    %606 = vmatpush1.bf16.msra.mxu0 0
    %607 = vmatprep.subr.bf16.mxu0 0
    %608 = vmatpush1.bf16.msra.mxu0 0
    %609 = vmatprep.subr.bf16.mxu0 0
    %610 = vmatpush1.bf16.msra.mxu0 0
    %611 = vmatprep.subr.bf16.mxu0 0
    %612 = vmatpush1.bf16.msra.mxu0 0
    %613 = vmatprep.subr.bf16.mxu0 0
    %614 = vmatpush1.bf16.msra.mxu0 0
    %615 = vmatprep.subr.bf16.mxu0 0
    %616 = vmatpush1.bf16.msra.mxu0 0
    %617 = vmatprep.mubr.bf16.mxu0 0
    %618 = vmatmul.mubr.bf16.gmra.mrb[0].mxu0 %v583
    %v619 = vpop.f32.mrb[0].mxu0
    %v620 = vadd.f32 %v575, %v619
    %v621 = vpop.f32.mrb[0].mxu0
    %v622 = vpop.f32.mrb[0].mxu0
    %v623 = vadd.f32 %v575, %v622
    %v624 = vpop.f32.mrb[0].mxu0
    %625 = vdwg.mxu0
    %v626 = vpack.c.bf16 %v564, %v561
    %627 = vmatprep.subr.bf16.mxu0 0
    %628 = vmatpush1.bf16.msra.mxu0 %v626
    %629 = vmatprep.subr.bf16.mxu0 0
    %630 = vmatpush1.bf16.msra.mxu0 0
    %631 = vmatprep.subr.bf16.mxu0 0
    %632 = vmatpush1.bf16.msra.mxu0 0
    %633 = vmatprep.subr.bf16.mxu0 0
    %634 = vmatpush1.bf16.msra.mxu0 0
    %635 = vmatprep.subr.bf16.mxu0 0
    %636 = vmatpush1.bf16.msra.mxu0 0
    %637 = vmatprep.subr.bf16.mxu0 0
    %638 = vmatpush1.bf16.msra.mxu0 0
    %639 = vmatprep.subr.bf16.mxu0 0
    %640 = vmatpush1.bf16.msra.mxu0 0
    %641 = vmatprep.subr.bf16.mxu0 0
    %642 = vmatpush1.bf16.msra.mxu0 0
    %643 = vmatprep.subr.bf16.mxu0 0
    %644 = vmatpush1.bf16.msra.mxu0 0
    %645 = vmatprep.subr.bf16.mxu0 0
    %646 = vmatpush1.bf16.msra.mxu0 0
    %647 = vmatprep.subr.bf16.mxu0 0
    %648 = vmatpush1.bf16.msra.mxu0 0
    %649 = vmatprep.subr.bf16.mxu0 0
    %650 = vmatpush1.bf16.msra.mxu0 0
    %651 = vmatprep.subr.bf16.mxu0 0
    %652 = vmatpush1.bf16.msra.mxu0 0
    %653 = vmatprep.subr.bf16.mxu0 0
    %654 = vmatpush1.bf16.msra.mxu0 0
    %655 = vmatprep.subr.bf16.mxu0 0
    %656 = vmatpush1.bf16.msra.mxu0 0
    %657 = vmatprep.subr.bf16.mxu0 0
    %658 = vmatpush1.bf16.msra.mxu0 0
    %659 = vmatprep.mubr.bf16.mxu0 0
    %660 = vmatmul.mubr.bf16.gmra.mrb[0].mxu0 %v583
    %v661 = vpop.f32.mrb[0].mxu0
    %v662 = vadd.f32 %v575, %v661
    %v663 = vpop.f32.mrb[0].mxu0
    %v664 = vpop.f32.mrb[0].mxu0
    %v665 = vadd.f32 %v575, %v664
    %v666 = vpop.f32.mrb[0].mxu0
    %667 = vdwg.mxu0
    %v668 = vld [vmem:[%s12] sm:$0xff]
    %v669 = vld [vmem:[%s12 + $0x8] sm:$0xff]
    %v670 = vld [vmem:[%s13] sm:$0xff]
    %v671 = vld [vmem:[%s13 + $0x8] sm:$0xff]
    %v672 = vmul.f32 %v620, %v668
    %v673 = vmul.f32 %v623, %v669
    %v674 = vadd.f32 %v672, %v670
    %v675 = vadd.f32 %v673, %v671
    %v676 = vtanh.pop %v674
    %v677 = vtanh.pop %v675
    %v678 = vmul.f32 %v662, %v668
    %v679 = vmul.f32 %v665, %v669
    %v680 = vadd.f32 %v678, %v670
    %v681 = vadd.f32 %v679, %v671
    %v682 = vtanh.pop %v680
    %v683 = vtanh.pop %v681
    %v684 = vpack.c.bf16 %v677, %v676
    %v685 = vpack.c.bf16 %v683, %v682
    %v686 = vld [vmem:[%s14] sm:$0xf]
    %v687 = vld [vmem:[%s14 + $0x4] sm:$0xf]
    %v688 = vld [vmem:[%s14 + $0x8] sm:$0xf]
    %v689 = vld [vmem:[%s14 + $0xc] sm:$0xf]
    %v694 = vunpack.c.l.b16 %v686
    %v695 = vunpack.c.l.b16 %v687
    %v696 = vunpack.c.l.b16 %v688
    %v697 = vunpack.c.l.b16 %v689
    %v698 = vpack.c.b16 %v695, %v694
    %v699 = vpack.c.b16 %v697, %v696
    %v703 = vsel %vm511, %v684, 0
    %v706 = vsel %vm511, %v685, 0
    %708 = vmatprep.subr.bf16.mxu0 0
    %709 = vmatpush1.bf16.msra.mxu0 %v698
    %710 = vmatprep.subr.bf16.mxu0 0
    %711 = vmatpush1.bf16.msra.mxu0 %v699
    %712 = vmatprep.subr.bf16.mxu0 0
    %713 = vmatpush1.bf16.msra.mxu0 0
    %714 = vmatprep.subr.bf16.mxu0 0
    %715 = vmatpush1.bf16.msra.mxu0 0
    %716 = vmatprep.subr.bf16.mxu0 0
    %717 = vmatpush1.bf16.msra.mxu0 0
    %718 = vmatprep.subr.bf16.mxu0 0
    %719 = vmatpush1.bf16.msra.mxu0 0
    %720 = vmatprep.subr.bf16.mxu0 0
    %721 = vmatpush1.bf16.msra.mxu0 0
    %722 = vmatprep.subr.bf16.mxu0 0
    %723 = vmatpush1.bf16.msra.mxu0 0
    %724 = vmatprep.subr.bf16.mxu0 0
    %725 = vmatpush1.bf16.msra.mxu0 0
    %726 = vmatprep.subr.bf16.mxu0 0
    %727 = vmatpush1.bf16.msra.mxu0 0
    %728 = vmatprep.subr.bf16.mxu0 0
    %729 = vmatpush1.bf16.msra.mxu0 0
    %730 = vmatprep.subr.bf16.mxu0 0
    %731 = vmatpush1.bf16.msra.mxu0 0
    %732 = vmatprep.subr.bf16.mxu0 0
    %733 = vmatpush1.bf16.msra.mxu0 0
    %734 = vmatprep.subr.bf16.mxu0 0
    %735 = vmatpush1.bf16.msra.mxu0 0
    %736 = vmatprep.subr.bf16.mxu0 0
    %737 = vmatpush1.bf16.msra.mxu0 0
    %738 = vmatprep.subr.bf16.mxu0 0
    %739 = vmatpush1.bf16.msra.mxu0 0
    %740 = vmatprep.mubr.bf16.mxu0 0
    %741 = vmatmul.mubr.bf16.gmra.mrb[0].mxu0 %v703
    %v742 = vpop.f32.mrb[0].mxu0
    %v743 = vadd.f32 0.0, %v742
    %v744 = vpop.f32.mrb[0].mxu0
    %v745 = vpop.f32.mrb[0].mxu0
    %v746 = vadd.f32 0.0, %v745
    %v747 = vpop.f32.mrb[0].mxu0
    %748 = vmatprep.mubr.bf16.mxu0 0
    %749 = vmatmul.mubr.bf16.gmra.mrb[0].mxu0 %v706
    %v750 = vpop.f32.mrb[0].mxu0
    %v751 = vadd.f32 0.0, %v750
    %v752 = vpop.f32.mrb[0].mxu0
    %v753 = vpop.f32.mrb[0].mxu0
    %v754 = vadd.f32 0.0, %v753
    %v755 = vpop.f32.mrb[0].mxu0
    %756 = vdwg.mxu0
    %v757 = vld [vmem:[%s15] sm:$0xf]
    %v758 = vld [vmem:[%s15 + $0x4] sm:$0xf]
    %v759 = vld [vmem:[%s16] sm:$0x1]
    %v760 = vpack.c.bf16 %v746, %v743
    %v762 = vlaneseq
    %v763 = vshrl.u32 %v762, 7
    %v764 = vsub.s32 0, %v763
    %v765 = vrot.slane %v759, %v764
    %v769 = vunpack.c.l.b16 %v757
    %v770 = vunpack.c.l.b16 %v758
    %v771 = vpack.c.b16 %v770, %v769
    %v773 = vsel %vm390, %v771, 0
    %775 = vmatprep.subr.bf16.mxu0 0
    %776 = vmatpush1.bf16.msra.mxu0 %v760
    %777 = vmatprep.subr.bf16.mxu0 0
    %778 = vmatpush1.bf16.msra.mxu0 0
    %779 = vmatprep.subr.bf16.mxu0 0
    %780 = vmatpush1.bf16.msra.mxu0 0
    %781 = vmatprep.subr.bf16.mxu0 0
    %782 = vmatpush1.bf16.msra.mxu0 0
    %783 = vmatprep.subr.bf16.mxu0 0
    %784 = vmatpush1.bf16.msra.mxu0 0
    %785 = vmatprep.subr.bf16.mxu0 0
    %786 = vmatpush1.bf16.msra.mxu0 0
    %787 = vmatprep.subr.bf16.mxu0 0
    %788 = vmatpush1.bf16.msra.mxu0 0
    %789 = vmatprep.subr.bf16.mxu0 0
    %790 = vmatpush1.bf16.msra.mxu0 0
    %791 = vmatprep.subr.bf16.mxu0 0
    %792 = vmatpush1.bf16.msra.mxu0 0
    %793 = vmatprep.subr.bf16.mxu0 0
    %794 = vmatpush1.bf16.msra.mxu0 0
    %795 = vmatprep.subr.bf16.mxu0 0
    %796 = vmatpush1.bf16.msra.mxu0 0
    %797 = vmatprep.subr.bf16.mxu0 0
    %798 = vmatpush1.bf16.msra.mxu0 0
    %799 = vmatprep.subr.bf16.mxu0 0
    %800 = vmatpush1.bf16.msra.mxu0 0
    %801 = vmatprep.subr.bf16.mxu0 0
    %802 = vmatpush1.bf16.msra.mxu0 0
    %803 = vmatprep.subr.bf16.mxu0 0
    %804 = vmatpush1.bf16.msra.mxu0 0
    %805 = vmatprep.subr.bf16.mxu0 0
    %806 = vmatpush1.bf16.msra.mxu0 0
    %807 = vmatprep.mubr.bf16.mxu0 0
    %808 = vmatmul.mubr.bf16.gmra.mrb[0].mxu0 %v773
    %v809 = vpop.f32.mrb[0].mxu0
    %v810 = vadd.f32 %v765, %v809
    %v811 = vpop.f32.mrb[0].mxu0
    %v812 = vpop.f32.mrb[0].mxu0
    %v813 = vadd.f32 %v765, %v812
    %v814 = vpop.f32.mrb[0].mxu0
    %815 = vdwg.mxu0
    %v816 = vpack.c.bf16 %v754, %v751
    %817 = vmatprep.subr.bf16.mxu0 0
    %818 = vmatpush1.bf16.msra.mxu0 %v816
    %819 = vmatprep.subr.bf16.mxu0 0
    %820 = vmatpush1.bf16.msra.mxu0 0
    %821 = vmatprep.subr.bf16.mxu0 0
    %822 = vmatpush1.bf16.msra.mxu0 0
    %823 = vmatprep.subr.bf16.mxu0 0
    %824 = vmatpush1.bf16.msra.mxu0 0
    %825 = vmatprep.subr.bf16.mxu0 0
    %826 = vmatpush1.bf16.msra.mxu0 0
    %827 = vmatprep.subr.bf16.mxu0 0
    %828 = vmatpush1.bf16.msra.mxu0 0
    %829 = vmatprep.subr.bf16.mxu0 0
    %830 = vmatpush1.bf16.msra.mxu0 0
    %831 = vmatprep.subr.bf16.mxu0 0
    %832 = vmatpush1.bf16.msra.mxu0 0
    %833 = vmatprep.subr.bf16.mxu0 0
    %834 = vmatpush1.bf16.msra.mxu0 0
    %835 = vmatprep.subr.bf16.mxu0 0
    %836 = vmatpush1.bf16.msra.mxu0 0
    %837 = vmatprep.subr.bf16.mxu0 0
    %838 = vmatpush1.bf16.msra.mxu0 0
    %839 = vmatprep.subr.bf16.mxu0 0
    %840 = vmatpush1.bf16.msra.mxu0 0
    %841 = vmatprep.subr.bf16.mxu0 0
    %842 = vmatpush1.bf16.msra.mxu0 0
    %843 = vmatprep.subr.bf16.mxu0 0
    %844 = vmatpush1.bf16.msra.mxu0 0
    %845 = vmatprep.subr.bf16.mxu0 0
    %846 = vmatpush1.bf16.msra.mxu0 0
    %847 = vmatprep.subr.bf16.mxu0 0
    %848 = vmatpush1.bf16.msra.mxu0 0
    %849 = vmatprep.mubr.bf16.mxu0 0
    %850 = vmatmul.mubr.bf16.gmra.mrb[0].mxu0 %v773
    %v851 = vpop.f32.mrb[0].mxu0
    %v852 = vadd.f32 %v765, %v851
    %v853 = vpop.f32.mrb[0].mxu0
    %v854 = vpop.f32.mrb[0].mxu0
    %v855 = vadd.f32 %v765, %v854
    %v856 = vpop.f32.mrb[0].mxu0
    %857 = vdwg.mxu0
    %v858 = vld [vmem:[%s17] sm:$0xff]
    %v859 = vld [vmem:[%s17 + $0x8] sm:$0xff]
    %v860 = vld [vmem:[%s18] sm:$0xff]
    %v861 = vld [vmem:[%s18 + $0x8] sm:$0xff]
    %v862 = vmul.f32 %v810, %v858
    %v863 = vmul.f32 %v813, %v859
    %v864 = vadd.f32 %v862, %v860
    %v865 = vadd.f32 %v863, %v861
    %v866 = vtanh.pop %v864
    %v867 = vtanh.pop %v865
    %v868 = vmul.f32 %v852, %v858
    %v869 = vmul.f32 %v855, %v859
    %v870 = vadd.f32 %v868, %v860
    %v871 = vadd.f32 %v869, %v861
    %v872 = vtanh.pop %v870
    %v873 = vtanh.pop %v871
    %v874 = vadd.f32 %v866, %v485
    %v875 = vadd.f32 %v867, %v486
    %v876 = vadd.f32 %v872, %v491
    %v877 = vadd.f32 %v873, %v492
    %v878 = vpack.c.bf16 %v875, %v874
    %v879 = vpack.c.bf16 %v877, %v876
    %v880 = vld [vmem:[%s19] sm:$0xf]
    %v881 = vld [vmem:[%s19 + $0x4] sm:$0xf]
    %v882 = vld [vmem:[%s19 + $0x8] sm:$0xf]
    %v883 = vld [vmem:[%s19 + $0xc] sm:$0xf]
    %v888 = vunpack.c.l.b16 %v880
    %v889 = vunpack.c.l.b16 %v881
    %v890 = vunpack.c.l.b16 %v882
    %v891 = vunpack.c.l.b16 %v883
    %v892 = vpack.c.b16 %v889, %v888
    %v893 = vpack.c.b16 %v891, %v890
    %v897 = vsel %vm511, %v878, 0
    %v900 = vsel %vm511, %v879, 0
    %902 = vmatprep.subr.bf16.mxu0 0
    %903 = vmatpush1.bf16.msra.mxu0 %v892
    %904 = vmatprep.subr.bf16.mxu0 0
    %905 = vmatpush1.bf16.msra.mxu0 %v893
    %906 = vmatprep.subr.bf16.mxu0 0
    %907 = vmatpush1.bf16.msra.mxu0 0
    %908 = vmatprep.subr.bf16.mxu0 0
    %909 = vmatpush1.bf16.msra.mxu0 0
    %910 = vmatprep.subr.bf16.mxu0 0
    %911 = vmatpush1.bf16.msra.mxu0 0
    %912 = vmatprep.subr.bf16.mxu0 0
    %913 = vmatpush1.bf16.msra.mxu0 0
    %914 = vmatprep.subr.bf16.mxu0 0
    %915 = vmatpush1.bf16.msra.mxu0 0
    %916 = vmatprep.subr.bf16.mxu0 0
    %917 = vmatpush1.bf16.msra.mxu0 0
    %918 = vmatprep.subr.bf16.mxu0 0
    %919 = vmatpush1.bf16.msra.mxu0 0
    %920 = vmatprep.subr.bf16.mxu0 0
    %921 = vmatpush1.bf16.msra.mxu0 0
    %922 = vmatprep.subr.bf16.mxu0 0
    %923 = vmatpush1.bf16.msra.mxu0 0
    %924 = vmatprep.subr.bf16.mxu0 0
    %925 = vmatpush1.bf16.msra.mxu0 0
    %926 = vmatprep.subr.bf16.mxu0 0
    %927 = vmatpush1.bf16.msra.mxu0 0
    %928 = vmatprep.subr.bf16.mxu0 0
    %929 = vmatpush1.bf16.msra.mxu0 0
    %930 = vmatprep.subr.bf16.mxu0 0
    %931 = vmatpush1.bf16.msra.mxu0 0
    %932 = vmatprep.subr.bf16.mxu0 0
    %933 = vmatpush1.bf16.msra.mxu0 0
    %934 = vmatprep.mubr.bf16.mxu0 0
    %935 = vmatmul.mubr.bf16.gmra.mrb[0].mxu0 %v897
    %v936 = vpop.f32.mrb[0].mxu0
    %v937 = vadd.f32 0.0, %v936
    %v938 = vpop.f32.mrb[0].mxu0
    %v939 = vpop.f32.mrb[0].mxu0
    %v940 = vadd.f32 0.0, %v939
    %v941 = vpop.f32.mrb[0].mxu0
    %942 = vmatprep.mubr.bf16.mxu0 0
    %943 = vmatmul.mubr.bf16.gmra.mrb[0].mxu0 %v900
    %v944 = vpop.f32.mrb[0].mxu0
    %v945 = vadd.f32 0.0, %v944
    %v946 = vpop.f32.mrb[0].mxu0
    %v947 = vpop.f32.mrb[0].mxu0
    %v948 = vadd.f32 0.0, %v947
    %v949 = vpop.f32.mrb[0].mxu0
    %950 = vdwg.mxu0
    %v951 = vld [vmem:[%s20] sm:$0xf]
    %v952 = vld [vmem:[%s20 + $0x4] sm:$0xf]
    %v953 = vld [vmem:[%s21] sm:$0x1]
    %v954 = vpack.c.bf16 %v940, %v937
    %v956 = vlaneseq
    %v957 = vshrl.u32 %v956, 7
    %v958 = vsub.s32 0, %v957
    %v959 = vrot.slane %v953, %v958
    %v963 = vunpack.c.l.b16 %v951
    %v964 = vunpack.c.l.b16 %v952
    %v965 = vpack.c.b16 %v964, %v963
    %v967 = vsel %vm390, %v965, 0
    %969 = vmatprep.subr.bf16.mxu0 0
    %970 = vmatpush1.bf16.msra.mxu0 %v954
    %971 = vmatprep.subr.bf16.mxu0 0
    %972 = vmatpush1.bf16.msra.mxu0 0
    %973 = vmatprep.subr.bf16.mxu0 0
    %974 = vmatpush1.bf16.msra.mxu0 0
    %975 = vmatprep.subr.bf16.mxu0 0
    %976 = vmatpush1.bf16.msra.mxu0 0
    %977 = vmatprep.subr.bf16.mxu0 0
    %978 = vmatpush1.bf16.msra.mxu0 0
    %979 = vmatprep.subr.bf16.mxu0 0
    %980 = vmatpush1.bf16.msra.mxu0 0
    %981 = vmatprep.subr.bf16.mxu0 0
    %982 = vmatpush1.bf16.msra.mxu0 0
    %983 = vmatprep.subr.bf16.mxu0 0
    %984 = vmatpush1.bf16.msra.mxu0 0
    %985 = vmatprep.subr.bf16.mxu0 0
    %986 = vmatpush1.bf16.msra.mxu0 0
    %987 = vmatprep.subr.bf16.mxu0 0
    %988 = vmatpush1.bf16.msra.mxu0 0
    %989 = vmatprep.subr.bf16.mxu0 0
    %990 = vmatpush1.bf16.msra.mxu0 0
    %991 = vmatprep.subr.bf16.mxu0 0
    %992 = vmatpush1.bf16.msra.mxu0 0
    %993 = vmatprep.subr.bf16.mxu0 0
    %994 = vmatpush1.bf16.msra.mxu0 0
    %995 = vmatprep.subr.bf16.mxu0 0
    %996 = vmatpush1.bf16.msra.mxu0 0
    %997 = vmatprep.subr.bf16.mxu0 0
    %998 = vmatpush1.bf16.msra.mxu0 0
    %999 = vmatprep.subr.bf16.mxu0 0
    %1000 = vmatpush1.bf16.msra.mxu0 0
    %1001 = vmatprep.mubr.bf16.mxu0 0
    %1002 = vmatmul.mubr.bf16.gmra.mrb[0].mxu0 %v967
    %v1003 = vpop.f32.mrb[0].mxu0
    %v1004 = vadd.f32 %v959, %v1003
    %v1005 = vpop.f32.mrb[0].mxu0
    %v1006 = vpop.f32.mrb[0].mxu0
    %v1007 = vadd.f32 %v959, %v1006
    %v1008 = vpop.f32.mrb[0].mxu0
    %1009 = vdwg.mxu0
    %v1010 = vpack.c.bf16 %v948, %v945
    %1011 = vmatprep.subr.bf16.mxu0 0
    %1012 = vmatpush1.bf16.msra.mxu0 %v1010
    %1013 = vmatprep.subr.bf16.mxu0 0
    %1014 = vmatpush1.bf16.msra.mxu0 0
    %1015 = vmatprep.subr.bf16.mxu0 0
    %1016 = vmatpush1.bf16.msra.mxu0 0
    %1017 = vmatprep.subr.bf16.mxu0 0
    %1018 = vmatpush1.bf16.msra.mxu0 0
    %1019 = vmatprep.subr.bf16.mxu0 0
    %1020 = vmatpush1.bf16.msra.mxu0 0
    %1021 = vmatprep.subr.bf16.mxu0 0
    %1022 = vmatpush1.bf16.msra.mxu0 0
    %1023 = vmatprep.subr.bf16.mxu0 0
    %1024 = vmatpush1.bf16.msra.mxu0 0
    %1025 = vmatprep.subr.bf16.mxu0 0
    %1026 = vmatpush1.bf16.msra.mxu0 0
    %1027 = vmatprep.subr.bf16.mxu0 0
    %1028 = vmatpush1.bf16.msra.mxu0 0
    %1029 = vmatprep.subr.bf16.mxu0 0
    %1030 = vmatpush1.bf16.msra.mxu0 0
    %1031 = vmatprep.subr.bf16.mxu0 0
    %1032 = vmatpush1.bf16.msra.mxu0 0
    %1033 = vmatprep.subr.bf16.mxu0 0
    %1034 = vmatpush1.bf16.msra.mxu0 0
    %1035 = vmatprep.subr.bf16.mxu0 0
    %1036 = vmatpush1.bf16.msra.mxu0 0
    %1037 = vmatprep.subr.bf16.mxu0 0
    %1038 = vmatpush1.bf16.msra.mxu0 0
    %1039 = vmatprep.subr.bf16.mxu0 0
    %1040 = vmatpush1.bf16.msra.mxu0 0
    %1041 = vmatprep.subr.bf16.mxu0 0
    %1042 = vmatpush1.bf16.msra.mxu0 0
    %1043 = vmatprep.mubr.bf16.mxu0 0
    %1044 = vmatmul.mubr.bf16.gmra.mrb[0].mxu0 %v967
    %v1045 = vpop.f32.mrb[0].mxu0
    %v1046 = vadd.f32 %v959, %v1045
    %v1047 = vpop.f32.mrb[0].mxu0
    %v1048 = vpop.f32.mrb[0].mxu0
    %v1049 = vadd.f32 %v959, %v1048
    %v1050 = vpop.f32.mrb[0].mxu0
    %1051 = vdwg.mxu0
    %v1052 = vadd.f32 %v1004, %v163
    %v1053 = vadd.f32 %v1007, %v168
    %v1055 = vsel %vm258, %v1052, 0
    %v1058 = vsel %vm258, %v1053, 0
    %1060 = vmatprep.subr.mxu0 0.0
    %1061 = vmatpush1.msra.mxu0 %v84
    %1062 = vmatprep.subr.mxu0 0.0
    %1063 = vmatpush1.msra.mxu0 0.0
    %1064 = vmatprep.subr.mxu0 0.0
    %1065 = vmatpush1.msra.mxu0 0.0
    %1066 = vmatprep.subr.mxu0 0.0
    %1067 = vmatpush1.msra.mxu0 0.0
    %1068 = vmatprep.subr.mxu0 0.0
    %1069 = vmatpush1.msra.mxu0 0.0
    %1070 = vmatprep.subr.mxu0 0.0
    %1071 = vmatpush1.msra.mxu0 0.0
    %1072 = vmatprep.subr.mxu0 0.0
    %1073 = vmatpush1.msra.mxu0 0.0
    %1074 = vmatprep.subr.mxu0 0.0
    %1075 = vmatpush1.msra.mxu0 0.0
    %1076 = vmatprep.subr.mxu0 0.0
    %1077 = vmatpush1.msra.mxu0 0.0
    %1078 = vmatprep.subr.mxu0 0.0
    %1079 = vmatpush1.msra.mxu0 0.0
    %1080 = vmatprep.subr.mxu0 0.0
    %1081 = vmatpush1.msra.mxu0 0.0
    %1082 = vmatprep.subr.mxu0 0.0
    %1083 = vmatpush1.msra.mxu0 0.0
    %1084 = vmatprep.subr.mxu0 0.0
    %1085 = vmatpush1.msra.mxu0 0.0
    %1086 = vmatprep.subr.mxu0 0.0
    %1087 = vmatpush1.msra.mxu0 0.0
    %1088 = vmatprep.subr.mxu0 0.0
    %1089 = vmatpush1.msra.mxu0 0.0
    %1090 = vmatprep.subr.mxu0 0.0
    %1091 = vmatpush1.msra.mxu0 0.0
    %1092 = vmatprep.subr.mxu0 0.0
    %1093 = vmatpush1.msra.mxu0 0.0
    %1094 = vmatprep.subr.mxu0 0.0
    %1095 = vmatpush1.msra.mxu0 0.0
    %1096 = vmatprep.subr.mxu0 0.0
    %1097 = vmatpush1.msra.mxu0 0.0
    %1098 = vmatprep.subr.mxu0 0.0
    %1099 = vmatpush1.msra.mxu0 0.0
    %1100 = vmatprep.subr.mxu0 0.0
    %1101 = vmatpush1.msra.mxu0 0.0
    %1102 = vmatprep.subr.mxu0 0.0
    %1103 = vmatpush1.msra.mxu0 0.0
    %1104 = vmatprep.subr.mxu0 0.0
    %1105 = vmatpush1.msra.mxu0 0.0
    %1106 = vmatprep.subr.mxu0 0.0
    %1107 = vmatpush1.msra.mxu0 0.0
    %1108 = vmatprep.subr.mxu0 0.0
    %1109 = vmatpush1.msra.mxu0 0.0
    %1110 = vmatprep.subr.mxu0 0.0
    %1111 = vmatpush1.msra.mxu0 0.0
    %1112 = vmatprep.subr.mxu0 0.0
    %1113 = vmatpush1.msra.mxu0 0.0
    %1114 = vmatprep.subr.mxu0 0.0
    %1115 = vmatpush1.msra.mxu0 0.0
    %1116 = vmatprep.subr.mxu0 0.0
    %1117 = vmatpush1.msra.mxu0 0.0
    %1118 = vmatprep.subr.mxu0 0.0
    %1119 = vmatpush1.msra.mxu0 0.0
    %1120 = vmatprep.subr.mxu0 0.0
    %1121 = vmatpush1.msra.mxu0 0.0
    %1122 = vmatprep.subr.mxu0 0.0
    %1123 = vmatpush1.msra.mxu0 0.0
    %1124 = vmatprep.mubr.f32.mxu0 0.0
    %1125 = vmatmul.mubr.f32.gmra.mrb[0].mxu0 %v1055
    %v1126 = vpop.f32.mrb[0].mxu0
    %v1127 = vadd.f32 0.0, %v1126
    %v1128 = vpop.f32.mrb[0].mxu0
    %1129 = vmatprep.mubr.f32.mxu0 0.0
    %1130 = vmatmul.mubr.f32.gmra.mrb[0].mxu0 %v1058
    %v1131 = vpop.f32.mrb[0].mxu0
    %v1132 = vadd.f32 0.0, %v1131
    %v1133 = vpop.f32.mrb[0].mxu0
    %1134 = vdwg.mxu0
    %1135 = vst.msk [vmem:[#allocation2] sm:$0xff] %vm85, %v1127
    %1136 = vst.msk [vmem:[#allocation2 + $0x8] sm:$0xff] %vm85, %v1132
    %v1137 = vadd.f32 %v1046, %v244
    %v1138 = vadd.f32 %v1049, %v249
    %v1140 = vsel %vm258, %v1137, 0
    %v1143 = vsel %vm258, %v1138, 0
    %1145 = vmatprep.subr.mxu0 0.0
    %1146 = vmatpush1.msra.mxu0 %v84
    %1147 = vmatprep.subr.mxu0 0.0
    %1148 = vmatpush1.msra.mxu0 0.0
    %1149 = vmatprep.subr.mxu0 0.0
    %1150 = vmatpush1.msra.mxu0 0.0
    %1151 = vmatprep.subr.mxu0 0.0
    %1152 = vmatpush1.msra.mxu0 0.0
    %1153 = vmatprep.subr.mxu0 0.0
    %1154 = vmatpush1.msra.mxu0 0.0
    %1155 = vmatprep.subr.mxu0 0.0
    %1156 = vmatpush1.msra.mxu0 0.0
    %1157 = vmatprep.subr.mxu0 0.0
    %1158 = vmatpush1.msra.mxu0 0.0
    %1159 = vmatprep.subr.mxu0 0.0
    %1160 = vmatpush1.msra.mxu0 0.0
    %1161 = vmatprep.subr.mxu0 0.0
    %1162 = vmatpush1.msra.mxu0 0.0
    %1163 = vmatprep.subr.mxu0 0.0
    %1164 = vmatpush1.msra.mxu0 0.0
    %1165 = vmatprep.subr.mxu0 0.0
    %1166 = vmatpush1.msra.mxu0 0.0
    %1167 = vmatprep.subr.mxu0 0.0
    %1168 = vmatpush1.msra.mxu0 0.0
    %1169 = vmatprep.subr.mxu0 0.0
    %1170 = vmatpush1.msra.mxu0 0.0
    %1171 = vmatprep.subr.mxu0 0.0
    %1172 = vmatpush1.msra.mxu0 0.0
    %1173 = vmatprep.subr.mxu0 0.0
    %1174 = vmatpush1.msra.mxu0 0.0
    %1175 = vmatprep.subr.mxu0 0.0
    %1176 = vmatpush1.msra.mxu0 0.0
    %1177 = vmatprep.subr.mxu0 0.0
    %1178 = vmatpush1.msra.mxu0 0.0
    %1179 = vmatprep.subr.mxu0 0.0
    %1180 = vmatpush1.msra.mxu0 0.0
    %1181 = vmatprep.subr.mxu0 0.0
    %1182 = vmatpush1.msra.mxu0 0.0
    %1183 = vmatprep.subr.mxu0 0.0
    %1184 = vmatpush1.msra.mxu0 0.0
    %1185 = vmatprep.subr.mxu0 0.0
    %1186 = vmatpush1.msra.mxu0 0.0
    %1187 = vmatprep.subr.mxu0 0.0
    %1188 = vmatpush1.msra.mxu0 0.0
    %1189 = vmatprep.subr.mxu0 0.0
    %1190 = vmatpush1.msra.mxu0 0.0
    %1191 = vmatprep.subr.mxu0 0.0
    %1192 = vmatpush1.msra.mxu0 0.0
    %1193 = vmatprep.subr.mxu0 0.0
    %1194 = vmatpush1.msra.mxu0 0.0
    %1195 = vmatprep.subr.mxu0 0.0
    %1196 = vmatpush1.msra.mxu0 0.0
    %1197 = vmatprep.subr.mxu0 0.0
    %1198 = vmatpush1.msra.mxu0 0.0
    %1199 = vmatprep.subr.mxu0 0.0
    %1200 = vmatpush1.msra.mxu0 0.0
    %1201 = vmatprep.subr.mxu0 0.0
    %1202 = vmatpush1.msra.mxu0 0.0
    %1203 = vmatprep.subr.mxu0 0.0
    %1204 = vmatpush1.msra.mxu0 0.0
    %1205 = vmatprep.subr.mxu0 0.0
    %1206 = vmatpush1.msra.mxu0 0.0
    %1207 = vmatprep.subr.mxu0 0.0
    %1208 = vmatpush1.msra.mxu0 0.0
    %1209 = vmatprep.mubr.f32.mxu0 0.0
    %1210 = vmatmul.mubr.f32.gmra.mrb[0].mxu0 %v1140
    %v1211 = vpop.f32.mrb[0].mxu0
    %v1212 = vadd.f32 0.0, %v1211
    %v1213 = vpop.f32.mrb[0].mxu0
    %1214 = vmatprep.mubr.f32.mxu0 0.0
    %1215 = vmatmul.mubr.f32.gmra.mrb[0].mxu0 %v1143
    %v1216 = vpop.f32.mrb[0].mxu0
    %v1217 = vadd.f32 0.0, %v1216
    %v1218 = vpop.f32.mrb[0].mxu0
    %1219 = vdwg.mxu0
    %s1220 = scalar_lea.vmem [#allocation2], 16
    %1221 = vst.msk [vmem:[%s1220] sm:$0xff] %vm85, %v1212
    %1222 = vst.msk [vmem:[%s1220 + $0x8] sm:$0xff] %vm85, %v1217
    // Predicated region
    $region90: #{_lambda_.3} parent=1 // pred_check
      _
    $region91: #{_lambda_.3} parent=1 // pred_check_branch
      %1224 = sbr.rel (0) target = $region93
    $region92: #{_lambda_.3} parent=1 // pred_region
      %s1226 = ssub.s32 512, 512
      %1227 = vsyncadd [#allocation3], %s1226
      %s1228 = sshll.u32 [#allocation2], 4
      %s1229 = int_to_ptr.vmem [resolvable:$true] %s1228
      %1234 = dma.vmem_to_hbm [thread:$0]  %s1229, 512, %s22, [#allocation3], 128, 128, 8
    $region93: #{_lambda_.3} parent=1 // pred_fallthru
      _
    // Predicated region
    $region94: #{_lambda_.3} parent=1 // pred_check
      _
    $region95: #{_lambda_.3} parent=1 // pred_check_branch
      %1236 = sbr.rel (0) target = $region97
    $region96: #{_lambda_.3} parent=1 // pred_region
      %1237 = dma.done [#allocation3], 512
    $region97: #{_lambda_.3} parent=1 // pred_fallthru
      _
    %1238 = vsyncpa [#allocation3], 1

// kernel: _lambda_.2
$region0: #{_lambda_.2}
  #allocation0 [shape = 'u32[]', space=smem, size = 0x4, offset = 0x4, fixed_abs, tag = 'smem constant byte address 0x4 - core index']
  #allocation1 [shape = 'u32[144,128]{1,0:T(1,128)}', space=vmem, size = 0x12000, scoped, tag = 'internal scratch']
  %s0 = inlined_call_operand.vmem [shape: f32[2,2,20,3], index: 0, kind: input, shape index: {}]
  %s1 = inlined_call_operand.vmem [shape: f32[2,2,10,3], index: 1, kind: input, shape index: {}]
  %s2 = inlined_call_operand.vmem [shape: f32[2,40,11,3], index: 2, kind: input, shape index: {}]
  %s3 = inlined_call_operand.vmem [shape: bf16[2,6,3,32], index: 3, kind: input, shape index: {}]
  %s4 = inlined_call_operand.vmem [shape: bf16[2,5,32,32], index: 4, kind: input, shape index: {}]
  %s5 = inlined_call_operand.vmem [shape: bf16[2,6,3,32], index: 5, kind: input, shape index: {}]
  %s6 = inlined_call_operand.vmem [shape: bf16[2,5,32,32], index: 6, kind: input, shape index: {}]
  %s7 = inlined_call_operand.vmem [shape: f32[8,20], index: 7, kind: input, shape index: {}]
  %s8 = inlined_call_operand.vmem [shape: f32[2,2,8,3], index: 8, kind: output, shape index: {}]
  %s9 = sld [smem:[#allocation0]]
  $region65: #{_lambda_.2} parent=0
    _
  %s11 = ssub.s32 1, %s9
  %s12 = scalar_select 0, %s11, %s9
  loop: start=0, step=1, limit=4
  $region2: #{_lambda_.2} parent=0 // loop_pre_header
    _
  $region3: #{_lambda_.2} parent=0 // loop_header
    %s14 = sphi 0, %s18
    %p15 = scmp.ge.s32.totalorder %s14, 4
    %s24 = sphi 0, %s26
    %s27 = sphi 0, %s24
    %s28 = sphi 0, %s27
    %s44 = sphi 0, %s28
    %s50 = sphi 0, %s52
    %s53 = sphi 0, %s50
    %s54 = sphi 0, %s53
    %s70 = sphi 0, %s54
    %s76 = sphi 0, %s78
    %s79 = sphi 0, %s76
    %s80 = sphi 0, %s79
    %s96 = sphi 0, %s80
    %s102 = sphi 0, %s104
    %s105 = sphi 0, %s102
    %s106 = sphi 0, %s105
    %s122 = sphi 0, %s106
    %s128 = sphi 0, %s130
    %s131 = sphi 0, %s128
    %s132 = sphi 0, %s131
    %s148 = sphi 0, %s132
    %s154 = sphi 0, %s156
    %s157 = sphi 0, %s154
    %s158 = sphi 0, %s157
    %s174 = sphi 0, %s158
    %s180 = sphi 0, %s182
    %s183 = sphi 0, %s180
    %s184 = sphi 0, %s183
    %s200 = sphi 0, %s184
    %s204 = sphi 0, %s204
    %s206 = sphi 0, %s204
    %s207 = sphi 0, %s206
    %s221 = sphi 0, %s207
    %s227 = sphi 0, %s229
    %s230 = sphi 0, %s227
    %s231 = sphi 0, %s230
    %s247 = sphi 0, %s231
  $region4: #{_lambda_.2} parent=0 // loop_header_branch
    %17 = sbr.rel (%p15) target = $region8
  $region5: #{_lambda_.2} parent=0 // loop_body
    %s19 = ssub.s32 %s14, 1
    %s20 = ssub.s32 %s14, 2
    %s21 = sadd.s32 %s14, 1
    %s22 = ssub.s32 %s14, %s21
    %p23 = scmp.eq.s32.totalorder %s22, 0
    %s25 = sadd.s32 %s24, 1
    %s26 = scalar_select %p23, %s24, %s25
    %p29 = pneg %p23
    %p30 = scmp.eq.s32.totalorder %s14, 1
    %p31 = por %p29, %p30
    %p32 = scmp.ne.s32.totalorder %s24, %s27
    %p33 = scmp.eq.s32.totalorder %s14, 0
    %p34 = por %p32, %p33
    %p35 = scmp.ne.s32.totalorder %s24, %s27
    %p36 = scmp.eq.s32.totalorder %s19, 1
    %p37 = por %p35, %p36
    %p38 = scmp.ne.s32.totalorder %s27, %s28
    %p39 = scmp.eq.s32.totalorder %s19, 0
    %p40 = por %p38, %p39
    %p41 = scmp.ne.s32.totalorder %s27, %s28
    %p42 = scmp.eq.s32.totalorder %s20, 1
    %p43 = por %p41, %p42
    %p45 = scmp.ne.s32.totalorder %s28, %s44
    %p46 = scmp.eq.s32.totalorder %s20, 0
    %p47 = por %p45, %p46
    %s48 = ssub.s32 %s14, %s21
    %p49 = scmp.eq.s32.totalorder %s48, 0
    %s51 = sadd.s32 %s50, 1
    %s52 = scalar_select %p49, %s50, %s51
    %p55 = pneg %p49
    %p56 = scmp.eq.s32.totalorder %s14, 1
    %p57 = por %p55, %p56
    %p58 = scmp.ne.s32.totalorder %s50, %s53
    %p59 = scmp.eq.s32.totalorder %s14, 0
    %p60 = por %p58, %p59
    %p61 = scmp.ne.s32.totalorder %s50, %s53
    %p62 = scmp.eq.s32.totalorder %s19, 1
    %p63 = por %p61, %p62
    %p64 = scmp.ne.s32.totalorder %s53, %s54
    %p65 = scmp.eq.s32.totalorder %s19, 0
    %p66 = por %p64, %p65
    %p67 = scmp.ne.s32.totalorder %s53, %s54
    %p68 = scmp.eq.s32.totalorder %s20, 1
    %p69 = por %p67, %p68
    %p71 = scmp.ne.s32.totalorder %s54, %s70
    %p72 = scmp.eq.s32.totalorder %s20, 0
    %p73 = por %p71, %p72
    %s74 = ssub.s32 %s14, %s21
    %p75 = scmp.eq.s32.totalorder %s74, 0
    %s77 = sadd.s32 %s76, 1
    %s78 = scalar_select %p75, %s76, %s77
    %p81 = pneg %p75
    %p82 = scmp.eq.s32.totalorder %s14, 1
    %p83 = por %p81, %p82
    %p84 = scmp.ne.s32.totalorder %s76, %s79
    %p85 = scmp.eq.s32.totalorder %s14, 0
    %p86 = por %p84, %p85
    %p87 = scmp.ne.s32.totalorder %s76, %s79
    %p88 = scmp.eq.s32.totalorder %s19, 1
    %p89 = por %p87, %p88
    %p90 = scmp.ne.s32.totalorder %s79, %s80
    %p91 = scmp.eq.s32.totalorder %s19, 0
    %p92 = por %p90, %p91
    %p93 = scmp.ne.s32.totalorder %s79, %s80
    %p94 = scmp.eq.s32.totalorder %s20, 1
    %p95 = por %p93, %p94
    %p97 = scmp.ne.s32.totalorder %s80, %s96
    %p98 = scmp.eq.s32.totalorder %s20, 0
    %p99 = por %p97, %p98
    %s100 = ssub.s32 %s14, %s21
    %p101 = scmp.eq.s32.totalorder %s100, 0
    %s103 = sadd.s32 %s102, 1
    %s104 = scalar_select %p101, %s102, %s103
    %p107 = pneg %p101
    %p108 = scmp.eq.s32.totalorder %s14, 1
    %p109 = por %p107, %p108
    %p110 = scmp.ne.s32.totalorder %s102, %s105
    %p111 = scmp.eq.s32.totalorder %s14, 0
    %p112 = por %p110, %p111
    %p113 = scmp.ne.s32.totalorder %s102, %s105
    %p114 = scmp.eq.s32.totalorder %s19, 1
    %p115 = por %p113, %p114
    %p116 = scmp.ne.s32.totalorder %s105, %s106
    %p117 = scmp.eq.s32.totalorder %s19, 0
    %p118 = por %p116, %p117
    %p119 = scmp.ne.s32.totalorder %s105, %s106
    %p120 = scmp.eq.s32.totalorder %s20, 1
    %p121 = por %p119, %p120
    %p123 = scmp.ne.s32.totalorder %s106, %s122
    %p124 = scmp.eq.s32.totalorder %s20, 0
    %p125 = por %p123, %p124
    %s126 = ssub.s32 %s14, %s21
    %p127 = scmp.eq.s32.totalorder %s126, 0
    %s129 = sadd.s32 %s128, 1
    %s130 = scalar_select %p127, %s128, %s129
    %p133 = pneg %p127
    %p134 = scmp.eq.s32.totalorder %s14, 1
    %p135 = por %p133, %p134
    %p136 = scmp.ne.s32.totalorder %s128, %s131
    %p137 = scmp.eq.s32.totalorder %s14, 0
    %p138 = por %p136, %p137
    %p139 = scmp.ne.s32.totalorder %s128, %s131
    %p140 = scmp.eq.s32.totalorder %s19, 1
    %p141 = por %p139, %p140
    %p142 = scmp.ne.s32.totalorder %s131, %s132
    %p143 = scmp.eq.s32.totalorder %s19, 0
    %p144 = por %p142, %p143
    %p145 = scmp.ne.s32.totalorder %s131, %s132
    %p146 = scmp.eq.s32.totalorder %s20, 1
    %p147 = por %p145, %p146
    %p149 = scmp.ne.s32.totalorder %s132, %s148
    %p150 = scmp.eq.s32.totalorder %s20, 0
    %p151 = por %p149, %p150
    %s152 = ssub.s32 %s14, %s21
    %p153 = scmp.eq.s32.totalorder %s152, 0
    %s155 = sadd.s32 %s154, 1
    %s156 = scalar_select %p153, %s154, %s155
    %p159 = pneg %p153
    %p160 = scmp.eq.s32.totalorder %s14, 1
    %p161 = por %p159, %p160
    %p162 = scmp.ne.s32.totalorder %s154, %s157
    %p163 = scmp.eq.s32.totalorder %s14, 0
    %p164 = por %p162, %p163
    %p165 = scmp.ne.s32.totalorder %s154, %s157
    %p166 = scmp.eq.s32.totalorder %s19, 1
    %p167 = por %p165, %p166
    %p168 = scmp.ne.s32.totalorder %s157, %s158
    %p169 = scmp.eq.s32.totalorder %s19, 0
    %p170 = por %p168, %p169
    %p171 = scmp.ne.s32.totalorder %s157, %s158
    %p172 = scmp.eq.s32.totalorder %s20, 1
    %p173 = por %p171, %p172
    %p175 = scmp.ne.s32.totalorder %s158, %s174
    %p176 = scmp.eq.s32.totalorder %s20, 0
    %p177 = por %p175, %p176
    %s178 = ssub.s32 %s14, %s21
    %p179 = scmp.eq.s32.totalorder %s178, 0
    %s181 = sadd.s32 %s180, 1
    %s182 = scalar_select %p179, %s180, %s181
    %p185 = pneg %p179
    %p186 = scmp.eq.s32.totalorder %s14, 1
    %p187 = por %p185, %p186
    %p188 = scmp.ne.s32.totalorder %s180, %s183
    %p189 = scmp.eq.s32.totalorder %s14, 0
    %p190 = por %p188, %p189
    %p191 = scmp.ne.s32.totalorder %s180, %s183
    %p192 = scmp.eq.s32.totalorder %s19, 1
    %p193 = por %p191, %p192
    %p194 = scmp.ne.s32.totalorder %s183, %s184
    %p195 = scmp.eq.s32.totalorder %s19, 0
    %p196 = por %p194, %p195
    %p197 = scmp.ne.s32.totalorder %s183, %s184
    %p198 = scmp.eq.s32.totalorder %s20, 1
    %p199 = por %p197, %p198
    %p201 = scmp.ne.s32.totalorder %s184, %s200
    %p202 = scmp.eq.s32.totalorder %s20, 0
    %p203 = por %p201, %p202
    %s205 = sadd.s32 %s204, 1
    %p208 = scmp.eq.s32.totalorder %s14, 1
    %p209 = scmp.ne.s32.totalorder %s204, %s206
    %p210 = scmp.eq.s32.totalorder %s14, 0
    %p211 = por %p209, %p210
    %p212 = scmp.ne.s32.totalorder %s204, %s206
    %p213 = scmp.eq.s32.totalorder %s19, 1
    %p214 = por %p212, %p213
    %p215 = scmp.ne.s32.totalorder %s206, %s207
    %p216 = scmp.eq.s32.totalorder %s19, 0
    %p217 = por %p215, %p216
    %p218 = scmp.ne.s32.totalorder %s206, %s207
    %p219 = scmp.eq.s32.totalorder %s20, 1
    %p220 = por %p218, %p219
    %p222 = scmp.ne.s32.totalorder %s207, %s221
    %p223 = scmp.eq.s32.totalorder %s20, 0
    %p224 = por %p222, %p223
    %s225 = ssub.s32 %s14, %s21
    %p226 = scmp.eq.s32.totalorder %s225, 0
    %s228 = sadd.s32 %s227, 1
    %s229 = scalar_select %p226, %s227, %s228
    %p232 = pneg %p226
    %p233 = scmp.eq.s32.totalorder %s14, 1
    %p234 = por %p232, %p233
    %p235 = scmp.ne.s32.totalorder %s227, %s230
    %p236 = scmp.eq.s32.totalorder %s14, 0
    %p237 = por %p235, %p236
    %p238 = scmp.ne.s32.totalorder %s227, %s230
    %p239 = scmp.eq.s32.totalorder %s19, 1
    %p240 = por %p238, %p239
    %p241 = scmp.ne.s32.totalorder %s230, %s231
    %p242 = scmp.eq.s32.totalorder %s19, 0
    %p243 = por %p241, %p242
    %p244 = scmp.ne.s32.totalorder %s230, %s231
    %p245 = scmp.eq.s32.totalorder %s20, 1
    %p246 = por %p244, %p245
    %p248 = scmp.ne.s32.totalorder %s231, %s247
    %p249 = scmp.eq.s32.totalorder %s20, 0
    %p250 = por %p248, %p249
    %p251 = scmp.le.s32.totalorder 1, %s14
    %p252 = scmp.lt.s32.totalorder %s14, 3
    %p253 = pnand %p251, %p252
    %p254 = pneg %p253
    // Predicated region
    $region9: #{_lambda_.2} parent=5 // pred_check
      _
    $region10: #{_lambda_.2} parent=5 // pred_check_branch
      %256 = sbr.rel (%p253) target = $region12
    $region11: #{_lambda_.2} parent=5 // pred_region
      %s257 = ssub.s32 %s14, 1
      // Predicated region
      $region13: #{_lambda_.2} parent=11 // pred_check
        %p258 = pneg %p217
      $region14: #{_lambda_.2} parent=11 // pred_check_branch
        %260 = sbr.rel (%p258) target = $region16
      $region15: #{_lambda_.2} parent=11 // pred_region
        _
      $region16: #{_lambda_.2} parent=11 // pred_fallthru
        _
    $region12: #{_lambda_.2} parent=5 // pred_fallthru
      _
    %p261 = scmp.lt.s32.totalorder %s14, 2
    // Predicated region
    $region17: #{_lambda_.2} parent=5 // pred_check
      %p262 = pneg %p261
    $region18: #{_lambda_.2} parent=5 // pred_check_branch
      %264 = sbr.rel (%p262) target = $region20
    $region19: #{_lambda_.2} parent=5 // pred_region
      // Predicated region
      $region21: #{_lambda_.2} parent=19 // pred_check
        %p265 = pneg %p34
      $region22: #{_lambda_.2} parent=19 // pred_check_branch
        %267 = sbr.rel (%p265) target = $region24
      $region23: #{_lambda_.2} parent=19 // pred_region
        %p268 = scmp.lt.s32.totalorder %s14, 1
        %s269 = scalar_select %p268, %s14, 1
        %s270 = smul.addr %s269, 6
        %s271 = smul.addr %s270, 8
        %s272 = scalar_lea.vmem %s0, %s271
      $region24: #{_lambda_.2} parent=19 // pred_fallthru
        _
      // Predicated region
      $region25: #{_lambda_.2} parent=19 // pred_check
        %p273 = pneg %p60
      $region26: #{_lambda_.2} parent=19 // pred_check_branch
        %275 = sbr.rel (%p273) target = $region28
      $region27: #{_lambda_.2} parent=19 // pred_region
        %p276 = scmp.lt.s32.totalorder %s14, 1
        %s277 = scalar_select %p276, %s14, 1
        %s278 = smul.addr %s277, 4
        %s279 = smul.addr %s278, 8
        %s280 = scalar_lea.vmem %s1, %s279
      $region28: #{_lambda_.2} parent=19 // pred_fallthru
        _
      // Predicated region
      $region29: #{_lambda_.2} parent=19 // pred_check
        %p281 = pneg %p86
      $region30: #{_lambda_.2} parent=19 // pred_check_branch
        %283 = sbr.rel (%p281) target = $region32
      $region31: #{_lambda_.2} parent=19 // pred_region
        %p284 = scmp.lt.s32.totalorder %s14, 1
        %s285 = scalar_select %p284, %s14, 1
        %s286 = smul.addr %s285, 80
        %s287 = smul.addr %s286, 8
        %s288 = scalar_lea.vmem %s2, %s287
      $region32: #{_lambda_.2} parent=19 // pred_fallthru
        _
      // Predicated region
      $region33: #{_lambda_.2} parent=19 // pred_check
        %p289 = pneg %p112
      $region34: #{_lambda_.2} parent=19 // pred_check_branch
        %291 = sbr.rel (%p289) target = $region36
      $region35: #{_lambda_.2} parent=19 // pred_region
        %p292 = scmp.lt.s32.totalorder %s14, 1
        %s293 = scalar_select %p292, %s14, 1
        %s294 = smul.addr %s293, 6
        %s295 = smul.addr %s294, 2
        %s296 = scalar_lea.vmem %s3, %s295
      $region36: #{_lambda_.2} parent=19 // pred_fallthru
        _
      // Predicated region
      $region37: #{_lambda_.2} parent=19 // pred_check
        %p297 = pneg %p138
      $region38: #{_lambda_.2} parent=19 // pred_check_branch
        %299 = sbr.rel (%p297) target = $region40
      $region39: #{_lambda_.2} parent=19 // pred_region
        %p300 = scmp.lt.s32.totalorder %s14, 1
        %s301 = scalar_select %p300, %s14, 1
        %s302 = smul.addr %s301, 20
        %s303 = smul.addr %s302, 4
        %s304 = scalar_lea.vmem %s4, %s303
      $region40: #{_lambda_.2} parent=19 // pred_fallthru
        _
      // Predicated region
      $region41: #{_lambda_.2} parent=19 // pred_check
        %p305 = pneg %p164
      $region42: #{_lambda_.2} parent=19 // pred_check_branch
        %307 = sbr.rel (%p305) target = $region44
      $region43: #{_lambda_.2} parent=19 // pred_region
        %p308 = scmp.lt.s32.totalorder %s14, 1
        %s309 = scalar_select %p308, %s14, 1
        %s310 = smul.addr %s309, 6
        %s311 = smul.addr %s310, 2
        %s312 = scalar_lea.vmem %s5, %s311
      $region44: #{_lambda_.2} parent=19 // pred_fallthru
        _
      // Predicated region
      $region45: #{_lambda_.2} parent=19 // pred_check
        %p313 = pneg %p190
      $region46: #{_lambda_.2} parent=19 // pred_check_branch
        %315 = sbr.rel (%p313) target = $region48
      $region47: #{_lambda_.2} parent=19 // pred_region
        %p316 = scmp.lt.s32.totalorder %s14, 1
        %s317 = scalar_select %p316, %s14, 1
        %s318 = smul.addr %s317, 20
        %s319 = smul.addr %s318, 4
        %s320 = scalar_lea.vmem %s6, %s319
      $region48: #{_lambda_.2} parent=19 // pred_fallthru
        _
    $region20: #{_lambda_.2} parent=5 // pred_fallthru
      _
    %p321 = scmp.le.s32.totalorder 1, %s14
    %p322 = scmp.lt.s32.totalorder %s14, 3
    %p323 = pnand %p321, %p322
    %p324 = pneg %p323
    // Predicated region
    $region49: #{_lambda_.2} parent=5 // pred_check
      _
    $region50: #{_lambda_.2} parent=5 // pred_check_branch
      %326 = sbr.rel (%p323) target = $region52
    $region51: #{_lambda_.2} parent=5 // pred_region
      %s327 = ssub.s32 %s14, 1
      %p328 = scmp.lt.s32.totalorder %s19, 1
      %s329 = scalar_select %p328, %s19, 1
      %s330 = smul.addr %s329, 6
      %s331 = smul.addr %s330, 8
      %s332 = scalar_lea.vmem %s0, %s331
      %p333 = pneg %p40
      %p334 = pneg %p37
      %p335 = scmp.lt.s32.totalorder %s19, 1
      %s336 = scalar_select %p335, %s19, 1
      %s337 = smul.addr %s336, 4
      %s338 = smul.addr %s337, 8
      %s339 = scalar_lea.vmem %s1, %s338
      %p340 = pneg %p66
      %p341 = pneg %p63
      %p342 = scmp.lt.s32.totalorder %s19, 1
      %s343 = scalar_select %p342, %s19, 1
      %s344 = smul.addr %s343, 80
      %s345 = smul.addr %s344, 8
      %s346 = scalar_lea.vmem %s2, %s345
      %p347 = pneg %p92
      %p348 = pneg %p89
      %p349 = scmp.lt.s32.totalorder %s19, 1
      %s350 = scalar_select %p349, %s19, 1
      %s351 = smul.addr %s350, 6
      %s352 = smul.addr %s351, 2
      %s353 = scalar_lea.vmem %s3, %s352
      %p354 = pneg %p118
      %p355 = pneg %p115
      %p356 = scmp.lt.s32.totalorder %s19, 1
      %s357 = scalar_select %p356, %s19, 1
      %s358 = smul.addr %s357, 20
      %s359 = smul.addr %s358, 4
      %s360 = scalar_lea.vmem %s4, %s359
      %p361 = pneg %p144
      %p362 = pneg %p141
      %p363 = scmp.lt.s32.totalorder %s19, 1
      %s364 = scalar_select %p363, %s19, 1
      %s365 = smul.addr %s364, 6
      %s366 = smul.addr %s365, 2
      %s367 = scalar_lea.vmem %s5, %s366
      %p368 = pneg %p170
      %p369 = pneg %p167
      %p370 = scmp.lt.s32.totalorder %s19, 1
      %s371 = scalar_select %p370, %s19, 1
      %s372 = smul.addr %s371, 20
      %s373 = smul.addr %s372, 4
      %s374 = scalar_lea.vmem %s6, %s373
      %p375 = pneg %p196
      %p376 = pneg %p193
      %p377 = pneg %p217
      %p378 = pneg %p214
      %p379 = pneg %p243
      %p380 = pneg %p240
      %p381 = scmp.lt.s32.totalorder %s19, 1
      %s382 = scalar_select %p381, %s19, 1
      %s383 = smul.addr %s382, 2
      %s384 = smul.addr %s383, 8
      %s385 = scalar_lea.vmem %s8, %s384
      %p386 = scmp.lt.s32.totalorder %s19, 1
      %s387 = scalar_select %p386, %s19, 1
      %s388 = smul.addr %s387, 6
      %s389 = smul.addr %s388, 8
      %s390 = scalar_lea.vmem %s0, %s389
      %p391 = scmp.lt.s32.totalorder %s19, 1
      %s392 = scalar_select %p391, %s19, 1
      %s393 = smul.addr %s392, 4
      %s394 = smul.addr %s393, 8
      %s395 = scalar_lea.vmem %s1, %s394
      %p396 = scmp.lt.s32.totalorder %s19, 1
      %s397 = scalar_select %p396, %s19, 1
      %s398 = smul.addr %s397, 80
      %s399 = smul.addr %s398, 8
      %s400 = scalar_lea.vmem %s2, %s399
      %p401 = scmp.lt.s32.totalorder %s19, 1
      %s402 = scalar_select %p401, %s19, 1
      %s403 = smul.addr %s402, 6
      %s404 = smul.addr %s403, 2
      %s405 = scalar_lea.vmem %s3, %s404
      %p406 = scmp.lt.s32.totalorder %s19, 1
      %s407 = scalar_select %p406, %s19, 1
      %s408 = smul.addr %s407, 20
      %s409 = smul.addr %s408, 4
      %s410 = scalar_lea.vmem %s4, %s409
      %p411 = scmp.lt.s32.totalorder %s19, 1
      %s412 = scalar_select %p411, %s19, 1
      %s413 = smul.addr %s412, 6
      %s414 = smul.addr %s413, 2
      %s415 = scalar_lea.vmem %s5, %s414
      %p416 = scmp.lt.s32.totalorder %s19, 1
      %s417 = scalar_select %p416, %s19, 1
      %s418 = smul.addr %s417, 20
      %s419 = smul.addr %s418, 4
      %s420 = scalar_lea.vmem %s6, %s419
      %p421 = scmp.lt.s32.totalorder %s19, 1
      %s422 = scalar_select %p421, %s19, 1
      %s423 = smul.addr %s422, 2
      %s424 = smul.addr %s423, 8
      %s425 = scalar_lea.vmem %s8, %s424
      %v427 = vld [vmem:[%s390] sm:$0xff]
      %v428 = vld [vmem:[%s390 + $0x8] sm:$0xff]
      %v429 = vld [vmem:[%s390 + $0x10] sm:$0xf]
      %v430 = vld [vmem:[%s390 + $0x18] sm:$0xff]
      %v431 = vld [vmem:[%s390 + $0x20] sm:$0xff]
      %v432 = vld [vmem:[%s390 + $0x28] sm:$0xf]
      %v433 = vrcp.pop 1000.0
      %v434 = vmul.f32 %v427, %v433
      %v435 = vmul.f32 %v428, %v433
      %v436 = vmul.f32 %v429, %v433
      %v437 = vmul.f32 %v430, %v433
      %v438 = vmul.f32 %v431, %v433
      %v439 = vmul.f32 %v432, %v433
      %v440 = vld [vmem:[%s395] sm:$0xff]
      %v441 = vld [vmem:[%s395 + $0x8] sm:$0x3]
      %v442 = vld [vmem:[%s395 + $0x10] sm:$0xff]
      %v443 = vld [vmem:[%s395 + $0x18] sm:$0x3]
      %v444 = vmul.f32 %v440, %v433
      %v445 = vmul.f32 %v441, %v433
      %v446 = vmul.f32 %v442, %v433
      %v447 = vmul.f32 %v443, %v433
      %v448 = vld [vmem:[%s400] sm:$0xff]
      %v449 = vld [vmem:[%s400 + $0x8] sm:$0x7]
      %v450 = vld [vmem:[%s400 + $0x10] sm:$0xff]
      %v451 = vld [vmem:[%s400 + $0x18] sm:$0x7]
      %v452 = vld [vmem:[%s400 + $0x20] sm:$0xff]
      %v453 = vld [vmem:[%s400 + $0x28] sm:$0x7]
      %v454 = vld [vmem:[%s400 + $0x30] sm:$0xff]
      %v455 = vld [vmem:[%s400 + $0x38] sm:$0x7]
      %v456 = vld [vmem:[%s400 + $0x40] sm:$0xff]
      %v457 = vld [vmem:[%s400 + $0x48] sm:$0x7]
      %v458 = vld [vmem:[%s400 + $0x50] sm:$0xff]
      %v459 = vld [vmem:[%s400 + $0x58] sm:$0x7]
      %v460 = vld [vmem:[%s400 + $0x60] sm:$0xff]
      %v461 = vld [vmem:[%s400 + $0x68] sm:$0x7]
      %v462 = vld [vmem:[%s400 + $0x70] sm:$0xff]
      %v463 = vld [vmem:[%s400 + $0x78] sm:$0x7]
      %v464 = vld [vmem:[%s400 + $0x80] sm:$0xff]
      %v465 = vld [vmem:[%s400 + $0x88] sm:$0x7]
      %v466 = vld [vmem:[%s400 + $0x90] sm:$0xff]
      %v467 = vld [vmem:[%s400 + $0x98] sm:$0x7]
      %v468 = vld [vmem:[%s400 + $0xa0] sm:$0xff]
      %v469 = vld [vmem:[%s400 + $0xa8] sm:$0x7]
      %v470 = vld [vmem:[%s400 + $0xb0] sm:$0xff]
      %v471 = vld [vmem:[%s400 + $0xb8] sm:$0x7]
      %v472 = vld [vmem:[%s400 + $0xc0] sm:$0xff]
      %v473 = vld [vmem:[%s400 + $0xc8] sm:$0x7]
      %v474 = vld [vmem:[%s400 + $0xd0] sm:$0xff]
      %v475 = vld [vmem:[%s400 + $0xd8] sm:$0x7]
      %v476 = vld [vmem:[%s400 + $0xe0] sm:$0xff]
      %v477 = vld [vmem:[%s400 + $0xe8] sm:$0x7]
      %v478 = vld [vmem:[%s400 + $0xf0] sm:$0xff]
      %v479 = vld [vmem:[%s400 + $0xf8] sm:$0x7]
      %v480 = vld [vmem:[%s400 + $0x100] sm:$0xff]
      %v481 = vld [vmem:[%s400 + $0x108] sm:$0x7]
      %v482 = vld [vmem:[%s400 + $0x110] sm:$0xff]
      %v483 = vld [vmem:[%s400 + $0x118] sm:$0x7]
      %v484 = vld [vmem:[%s400 + $0x120] sm:$0xff]
      %v485 = vld [vmem:[%s400 + $0x128] sm:$0x7]
      %v486 = vld [vmem:[%s400 + $0x130] sm:$0xff]
      %v487 = vld [vmem:[%s400 + $0x138] sm:$0x7]
      %v488 = vld [vmem:[%s400 + $0x140] sm:$0xff]
      %v489 = vld [vmem:[%s400 + $0x148] sm:$0x7]
      %v490 = vld [vmem:[%s400 + $0x150] sm:$0xff]
      %v491 = vld [vmem:[%s400 + $0x158] sm:$0x7]
      %v492 = vld [vmem:[%s400 + $0x160] sm:$0xff]
      %v493 = vld [vmem:[%s400 + $0x168] sm:$0x7]
      %v494 = vld [vmem:[%s400 + $0x170] sm:$0xff]
      %v495 = vld [vmem:[%s400 + $0x178] sm:$0x7]
      %v496 = vld [vmem:[%s400 + $0x180] sm:$0xff]
      %v497 = vld [vmem:[%s400 + $0x188] sm:$0x7]
      %v498 = vld [vmem:[%s400 + $0x190] sm:$0xff]
      %v499 = vld [vmem:[%s400 + $0x198] sm:$0x7]
      %v500 = vld [vmem:[%s400 + $0x1a0] sm:$0xff]
      %v501 = vld [vmem:[%s400 + $0x1a8] sm:$0x7]
      %v502 = vld [vmem:[%s400 + $0x1b0] sm:$0xff]
      %v503 = vld [vmem:[%s400 + $0x1b8] sm:$0x7]
      %v504 = vld [vmem:[%s400 + $0x1c0] sm:$0xff]
      %v505 = vld [vmem:[%s400 + $0x1c8] sm:$0x7]
      %v506 = vld [vmem:[%s400 + $0x1d0] sm:$0xff]
      %v507 = vld [vmem:[%s400 + $0x1d8] sm:$0x7]
      %v508 = vld [vmem:[%s400 + $0x1e0] sm:$0xff]
      %v509 = vld [vmem:[%s400 + $0x1e8] sm:$0x7]
      %v510 = vld [vmem:[%s400 + $0x1f0] sm:$0xff]
      %v511 = vld [vmem:[%s400 + $0x1f8] sm:$0x7]
      %v512 = vld [vmem:[%s400 + $0x200] sm:$0xff]
      %v513 = vld [vmem:[%s400 + $0x208] sm:$0x7]
      %v514 = vld [vmem:[%s400 + $0x210] sm:$0xff]
      %v515 = vld [vmem:[%s400 + $0x218] sm:$0x7]
      %v516 = vld [vmem:[%s400 + $0x220] sm:$0xff]
      %v517 = vld [vmem:[%s400 + $0x228] sm:$0x7]
      %v518 = vld [vmem:[%s400 + $0x230] sm:$0xff]
      %v519 = vld [vmem:[%s400 + $0x238] sm:$0x7]
      %v520 = vld [vmem:[%s400 + $0x240] sm:$0xff]
      %v521 = vld [vmem:[%s400 + $0x248] sm:$0x7]
      %v522 = vld [vmem:[%s400 + $0x250] sm:$0xff]
      %v523 = vld [vmem:[%s400 + $0x258] sm:$0x7]
      %v524 = vld [vmem:[%s400 + $0x260] sm:$0xff]
      %v525 = vld [vmem:[%s400 + $0x268] sm:$0x7]
      %v526 = vld [vmem:[%s400 + $0x270] sm:$0xff]
      %v527 = vld [vmem:[%s400 + $0x278] sm:$0x7]
      %v528 = vld [vmem:[%s7] sm:$0xff]
      %v529 = vld [vmem:[%s405] sm:$0x3]
      %v530 = vld [vmem:[%s405 + $0x2] sm:$0x3]
      %v531 = vld [vmem:[%s405 + $0x4] sm:$0x3]
      %v532 = vld [vmem:[%s405 + $0x6] sm:$0x3]
      %v533 = vld [vmem:[%s405 + $0x8] sm:$0x3]
      %v534 = vld [vmem:[%s405 + $0xa] sm:$0x3]
      %v535 = vld [vmem:[%s410] sm:$0xf]
      %v536 = vld [vmem:[%s410 + $0x4] sm:$0xf]
      %v537 = vld [vmem:[%s410 + $0x8] sm:$0xf]
      %v538 = vld [vmem:[%s410 + $0xc] sm:$0xf]
      %v539 = vld [vmem:[%s410 + $0x10] sm:$0xf]
      %v540 = vld [vmem:[%s410 + $0x14] sm:$0xf]
      %v541 = vld [vmem:[%s410 + $0x18] sm:$0xf]
      %v542 = vld [vmem:[%s410 + $0x1c] sm:$0xf]
      %v543 = vld [vmem:[%s410 + $0x20] sm:$0xf]
      %v544 = vld [vmem:[%s410 + $0x24] sm:$0xf]
      %v545 = vld [vmem:[%s410 + $0x28] sm:$0xf]
      %v546 = vld [vmem:[%s410 + $0x2c] sm:$0xf]
      %v547 = vld [vmem:[%s410 + $0x30] sm:$0xf]
      %v548 = vld [vmem:[%s410 + $0x34] sm:$0xf]
      %v549 = vld [vmem:[%s410 + $0x38] sm:$0xf]
      %v550 = vld [vmem:[%s410 + $0x3c] sm:$0xf]
      %v551 = vld [vmem:[%s410 + $0x40] sm:$0xf]
      %v552 = vld [vmem:[%s410 + $0x44] sm:$0xf]
      %v553 = vld [vmem:[%s410 + $0x48] sm:$0xf]
      %v554 = vld [vmem:[%s410 + $0x4c] sm:$0xf]
      %v555 = vld [vmem:[%s415] sm:$0x3]
      %v556 = vld [vmem:[%s415 + $0x2] sm:$0x3]
      %v557 = vld [vmem:[%s415 + $0x4] sm:$0x3]
      %v558 = vld [vmem:[%s415 + $0x6] sm:$0x3]
      %v559 = vld [vmem:[%s415 + $0x8] sm:$0x3]
      %v560 = vld [vmem:[%s415 + $0xa] sm:$0x3]
      %v561 = vld [vmem:[%s420] sm:$0xf]
      %v562 = vld [vmem:[%s420 + $0x4] sm:$0xf]
      %v563 = vld [vmem:[%s420 + $0x8] sm:$0xf]
      %v564 = vld [vmem:[%s420 + $0xc] sm:$0xf]
      %v565 = vld [vmem:[%s420 + $0x10] sm:$0xf]
      %v566 = vld [vmem:[%s420 + $0x14] sm:$0xf]
      %v567 = vld [vmem:[%s420 + $0x18] sm:$0xf]
      %v568 = vld [vmem:[%s420 + $0x1c] sm:$0xf]
      %v569 = vld [vmem:[%s420 + $0x20] sm:$0xf]
      %v570 = vld [vmem:[%s420 + $0x24] sm:$0xf]
      %v571 = vld [vmem:[%s420 + $0x28] sm:$0xf]
      %v572 = vld [vmem:[%s420 + $0x2c] sm:$0xf]
      %v573 = vld [vmem:[%s420 + $0x30] sm:$0xf]
      %v574 = vld [vmem:[%s420 + $0x34] sm:$0xf]
      %v575 = vld [vmem:[%s420 + $0x38] sm:$0xf]
      %v576 = vld [vmem:[%s420 + $0x3c] sm:$0xf]
      %v577 = vld [vmem:[%s420 + $0x40] sm:$0xf]
      %v578 = vld [vmem:[%s420 + $0x44] sm:$0xf]
      %v579 = vld [vmem:[%s420 + $0x48] sm:$0xf]
      %v580 = vld [vmem:[%s420 + $0x4c] sm:$0xf]
      %v581 = vpack.c.bf16 %v435, %v434
      %v583 = vshrl.u32 %v581, 16
      %v585 = vshll.u32 %v581, 16
      %v587 = vrot.slane %v585, 1
      %v588 = vor.u32 %v583, %v587
      %vm589 = vcmask 23552
      %v591 = vsel %vm589, %v588, 0
      %vm593 = vcmask 1040384
      %vm594 = vcmask 1041408
      %v595 = vsel %vm593, 4294967295, 65535
      %v596 = vsel %vm594, %v595, 0
      %v598 = vand.u32 %v530, %v596
      %600 = vmatprep.subr.bf16.mxu0 0
      %601 = vmatpush1.bf16.msra.mxu0 %v598
      %602 = vmatprep.subr.bf16.mxu0 0
      %603 = vmatpush1.bf16.msra.mxu0 0
      %604 = vmatprep.subr.bf16.mxu0 0
      %605 = vmatpush1.bf16.msra.mxu0 0
      %606 = vmatprep.subr.bf16.mxu0 0
      %607 = vmatpush1.bf16.msra.mxu0 0
      %608 = vmatprep.subr.bf16.mxu0 0
      %609 = vmatpush1.bf16.msra.mxu0 0
      %610 = vmatprep.subr.bf16.mxu0 0
      %611 = vmatpush1.bf16.msra.mxu0 0
      %612 = vmatprep.subr.bf16.mxu0 0
      %613 = vmatpush1.bf16.msra.mxu0 0
      %614 = vmatprep.subr.bf16.mxu0 0
      %615 = vmatpush1.bf16.msra.mxu0 0
      %616 = vmatprep.subr.bf16.mxu0 0
      %617 = vmatpush1.bf16.msra.mxu0 0
      %618 = vmatprep.subr.bf16.mxu0 0
      %619 = vmatpush1.bf16.msra.mxu0 0
      %620 = vmatprep.subr.bf16.mxu0 0
      %621 = vmatpush1.bf16.msra.mxu0 0
      %622 = vmatprep.subr.bf16.mxu0 0
      %623 = vmatpush1.bf16.msra.mxu0 0
      %624 = vmatprep.subr.bf16.mxu0 0
      %625 = vmatpush1.bf16.msra.mxu0 0
      %626 = vmatprep.subr.bf16.mxu0 0
      %627 = vmatpush1.bf16.msra.mxu0 0
      %628 = vmatprep.subr.bf16.mxu0 0
      %629 = vmatpush1.bf16.msra.mxu0 0
      %630 = vmatprep.subr.bf16.mxu0 0
      %631 = vmatpush1.bf16.msra.mxu0 0
      %632 = vmatprep.mubr.bf16.mxu0 0
      %633 = vmatmul.mubr.bf16.gmra.mrb[0].mxu0 %v591
      %v634 = vpop.f32.mrb[0].mxu0
      %v635 = vadd.f32 0.0, %v634
      %v636 = vpop.f32.mrb[0].mxu0
      %v637 = vpop.f32.mrb[0].mxu0
      %v638 = vadd.f32 0.0, %v637
      %v639 = vpop.f32.mrb[0].mxu0
      %640 = vdwg.mxu0
      %v641 = vsel %vm589, %v581, 0
      %v644 = vand.u32 %v529, %v596
      %646 = vmatprep.subr.bf16.mxu0 0
      %647 = vmatpush1.bf16.msra.mxu0 %v644
      %648 = vmatprep.subr.bf16.mxu0 0
      %649 = vmatpush1.bf16.msra.mxu0 0
      %650 = vmatprep.subr.bf16.mxu0 0
      %651 = vmatpush1.bf16.msra.mxu0 0
      %652 = vmatprep.subr.bf16.mxu0 0
      %653 = vmatpush1.bf16.msra.mxu0 0
      %654 = vmatprep.subr.bf16.mxu0 0
      %655 = vmatpush1.bf16.msra.mxu0 0
      %656 = vmatprep.subr.bf16.mxu0 0
      %657 = vmatpush1.bf16.msra.mxu0 0
      %658 = vmatprep.subr.bf16.mxu0 0
      %659 = vmatpush1.bf16.msra.mxu0 0
      %660 = vmatprep.subr.bf16.mxu0 0
      %661 = vmatpush1.bf16.msra.mxu0 0
      %662 = vmatprep.subr.bf16.mxu0 0
      %663 = vmatpush1.bf16.msra.mxu0 0
      %664 = vmatprep.subr.bf16.mxu0 0
      %665 = vmatpush1.bf16.msra.mxu0 0
      %666 = vmatprep.subr.bf16.mxu0 0
      %667 = vmatpush1.bf16.msra.mxu0 0
      %668 = vmatprep.subr.bf16.mxu0 0
      %669 = vmatpush1.bf16.msra.mxu0 0
      %670 = vmatprep.subr.bf16.mxu0 0
      %671 = vmatpush1.bf16.msra.mxu0 0
      %672 = vmatprep.subr.bf16.mxu0 0
      %673 = vmatpush1.bf16.msra.mxu0 0
      %674 = vmatprep.subr.bf16.mxu0 0
      %675 = vmatpush1.bf16.msra.mxu0 0
      %676 = vmatprep.subr.bf16.mxu0 0
      %677 = vmatpush1.bf16.msra.mxu0 0
      %678 = vmatprep.mubr.bf16.mxu0 0
      %679 = vmatmul.mubr.bf16.gmra.mrb[0].mxu0 %v641
      %v680 = vpop.f32.mrb[0].mxu0
      %v681 = vadd.f32 %v635, %v680
      %v682 = vpop.f32.mrb[0].mxu0
      %v683 = vpop.f32.mrb[0].mxu0
      %v684 = vadd.f32 %v638, %v683
      %v685 = vpop.f32.mrb[0].mxu0
      %686 = vdwg.mxu0
      %v687 = vpack.c.bf16 %v436, %v436
      %vm690 = vcmask 1046528
      %v691 = vrot.slane %v581, 1
      %v692 = vrot.slane %v687, 1
      %v693 = vsel %vm690, %v691, %v692
      %v695 = vsel %vm589, %v693, 0
      %v698 = vand.u32 %v531, %v596
      %700 = vmatprep.subr.bf16.mxu0 0
      %701 = vmatpush1.bf16.msra.mxu0 %v698
      %702 = vmatprep.subr.bf16.mxu0 0
      %703 = vmatpush1.bf16.msra.mxu0 0
      %704 = vmatprep.subr.bf16.mxu0 0
      %705 = vmatpush1.bf16.msra.mxu0 0
      %706 = vmatprep.subr.bf16.mxu0 0
      %707 = vmatpush1.bf16.msra.mxu0 0
      %708 = vmatprep.subr.bf16.mxu0 0
      %709 = vmatpush1.bf16.msra.mxu0 0
      %710 = vmatprep.subr.bf16.mxu0 0
      %711 = vmatpush1.bf16.msra.mxu0 0
      %712 = vmatprep.subr.bf16.mxu0 0
      %713 = vmatpush1.bf16.msra.mxu0 0
      %714 = vmatprep.subr.bf16.mxu0 0
      %715 = vmatpush1.bf16.msra.mxu0 0
      %716 = vmatprep.subr.bf16.mxu0 0
      %717 = vmatpush1.bf16.msra.mxu0 0
      %718 = vmatprep.subr.bf16.mxu0 0
      %719 = vmatpush1.bf16.msra.mxu0 0
      %720 = vmatprep.subr.bf16.mxu0 0
      %721 = vmatpush1.bf16.msra.mxu0 0
      %722 = vmatprep.subr.bf16.mxu0 0
      %723 = vmatpush1.bf16.msra.mxu0 0
      %724 = vmatprep.subr.bf16.mxu0 0
      %725 = vmatpush1.bf16.msra.mxu0 0
      %726 = vmatprep.subr.bf16.mxu0 0
      %727 = vmatpush1.bf16.msra.mxu0 0
      %728 = vmatprep.subr.bf16.mxu0 0
      %729 = vmatpush1.bf16.msra.mxu0 0
      %730 = vmatprep.subr.bf16.mxu0 0
      %731 = vmatpush1.bf16.msra.mxu0 0
      %732 = vmatprep.mubr.bf16.mxu0 0
      %733 = vmatmul.mubr.bf16.gmra.mrb[0].mxu0 %v695
      %v734 = vpop.f32.mrb[0].mxu0
      %v735 = vadd.f32 0.0, %v734
      %v736 = vpop.f32.mrb[0].mxu0
      %v737 = vpop.f32.mrb[0].mxu0
      %v738 = vadd.f32 0.0, %v737
      %v739 = vpop.f32.mrb[0].mxu0
      %740 = vdwg.mxu0
      %v741 = vadd.f32 %v681, %v735
      %v742 = vadd.f32 %v684, %v738
      %vm743 = vsmask.f32 6400
      %v744 = vrot.slane %v583, 1
      %v745 = vrot.slane %v585, 2
      %v746 = vor.u32 %v744, %v745
      %v748 = vshrl.u32 %v687, 16
      %v750 = vrot.slane %v748, 1
      %v751 = vshll.u32 %v687, 16
      %v753 = vrot.slane %v751, 2
      %v754 = vor.u32 %v750, %v753
      %v755 = vsel %vm743, %v746, %v754
      %v757 = vsel %vm589, %v755, 0
      %v760 = vand.u32 %v532, %v596
      %762 = vmatprep.subr.bf16.mxu0 0
      %763 = vmatpush1.bf16.msra.mxu0 %v760
      %764 = vmatprep.subr.bf16.mxu0 0
      %765 = vmatpush1.bf16.msra.mxu0 0
      %766 = vmatprep.subr.bf16.mxu0 0
      %767 = vmatpush1.bf16.msra.mxu0 0
      %768 = vmatprep.subr.bf16.mxu0 0
      %769 = vmatpush1.bf16.msra.mxu0 0
      %770 = vmatprep.subr.bf16.mxu0 0
      %771 = vmatpush1.bf16.msra.mxu0 0
      %772 = vmatprep.subr.bf16.mxu0 0
      %773 = vmatpush1.bf16.msra.mxu0 0
      %774 = vmatprep.subr.bf16.mxu0 0
      %775 = vmatpush1.bf16.msra.mxu0 0
      %776 = vmatprep.subr.bf16.mxu0 0
      %777 = vmatpush1.bf16.msra.mxu0 0
      %778 = vmatprep.subr.bf16.mxu0 0
      %779 = vmatpush1.bf16.msra.mxu0 0
      %780 = vmatprep.subr.bf16.mxu0 0
      %781 = vmatpush1.bf16.msra.mxu0 0
      %782 = vmatprep.subr.bf16.mxu0 0
      %783 = vmatpush1.bf16.msra.mxu0 0
      %784 = vmatprep.subr.bf16.mxu0 0
      %785 = vmatpush1.bf16.msra.mxu0 0
      %786 = vmatprep.subr.bf16.mxu0 0
      %787 = vmatpush1.bf16.msra.mxu0 0
      %788 = vmatprep.subr.bf16.mxu0 0
      %789 = vmatpush1.bf16.msra.mxu0 0
      %790 = vmatprep.subr.bf16.mxu0 0
      %791 = vmatpush1.bf16.msra.mxu0 0
      %792 = vmatprep.subr.bf16.mxu0 0
      %793 = vmatpush1.bf16.msra.mxu0 0
      %794 = vmatprep.mubr.bf16.mxu0 0
      %795 = vmatmul.mubr.bf16.gmra.mrb[0].mxu0 %v757
      %v796 = vpop.f32.mrb[0].mxu0
      %v797 = vadd.f32 0.0, %v796
      %v798 = vpop.f32.mrb[0].mxu0
      %v799 = vpop.f32.mrb[0].mxu0
      %v800 = vadd.f32 0.0, %v799
      %v801 = vpop.f32.mrb[0].mxu0
      %802 = vdwg.mxu0
      %v803 = vadd.f32 %v741, %v797
      %v804 = vadd.f32 %v742, %v800
      %vm805 = vcmask 1045504
      %v806 = vrot.slane %v581, 2
      %v807 = vrot.slane %v687, 2
      %v808 = vsel %vm805, %v806, %v807
      %v810 = vsel %vm589, %v808, 0
      %v813 = vand.u32 %v533, %v596
      %815 = vmatprep.subr.bf16.mxu0 0
      %816 = vmatpush1.bf16.msra.mxu0 %v813
      %817 = vmatprep.subr.bf16.mxu0 0
      %818 = vmatpush1.bf16.msra.mxu0 0
      %819 = vmatprep.subr.bf16.mxu0 0
      %820 = vmatpush1.bf16.msra.mxu0 0
      %821 = vmatprep.subr.bf16.mxu0 0
      %822 = vmatpush1.bf16.msra.mxu0 0
      %823 = vmatprep.subr.bf16.mxu0 0
      %824 = vmatpush1.bf16.msra.mxu0 0
      %825 = vmatprep.subr.bf16.mxu0 0
      %826 = vmatpush1.bf16.msra.mxu0 0
      %827 = vmatprep.subr.bf16.mxu0 0
      %828 = vmatpush1.bf16.msra.mxu0 0
      %829 = vmatprep.subr.bf16.mxu0 0
      %830 = vmatpush1.bf16.msra.mxu0 0
      %831 = vmatprep.subr.bf16.mxu0 0
      %832 = vmatpush1.bf16.msra.mxu0 0
      %833 = vmatprep.subr.bf16.mxu0 0
      %834 = vmatpush1.bf16.msra.mxu0 0
      %835 = vmatprep.subr.bf16.mxu0 0
      %836 = vmatpush1.bf16.msra.mxu0 0
      %837 = vmatprep.subr.bf16.mxu0 0
      %838 = vmatpush1.bf16.msra.mxu0 0
      %839 = vmatprep.subr.bf16.mxu0 0
      %840 = vmatpush1.bf16.msra.mxu0 0
      %841 = vmatprep.subr.bf16.mxu0 0
      %842 = vmatpush1.bf16.msra.mxu0 0
      %843 = vmatprep.subr.bf16.mxu0 0
      %844 = vmatpush1.bf16.msra.mxu0 0
      %845 = vmatprep.subr.bf16.mxu0 0
      %846 = vmatpush1.bf16.msra.mxu0 0
      %847 = vmatprep.mubr.bf16.mxu0 0
      %848 = vmatmul.mubr.bf16.gmra.mrb[0].mxu0 %v810
      %v849 = vpop.f32.mrb[0].mxu0
      %v850 = vadd.f32 0.0, %v849
      %v851 = vpop.f32.mrb[0].mxu0
      %v852 = vpop.f32.mrb[0].mxu0
      %v853 = vadd.f32 0.0, %v852
      %v854 = vpop.f32.mrb[0].mxu0
      %855 = vdwg.mxu0
      %v856 = vadd.f32 %v803, %v850
      %v857 = vadd.f32 %v804, %v853
      %vm858 = vsmask.f32 5376
      %v859 = vrot.slane %v583, 2
      %v860 = vrot.slane %v585, 3
      %v861 = vor.u32 %v859, %v860
      %v862 = vrot.slane %v748, 2
      %v863 = vrot.slane %v751, 3
      %v864 = vor.u32 %v862, %v863
      %v865 = vsel %vm858, %v861, %v864
      %v867 = vsel %vm589, %v865, 0
      %v870 = vand.u32 %v534, %v596
      %872 = vmatprep.subr.bf16.mxu0 0
      %873 = vmatpush1.bf16.msra.mxu0 %v870
      %874 = vmatprep.subr.bf16.mxu0 0
      %875 = vmatpush1.bf16.msra.mxu0 0
      %876 = vmatprep.subr.bf16.mxu0 0
      %877 = vmatpush1.bf16.msra.mxu0 0
      %878 = vmatprep.subr.bf16.mxu0 0
      %879 = vmatpush1.bf16.msra.mxu0 0
      %880 = vmatprep.subr.bf16.mxu0 0
      %881 = vmatpush1.bf16.msra.mxu0 0
      %882 = vmatprep.subr.bf16.mxu0 0
      %883 = vmatpush1.bf16.msra.mxu0 0
      %884 = vmatprep.subr.bf16.mxu0 0
      %885 = vmatpush1.bf16.msra.mxu0 0
      %886 = vmatprep.subr.bf16.mxu0 0
      %887 = vmatpush1.bf16.msra.mxu0 0
      %888 = vmatprep.subr.bf16.mxu0 0
      %889 = vmatpush1.bf16.msra.mxu0 0
      %890 = vmatprep.subr.bf16.mxu0 0
      %891 = vmatpush1.bf16.msra.mxu0 0
      %892 = vmatprep.subr.bf16.mxu0 0
      %893 = vmatpush1.bf16.msra.mxu0 0
      %894 = vmatprep.subr.bf16.mxu0 0
      %895 = vmatpush1.bf16.msra.mxu0 0
      %896 = vmatprep.subr.bf16.mxu0 0
      %897 = vmatpush1.bf16.msra.mxu0 0
      %898 = vmatprep.subr.bf16.mxu0 0
      %899 = vmatpush1.bf16.msra.mxu0 0
      %900 = vmatprep.subr.bf16.mxu0 0
      %901 = vmatpush1.bf16.msra.mxu0 0
      %902 = vmatprep.subr.bf16.mxu0 0
      %903 = vmatpush1.bf16.msra.mxu0 0
      %904 = vmatprep.mubr.bf16.mxu0 0
      %905 = vmatmul.mubr.bf16.gmra.mrb[0].mxu0 %v867
      %v906 = vpop.f32.mrb[0].mxu0
      %v907 = vadd.f32 0.0, %v906
      %v908 = vpop.f32.mrb[0].mxu0
      %v909 = vpop.f32.mrb[0].mxu0
      %v910 = vadd.f32 0.0, %v909
      %v911 = vpop.f32.mrb[0].mxu0
      %912 = vdwg.mxu0
      %v913 = vadd.f32 %v856, %v907
      %v914 = vadd.f32 %v857, %v910
      %v915 = vmax.f32 %v913, 0.0
      %v916 = vmax.f32 %v914, 0.0
      %v917 = vpack.c.bf16 %v916, %v915
      %v919 = vshrl.u32 %v917, 16
      %v921 = vshll.u32 %v917, 16
      %v923 = vrot.slane %v921, 1
      %v924 = vor.u32 %v919, %v923
      %v929 = vunpack.c.l.b16 %v539
      %v930 = vunpack.c.l.b16 %v540
      %v931 = vunpack.c.l.b16 %v541
      %v932 = vunpack.c.l.b16 %v542
      %v933 = vpack.c.b16 %v930, %v929
      %v934 = vpack.c.b16 %v932, %v931
      %vm937 = vcmask 261120
      %v939 = vsel %vm937, %v924, 0
      %941 = vmatprep.subr.bf16.mxu0 0
      %942 = vmatpush1.bf16.msra.mxu0 %v933
      %943 = vmatprep.subr.bf16.mxu0 0
      %944 = vmatpush1.bf16.msra.mxu0 %v934
      %945 = vmatprep.subr.bf16.mxu0 0
      %946 = vmatpush1.bf16.msra.mxu0 0
      %947 = vmatprep.subr.bf16.mxu0 0
      %948 = vmatpush1.bf16.msra.mxu0 0
      %949 = vmatprep.subr.bf16.mxu0 0
      %950 = vmatpush1.bf16.msra.mxu0 0
      %951 = vmatprep.subr.bf16.mxu0 0
      %952 = vmatpush1.bf16.msra.mxu0 0
      %953 = vmatprep.subr.bf16.mxu0 0
      %954 = vmatpush1.bf16.msra.mxu0 0
      %955 = vmatprep.subr.bf16.mxu0 0
      %956 = vmatpush1.bf16.msra.mxu0 0
      %957 = vmatprep.subr.bf16.mxu0 0
      %958 = vmatpush1.bf16.msra.mxu0 0
      %959 = vmatprep.subr.bf16.mxu0 0
      %960 = vmatpush1.bf16.msra.mxu0 0
      %961 = vmatprep.subr.bf16.mxu0 0
      %962 = vmatpush1.bf16.msra.mxu0 0
      %963 = vmatprep.subr.bf16.mxu0 0
      %964 = vmatpush1.bf16.msra.mxu0 0
      %965 = vmatprep.subr.bf16.mxu0 0
      %966 = vmatpush1.bf16.msra.mxu0 0
      %967 = vmatprep.subr.bf16.mxu0 0
      %968 = vmatpush1.bf16.msra.mxu0 0
      %969 = vmatprep.subr.bf16.mxu0 0
      %970 = vmatpush1.bf16.msra.mxu0 0
      %971 = vmatprep.subr.bf16.mxu0 0
      %972 = vmatpush1.bf16.msra.mxu0 0
      %973 = vmatprep.mubr.bf16.mxu0 0
      %974 = vmatmul.mubr.bf16.gmra.mrb[0].mxu0 %v939
      %v975 = vpop.f32.mrb[0].mxu0
      %v976 = vadd.f32 0.0, %v975
      %v977 = vpop.f32.mrb[0].mxu0
      %v978 = vpop.f32.mrb[0].mxu0
      %v979 = vadd.f32 0.0, %v978
      %v980 = vpop.f32.mrb[0].mxu0
      %981 = vdwg.mxu0
      %v986 = vunpack.c.l.b16 %v535
      %v987 = vunpack.c.l.b16 %v536
      %v988 = vunpack.c.l.b16 %v537
      %v989 = vunpack.c.l.b16 %v538
      %v990 = vpack.c.b16 %v987, %v986
      %v991 = vpack.c.b16 %v989, %v988
      %v994 = vsel %vm937, %v917, 0
      %996 = vmatprep.subr.bf16.mxu0 0
      %997 = vmatpush1.bf16.msra.mxu0 %v990
      %998 = vmatprep.subr.bf16.mxu0 0
      %999 = vmatpush1.bf16.msra.mxu0 %v991
      %1000 = vmatprep.subr.bf16.mxu0 0
      %1001 = vmatpush1.bf16.msra.mxu0 0
      %1002 = vmatprep.subr.bf16.mxu0 0
      %1003 = vmatpush1.bf16.msra.mxu0 0
      %1004 = vmatprep.subr.bf16.mxu0 0
      %1005 = vmatpush1.bf16.msra.mxu0 0
      %1006 = vmatprep.subr.bf16.mxu0 0
      %1007 = vmatpush1.bf16.msra.mxu0 0
      %1008 = vmatprep.subr.bf16.mxu0 0
      %1009 = vmatpush1.bf16.msra.mxu0 0
      %1010 = vmatprep.subr.bf16.mxu0 0
      %1011 = vmatpush1.bf16.msra.mxu0 0
      %1012 = vmatprep.subr.bf16.mxu0 0
      %1013 = vmatpush1.bf16.msra.mxu0 0
      %1014 = vmatprep.subr.bf16.mxu0 0
      %1015 = vmatpush1.bf16.msra.mxu0 0
      %1016 = vmatprep.subr.bf16.mxu0 0
      %1017 = vmatpush1.bf16.msra.mxu0 0
      %1018 = vmatprep.subr.bf16.mxu0 0
      %1019 = vmatpush1.bf16.msra.mxu0 0
      %1020 = vmatprep.subr.bf16.mxu0 0
      %1021 = vmatpush1.bf16.msra.mxu0 0
      %1022 = vmatprep.subr.bf16.mxu0 0
      %1023 = vmatpush1.bf16.msra.mxu0 0
      %1024 = vmatprep.subr.bf16.mxu0 0
      %1025 = vmatpush1.bf16.msra.mxu0 0
      %1026 = vmatprep.subr.bf16.mxu0 0
      %1027 = vmatpush1.bf16.msra.mxu0 0
      %1028 = vmatprep.mubr.bf16.mxu0 0
      %1029 = vmatmul.mubr.bf16.gmra.mrb[0].mxu0 %v994
      %v1030 = vpop.f32.mrb[0].mxu0
      %v1031 = vadd.f32 %v976, %v1030
      %v1032 = vpop.f32.mrb[0].mxu0
      %v1033 = vpop.f32.mrb[0].mxu0
      %v1034 = vadd.f32 %v979, %v1033
      %v1035 = vpop.f32.mrb[0].mxu0
      %1036 = vdwg.mxu0
      %v1038 = vrot.slane %v917, 1
      %v1043 = vunpack.c.l.b16 %v543
      %v1044 = vunpack.c.l.b16 %v544
      %v1045 = vunpack.c.l.b16 %v545
      %v1046 = vunpack.c.l.b16 %v546
      %v1047 = vpack.c.b16 %v1044, %v1043
      %v1048 = vpack.c.b16 %v1046, %v1045
      %v1052 = vsel %vm937, %v1038, 0
      %1054 = vmatprep.subr.bf16.mxu0 0
      %1055 = vmatpush1.bf16.msra.mxu0 %v1047
      %1056 = vmatprep.subr.bf16.mxu0 0
      %1057 = vmatpush1.bf16.msra.mxu0 %v1048
      %1058 = vmatprep.subr.bf16.mxu0 0
      %1059 = vmatpush1.bf16.msra.mxu0 0
      %1060 = vmatprep.subr.bf16.mxu0 0
      %1061 = vmatpush1.bf16.msra.mxu0 0
      %1062 = vmatprep.subr.bf16.mxu0 0
      %1063 = vmatpush1.bf16.msra.mxu0 0
      %1064 = vmatprep.subr.bf16.mxu0 0
      %1065 = vmatpush1.bf16.msra.mxu0 0
      %1066 = vmatprep.subr.bf16.mxu0 0
      %1067 = vmatpush1.bf16.msra.mxu0 0
      %1068 = vmatprep.subr.bf16.mxu0 0
      %1069 = vmatpush1.bf16.msra.mxu0 0
      %1070 = vmatprep.subr.bf16.mxu0 0
      %1071 = vmatpush1.bf16.msra.mxu0 0
      %1072 = vmatprep.subr.bf16.mxu0 0
      %1073 = vmatpush1.bf16.msra.mxu0 0
      %1074 = vmatprep.subr.bf16.mxu0 0
      %1075 = vmatpush1.bf16.msra.mxu0 0
      %1076 = vmatprep.subr.bf16.mxu0 0
      %1077 = vmatpush1.bf16.msra.mxu0 0
      %1078 = vmatprep.subr.bf16.mxu0 0
      %1079 = vmatpush1.bf16.msra.mxu0 0
      %1080 = vmatprep.subr.bf16.mxu0 0
      %1081 = vmatpush1.bf16.msra.mxu0 0
      %1082 = vmatprep.subr.bf16.mxu0 0
      %1083 = vmatpush1.bf16.msra.mxu0 0
      %1084 = vmatprep.subr.bf16.mxu0 0
      %1085 = vmatpush1.bf16.msra.mxu0 0
      %1086 = vmatprep.mubr.bf16.mxu0 0
      %1087 = vmatmul.mubr.bf16.gmra.mrb[0].mxu0 %v1052
      %v1088 = vpop.f32.mrb[0].mxu0
      %v1089 = vadd.f32 0.0, %v1088
      %v1090 = vpop.f32.mrb[0].mxu0
      %v1091 = vpop.f32.mrb[0].mxu0
      %v1092 = vadd.f32 0.0, %v1091
      %v1093 = vpop.f32.mrb[0].mxu0
      %1094 = vdwg.mxu0
      %v1095 = vadd.f32 %v1031, %v1089
      %v1096 = vadd.f32 %v1034, %v1092
      %v1097 = vrot.slane %v919, 1
      %v1098 = vrot.slane %v921, 2
      %v1099 = vor.u32 %v1097, %v1098
      %v1104 = vunpack.c.l.b16 %v547
      %v1105 = vunpack.c.l.b16 %v548
      %v1106 = vunpack.c.l.b16 %v549
      %v1107 = vunpack.c.l.b16 %v550
      %v1108 = vpack.c.b16 %v1105, %v1104
      %v1109 = vpack.c.b16 %v1107, %v1106
      %v1113 = vsel %vm937, %v1099, 0
      %1115 = vmatprep.subr.bf16.mxu0 0
      %1116 = vmatpush1.bf16.msra.mxu0 %v1108
      %1117 = vmatprep.subr.bf16.mxu0 0
      %1118 = vmatpush1.bf16.msra.mxu0 %v1109
      %1119 = vmatprep.subr.bf16.mxu0 0
      %1120 = vmatpush1.bf16.msra.mxu0 0
      %1121 = vmatprep.subr.bf16.mxu0 0
      %1122 = vmatpush1.bf16.msra.mxu0 0
      %1123 = vmatprep.subr.bf16.mxu0 0
      %1124 = vmatpush1.bf16.msra.mxu0 0
      %1125 = vmatprep.subr.bf16.mxu0 0
      %1126 = vmatpush1.bf16.msra.mxu0 0
      %1127 = vmatprep.subr.bf16.mxu0 0
      %1128 = vmatpush1.bf16.msra.mxu0 0
      %1129 = vmatprep.subr.bf16.mxu0 0
      %1130 = vmatpush1.bf16.msra.mxu0 0
      %1131 = vmatprep.subr.bf16.mxu0 0
      %1132 = vmatpush1.bf16.msra.mxu0 0
      %1133 = vmatprep.subr.bf16.mxu0 0
      %1134 = vmatpush1.bf16.msra.mxu0 0
      %1135 = vmatprep.subr.bf16.mxu0 0
      %1136 = vmatpush1.bf16.msra.mxu0 0
      %1137 = vmatprep.subr.bf16.mxu0 0
      %1138 = vmatpush1.bf16.msra.mxu0 0
      %1139 = vmatprep.subr.bf16.mxu0 0
      %1140 = vmatpush1.bf16.msra.mxu0 0
      %1141 = vmatprep.subr.bf16.mxu0 0
      %1142 = vmatpush1.bf16.msra.mxu0 0
      %1143 = vmatprep.subr.bf16.mxu0 0
      %1144 = vmatpush1.bf16.msra.mxu0 0
      %1145 = vmatprep.subr.bf16.mxu0 0
      %1146 = vmatpush1.bf16.msra.mxu0 0
      %1147 = vmatprep.mubr.bf16.mxu0 0
      %1148 = vmatmul.mubr.bf16.gmra.mrb[0].mxu0 %v1113
      %v1149 = vpop.f32.mrb[0].mxu0
      %v1150 = vadd.f32 0.0, %v1149
      %v1151 = vpop.f32.mrb[0].mxu0
      %v1152 = vpop.f32.mrb[0].mxu0
      %v1153 = vadd.f32 0.0, %v1152
      %v1154 = vpop.f32.mrb[0].mxu0
      %1155 = vdwg.mxu0
      %v1156 = vadd.f32 %v1095, %v1150
      %v1157 = vadd.f32 %v1096, %v1153
      %v1158 = vrot.slane %v917, 2
      %v1163 = vunpack.c.l.b16 %v551
      %v1164 = vunpack.c.l.b16 %v552
      %v1165 = vunpack.c.l.b16 %v553
      %v1166 = vunpack.c.l.b16 %v554
      %v1167 = vpack.c.b16 %v1164, %v1163
      %v1168 = vpack.c.b16 %v1166, %v1165
      %v1172 = vsel %vm937, %v1158, 0
      %1174 = vmatprep.subr.bf16.mxu0 0
      %1175 = vmatpush1.bf16.msra.mxu0 %v1167
      %1176 = vmatprep.subr.bf16.mxu0 0
      %1177 = vmatpush1.bf16.msra.mxu0 %v1168
      %1178 = vmatprep.subr.bf16.mxu0 0
      %1179 = vmatpush1.bf16.msra.mxu0 0
      %1180 = vmatprep.subr.bf16.mxu0 0
      %1181 = vmatpush1.bf16.msra.mxu0 0
      %1182 = vmatprep.subr.bf16.mxu0 0
      %1183 = vmatpush1.bf16.msra.mxu0 0
      %1184 = vmatprep.subr.bf16.mxu0 0
      %1185 = vmatpush1.bf16.msra.mxu0 0
      %1186 = vmatprep.subr.bf16.mxu0 0
      %1187 = vmatpush1.bf16.msra.mxu0 0
      %1188 = vmatprep.subr.bf16.mxu0 0
      %1189 = vmatpush1.bf16.msra.mxu0 0
      %1190 = vmatprep.subr.bf16.mxu0 0
      %1191 = vmatpush1.bf16.msra.mxu0 0
      %1192 = vmatprep.subr.bf16.mxu0 0
      %1193 = vmatpush1.bf16.msra.mxu0 0
      %1194 = vmatprep.subr.bf16.mxu0 0
      %1195 = vmatpush1.bf16.msra.mxu0 0
      %1196 = vmatprep.subr.bf16.mxu0 0
      %1197 = vmatpush1.bf16.msra.mxu0 0
      %1198 = vmatprep.subr.bf16.mxu0 0
      %1199 = vmatpush1.bf16.msra.mxu0 0
      %1200 = vmatprep.subr.bf16.mxu0 0
      %1201 = vmatpush1.bf16.msra.mxu0 0
      %1202 = vmatprep.subr.bf16.mxu0 0
      %1203 = vmatpush1.bf16.msra.mxu0 0
      %1204 = vmatprep.subr.bf16.mxu0 0
      %1205 = vmatpush1.bf16.msra.mxu0 0
      %1206 = vmatprep.mubr.bf16.mxu0 0
      %1207 = vmatmul.mubr.bf16.gmra.mrb[0].mxu0 %v1172
      %v1208 = vpop.f32.mrb[0].mxu0
      %v1209 = vadd.f32 0.0, %v1208
      %v1210 = vpop.f32.mrb[0].mxu0
      %v1211 = vpop.f32.mrb[0].mxu0
      %v1212 = vadd.f32 0.0, %v1211
      %v1213 = vpop.f32.mrb[0].mxu0
      %1214 = vdwg.mxu0
      %v1215 = vadd.f32 %v1156, %v1209
      %v1216 = vadd.f32 %v1157, %v1212
      %v1217 = vmax.f32 %v1215, 0.0
      %v1218 = vmax.f32 %v1216, 0.0
      %v1219 = vpack.c.bf16 %v444, %v444
      %v1221 = vshrl.u32 %v1219, 16
      %v1223 = vshll.u32 %v1219, 16
      %v1225 = vrot.slane %v1223, 1
      %v1226 = vor.u32 %v1221, %v1225
      %v1228 = vsel %vm589, %v1226, 0
      %v1231 = vand.u32 %v556, %v596
      %1233 = vmatprep.subr.bf16.mxu0 0
      %1234 = vmatpush1.bf16.msra.mxu0 %v1231
      %1235 = vmatprep.subr.bf16.mxu0 0
      %1236 = vmatpush1.bf16.msra.mxu0 0
      %1237 = vmatprep.subr.bf16.mxu0 0
      %1238 = vmatpush1.bf16.msra.mxu0 0
      %1239 = vmatprep.subr.bf16.mxu0 0
      %1240 = vmatpush1.bf16.msra.mxu0 0
      %1241 = vmatprep.subr.bf16.mxu0 0
      %1242 = vmatpush1.bf16.msra.mxu0 0
      %1243 = vmatprep.subr.bf16.mxu0 0
      %1244 = vmatpush1.bf16.msra.mxu0 0
      %1245 = vmatprep.subr.bf16.mxu0 0
      %1246 = vmatpush1.bf16.msra.mxu0 0
      %1247 = vmatprep.subr.bf16.mxu0 0
      %1248 = vmatpush1.bf16.msra.mxu0 0
      %1249 = vmatprep.subr.bf16.mxu0 0
      %1250 = vmatpush1.bf16.msra.mxu0 0
      %1251 = vmatprep.subr.bf16.mxu0 0
      %1252 = vmatpush1.bf16.msra.mxu0 0
      %1253 = vmatprep.subr.bf16.mxu0 0
      %1254 = vmatpush1.bf16.msra.mxu0 0
      %1255 = vmatprep.subr.bf16.mxu0 0
      %1256 = vmatpush1.bf16.msra.mxu0 0
      %1257 = vmatprep.subr.bf16.mxu0 0
      %1258 = vmatpush1.bf16.msra.mxu0 0
      %1259 = vmatprep.subr.bf16.mxu0 0
      %1260 = vmatpush1.bf16.msra.mxu0 0
      %1261 = vmatprep.subr.bf16.mxu0 0
      %1262 = vmatpush1.bf16.msra.mxu0 0
      %1263 = vmatprep.subr.bf16.mxu0 0
      %1264 = vmatpush1.bf16.msra.mxu0 0
      %1265 = vmatprep.mubr.bf16.mxu0 0
      %1266 = vmatmul.mubr.bf16.gmra.mrb[0].mxu0 %v1228
      %v1267 = vpop.f32.mrb[0].mxu0
      %v1268 = vadd.f32 0.0, %v1267
      %v1269 = vpop.f32.mrb[0].mxu0
      %v1270 = vpop.f32.mrb[0].mxu0
      %v1271 = vpop.f32.mrb[0].mxu0
      %1272 = vdwg.mxu0
      %v1273 = vsel %vm589, %v1219, 0
      %v1276 = vand.u32 %v555, %v596
      %1278 = vmatprep.subr.bf16.mxu0 0
      %1279 = vmatpush1.bf16.msra.mxu0 %v1276
      %1280 = vmatprep.subr.bf16.mxu0 0
      %1281 = vmatpush1.bf16.msra.mxu0 0
      %1282 = vmatprep.subr.bf16.mxu0 0
      %1283 = vmatpush1.bf16.msra.mxu0 0
      %1284 = vmatprep.subr.bf16.mxu0 0
      %1285 = vmatpush1.bf16.msra.mxu0 0
      %1286 = vmatprep.subr.bf16.mxu0 0
      %1287 = vmatpush1.bf16.msra.mxu0 0
      %1288 = vmatprep.subr.bf16.mxu0 0
      %1289 = vmatpush1.bf16.msra.mxu0 0
      %1290 = vmatprep.subr.bf16.mxu0 0
      %1291 = vmatpush1.bf16.msra.mxu0 0
      %1292 = vmatprep.subr.bf16.mxu0 0
      %1293 = vmatpush1.bf16.msra.mxu0 0
      %1294 = vmatprep.subr.bf16.mxu0 0
      %1295 = vmatpush1.bf16.msra.mxu0 0
      %1296 = vmatprep.subr.bf16.mxu0 0
      %1297 = vmatpush1.bf16.msra.mxu0 0
      %1298 = vmatprep.subr.bf16.mxu0 0
      %1299 = vmatpush1.bf16.msra.mxu0 0
      %1300 = vmatprep.subr.bf16.mxu0 0
      %1301 = vmatpush1.bf16.msra.mxu0 0
      %1302 = vmatprep.subr.bf16.mxu0 0
      %1303 = vmatpush1.bf16.msra.mxu0 0
      %1304 = vmatprep.subr.bf16.mxu0 0
      %1305 = vmatpush1.bf16.msra.mxu0 0
      %1306 = vmatprep.subr.bf16.mxu0 0
      %1307 = vmatpush1.bf16.msra.mxu0 0
      %1308 = vmatprep.subr.bf16.mxu0 0
      %1309 = vmatpush1.bf16.msra.mxu0 0
      %1310 = vmatprep.mubr.bf16.mxu0 0
      %1311 = vmatmul.mubr.bf16.gmra.mrb[0].mxu0 %v1273
      %v1312 = vpop.f32.mrb[0].mxu0
      %v1313 = vadd.f32 %v1268, %v1312
      %v1314 = vpop.f32.mrb[0].mxu0
      %v1315 = vpop.f32.mrb[0].mxu0
      %v1316 = vpop.f32.mrb[0].mxu0
      %1317 = vdwg.mxu0
      %v1319 = vrot.slane %v1219, 1
      %v1321 = vsel %vm589, %v1319, 0
      %v1324 = vand.u32 %v557, %v596
      %1326 = vmatprep.subr.bf16.mxu0 0
      %1327 = vmatpush1.bf16.msra.mxu0 %v1324
      %1328 = vmatprep.subr.bf16.mxu0 0
      %1329 = vmatpush1.bf16.msra.mxu0 0
      %1330 = vmatprep.subr.bf16.mxu0 0
      %1331 = vmatpush1.bf16.msra.mxu0 0
      %1332 = vmatprep.subr.bf16.mxu0 0
      %1333 = vmatpush1.bf16.msra.mxu0 0
      %1334 = vmatprep.subr.bf16.mxu0 0
      %1335 = vmatpush1.bf16.msra.mxu0 0
      %1336 = vmatprep.subr.bf16.mxu0 0
      %1337 = vmatpush1.bf16.msra.mxu0 0
      %1338 = vmatprep.subr.bf16.mxu0 0
      %1339 = vmatpush1.bf16.msra.mxu0 0
      %1340 = vmatprep.subr.bf16.mxu0 0
      %1341 = vmatpush1.bf16.msra.mxu0 0
      %1342 = vmatprep.subr.bf16.mxu0 0
      %1343 = vmatpush1.bf16.msra.mxu0 0
      %1344 = vmatprep.subr.bf16.mxu0 0
      %1345 = vmatpush1.bf16.msra.mxu0 0
      %1346 = vmatprep.subr.bf16.mxu0 0
      %1347 = vmatpush1.bf16.msra.mxu0 0
      %1348 = vmatprep.subr.bf16.mxu0 0
      %1349 = vmatpush1.bf16.msra.mxu0 0
      %1350 = vmatprep.subr.bf16.mxu0 0
      %1351 = vmatpush1.bf16.msra.mxu0 0
      %1352 = vmatprep.subr.bf16.mxu0 0
      %1353 = vmatpush1.bf16.msra.mxu0 0
      %1354 = vmatprep.subr.bf16.mxu0 0
      %1355 = vmatpush1.bf16.msra.mxu0 0
      %1356 = vmatprep.subr.bf16.mxu0 0
      %1357 = vmatpush1.bf16.msra.mxu0 0
      %1358 = vmatprep.mubr.bf16.mxu0 0
      %1359 = vmatmul.mubr.bf16.gmra.mrb[0].mxu0 %v1321
      %v1360 = vpop.f32.mrb[0].mxu0
      %v1361 = vadd.f32 0.0, %v1360
      %v1362 = vpop.f32.mrb[0].mxu0
      %v1363 = vpop.f32.mrb[0].mxu0
      %v1364 = vpop.f32.mrb[0].mxu0
      %1365 = vdwg.mxu0
      %v1366 = vadd.f32 %v1313, %v1361
      %v1367 = vrot.slane %v1221, 1
      %v1368 = vrot.slane %v1223, 2
      %v1369 = vor.u32 %v1367, %v1368
      %v1371 = vsel %vm589, %v1369, 0
      %v1374 = vand.u32 %v558, %v596
      %1376 = vmatprep.subr.bf16.mxu0 0
      %1377 = vmatpush1.bf16.msra.mxu0 %v1374
      %1378 = vmatprep.subr.bf16.mxu0 0
      %1379 = vmatpush1.bf16.msra.mxu0 0
      %1380 = vmatprep.subr.bf16.mxu0 0
      %1381 = vmatpush1.bf16.msra.mxu0 0
      %1382 = vmatprep.subr.bf16.mxu0 0
      %1383 = vmatpush1.bf16.msra.mxu0 0
      %1384 = vmatprep.subr.bf16.mxu0 0
      %1385 = vmatpush1.bf16.msra.mxu0 0
      %1386 = vmatprep.subr.bf16.mxu0 0
      %1387 = vmatpush1.bf16.msra.mxu0 0
      %1388 = vmatprep.subr.bf16.mxu0 0
      %1389 = vmatpush1.bf16.msra.mxu0 0
      %1390 = vmatprep.subr.bf16.mxu0 0
      %1391 = vmatpush1.bf16.msra.mxu0 0
      %1392 = vmatprep.subr.bf16.mxu0 0
      %1393 = vmatpush1.bf16.msra.mxu0 0
      %1394 = vmatprep.subr.bf16.mxu0 0
      %1395 = vmatpush1.bf16.msra.mxu0 0
      %1396 = vmatprep.subr.bf16.mxu0 0
      %1397 = vmatpush1.bf16.msra.mxu0 0
      %1398 = vmatprep.subr.bf16.mxu0 0
      %1399 = vmatpush1.bf16.msra.mxu0 0
      %1400 = vmatprep.subr.bf16.mxu0 0
      %1401 = vmatpush1.bf16.msra.mxu0 0
      %1402 = vmatprep.subr.bf16.mxu0 0
      %1403 = vmatpush1.bf16.msra.mxu0 0
      %1404 = vmatprep.subr.bf16.mxu0 0
      %1405 = vmatpush1.bf16.msra.mxu0 0
      %1406 = vmatprep.subr.bf16.mxu0 0
      %1407 = vmatpush1.bf16.msra.mxu0 0
      %1408 = vmatprep.mubr.bf16.mxu0 0
      %1409 = vmatmul.mubr.bf16.gmra.mrb[0].mxu0 %v1371
      %v1410 = vpop.f32.mrb[0].mxu0
      %v1411 = vadd.f32 0.0, %v1410
      %v1412 = vpop.f32.mrb[0].mxu0
      %v1413 = vpop.f32.mrb[0].mxu0
      %v1414 = vpop.f32.mrb[0].mxu0
      %1415 = vdwg.mxu0
      %v1416 = vadd.f32 %v1366, %v1411
      %v1417 = vpack.c.bf16 %v445, %v444
      %v1419 = vrot.slane %v1417, 2
      %v1421 = vsel %vm589, %v1419, 0
      %v1424 = vand.u32 %v559, %v596
      %1426 = vmatprep.subr.bf16.mxu0 0
      %1427 = vmatpush1.bf16.msra.mxu0 %v1424
      %1428 = vmatprep.subr.bf16.mxu0 0
      %1429 = vmatpush1.bf16.msra.mxu0 0
      %1430 = vmatprep.subr.bf16.mxu0 0
      %1431 = vmatpush1.bf16.msra.mxu0 0
      %1432 = vmatprep.subr.bf16.mxu0 0
      %1433 = vmatpush1.bf16.msra.mxu0 0
      %1434 = vmatprep.subr.bf16.mxu0 0
      %1435 = vmatpush1.bf16.msra.mxu0 0
      %1436 = vmatprep.subr.bf16.mxu0 0
      %1437 = vmatpush1.bf16.msra.mxu0 0
      %1438 = vmatprep.subr.bf16.mxu0 0
      %1439 = vmatpush1.bf16.msra.mxu0 0
      %1440 = vmatprep.subr.bf16.mxu0 0
      %1441 = vmatpush1.bf16.msra.mxu0 0
      %1442 = vmatprep.subr.bf16.mxu0 0
      %1443 = vmatpush1.bf16.msra.mxu0 0
      %1444 = vmatprep.subr.bf16.mxu0 0
      %1445 = vmatpush1.bf16.msra.mxu0 0
      %1446 = vmatprep.subr.bf16.mxu0 0
      %1447 = vmatpush1.bf16.msra.mxu0 0
      %1448 = vmatprep.subr.bf16.mxu0 0
      %1449 = vmatpush1.bf16.msra.mxu0 0
      %1450 = vmatprep.subr.bf16.mxu0 0
      %1451 = vmatpush1.bf16.msra.mxu0 0
      %1452 = vmatprep.subr.bf16.mxu0 0
      %1453 = vmatpush1.bf16.msra.mxu0 0
      %1454 = vmatprep.subr.bf16.mxu0 0
      %1455 = vmatpush1.bf16.msra.mxu0 0
      %1456 = vmatprep.subr.bf16.mxu0 0
      %1457 = vmatpush1.bf16.msra.mxu0 0
      %1458 = vmatprep.mubr.bf16.mxu0 0
      %1459 = vmatmul.mubr.bf16.gmra.mrb[0].mxu0 %v1421
      %v1460 = vpop.f32.mrb[0].mxu0
      %v1461 = vadd.f32 0.0, %v1460
      %v1462 = vpop.f32.mrb[0].mxu0
      %v1463 = vpop.f32.mrb[0].mxu0
      %v1464 = vpop.f32.mrb[0].mxu0
      %1465 = vdwg.mxu0
      %v1466 = vadd.f32 %v1416, %v1461
      %v1468 = vshrl.u32 %v1417, 16
      %v1470 = vrot.slane %v1468, 2
      %v1471 = vshll.u32 %v1417, 16
      %v1473 = vrot.slane %v1471, 3
      %v1474 = vor.u32 %v1470, %v1473
      %v1476 = vsel %vm589, %v1474, 0
      %v1479 = vand.u32 %v560, %v596
      %1481 = vmatprep.subr.bf16.mxu0 0
      %1482 = vmatpush1.bf16.msra.mxu0 %v1479
      %1483 = vmatprep.subr.bf16.mxu0 0
      %1484 = vmatpush1.bf16.msra.mxu0 0
      %1485 = vmatprep.subr.bf16.mxu0 0
      %1486 = vmatpush1.bf16.msra.mxu0 0
      %1487 = vmatprep.subr.bf16.mxu0 0
      %1488 = vmatpush1.bf16.msra.mxu0 0
      %1489 = vmatprep.subr.bf16.mxu0 0
      %1490 = vmatpush1.bf16.msra.mxu0 0
      %1491 = vmatprep.subr.bf16.mxu0 0
      %1492 = vmatpush1.bf16.msra.mxu0 0
      %1493 = vmatprep.subr.bf16.mxu0 0
      %1494 = vmatpush1.bf16.msra.mxu0 0
      %1495 = vmatprep.subr.bf16.mxu0 0
      %1496 = vmatpush1.bf16.msra.mxu0 0
      %1497 = vmatprep.subr.bf16.mxu0 0
      %1498 = vmatpush1.bf16.msra.mxu0 0
      %1499 = vmatprep.subr.bf16.mxu0 0
      %1500 = vmatpush1.bf16.msra.mxu0 0
      %1501 = vmatprep.subr.bf16.mxu0 0
      %1502 = vmatpush1.bf16.msra.mxu0 0
      %1503 = vmatprep.subr.bf16.mxu0 0
      %1504 = vmatpush1.bf16.msra.mxu0 0
      %1505 = vmatprep.subr.bf16.mxu0 0
      %1506 = vmatpush1.bf16.msra.mxu0 0
      %1507 = vmatprep.subr.bf16.mxu0 0
      %1508 = vmatpush1.bf16.msra.mxu0 0
      %1509 = vmatprep.subr.bf16.mxu0 0
      %1510 = vmatpush1.bf16.msra.mxu0 0
      %1511 = vmatprep.subr.bf16.mxu0 0
      %1512 = vmatpush1.bf16.msra.mxu0 0
      %1513 = vmatprep.mubr.bf16.mxu0 0
      %1514 = vmatmul.mubr.bf16.gmra.mrb[0].mxu0 %v1476
      %v1515 = vpop.f32.mrb[0].mxu0
      %v1516 = vadd.f32 0.0, %v1515
      %v1517 = vpop.f32.mrb[0].mxu0
      %v1518 = vpop.f32.mrb[0].mxu0
      %v1519 = vpop.f32.mrb[0].mxu0
      %1520 = vdwg.mxu0
      %v1521 = vadd.f32 %v1466, %v1516
      %v1522 = vmax.f32 %v1521, 0.0
      %v1523 = vpack.c.bf16 %v1522, %v1522
      %v1525 = vshrl.u32 %v1523, 16
      %v1531 = vunpack.c.l.b16 %v565
      %v1532 = vunpack.c.l.b16 %v566
      %v1533 = vunpack.c.l.b16 %v567
      %v1534 = vunpack.c.l.b16 %v568
      %v1535 = vpack.c.b16 %v1532, %v1531
      %v1536 = vpack.c.b16 %v1534, %v1533
      %v1540 = vsel %vm937, %v1525, 0
      %1542 = vmatprep.subr.bf16.mxu0 0
      %1543 = vmatpush1.bf16.msra.mxu0 %v1535
      %1544 = vmatprep.subr.bf16.mxu0 0
      %1545 = vmatpush1.bf16.msra.mxu0 %v1536
      %1546 = vmatprep.subr.bf16.mxu0 0
      %1547 = vmatpush1.bf16.msra.mxu0 0
      %1548 = vmatprep.subr.bf16.mxu0 0
      %1549 = vmatpush1.bf16.msra.mxu0 0
      %1550 = vmatprep.subr.bf16.mxu0 0
      %1551 = vmatpush1.bf16.msra.mxu0 0
      %1552 = vmatprep.subr.bf16.mxu0 0
      %1553 = vmatpush1.bf16.msra.mxu0 0
      %1554 = vmatprep.subr.bf16.mxu0 0
      %1555 = vmatpush1.bf16.msra.mxu0 0
      %1556 = vmatprep.subr.bf16.mxu0 0
      %1557 = vmatpush1.bf16.msra.mxu0 0
      %1558 = vmatprep.subr.bf16.mxu0 0
      %1559 = vmatpush1.bf16.msra.mxu0 0
      %1560 = vmatprep.subr.bf16.mxu0 0
      %1561 = vmatpush1.bf16.msra.mxu0 0
      %1562 = vmatprep.subr.bf16.mxu0 0
      %1563 = vmatpush1.bf16.msra.mxu0 0
      %1564 = vmatprep.subr.bf16.mxu0 0
      %1565 = vmatpush1.bf16.msra.mxu0 0
      %1566 = vmatprep.subr.bf16.mxu0 0
      %1567 = vmatpush1.bf16.msra.mxu0 0
      %1568 = vmatprep.subr.bf16.mxu0 0
      %1569 = vmatpush1.bf16.msra.mxu0 0
      %1570 = vmatprep.subr.bf16.mxu0 0
      %1571 = vmatpush1.bf16.msra.mxu0 0
      %1572 = vmatprep.subr.bf16.mxu0 0
      %1573 = vmatpush1.bf16.msra.mxu0 0
      %1574 = vmatprep.mubr.bf16.mxu0 0
      %1575 = vmatmul.mubr.bf16.gmra.mrb[0].mxu0 %v1540
      %v1576 = vpop.f32.mrb[0].mxu0
      %v1577 = vadd.f32 0.0, %v1576
      %v1578 = vpop.f32.mrb[0].mxu0
      %v1579 = vpop.f32.mrb[0].mxu0
      %v1580 = vpop.f32.mrb[0].mxu0
      %1581 = vdwg.mxu0
      %v1586 = vunpack.c.l.b16 %v561
      %v1587 = vunpack.c.l.b16 %v562
      %v1588 = vunpack.c.l.b16 %v563
      %v1589 = vunpack.c.l.b16 %v564
      %v1590 = vpack.c.b16 %v1587, %v1586
      %v1591 = vpack.c.b16 %v1589, %v1588
      %v1594 = vsel %vm937, %v1523, 0
      %1596 = vmatprep.subr.bf16.mxu0 0
      %1597 = vmatpush1.bf16.msra.mxu0 %v1590
      %1598 = vmatprep.subr.bf16.mxu0 0
      %1599 = vmatpush1.bf16.msra.mxu0 %v1591
      %1600 = vmatprep.subr.bf16.mxu0 0
      %1601 = vmatpush1.bf16.msra.mxu0 0
      %1602 = vmatprep.subr.bf16.mxu0 0
      %1603 = vmatpush1.bf16.msra.mxu0 0
      %1604 = vmatprep.subr.bf16.mxu0 0
      %1605 = vmatpush1.bf16.msra.mxu0 0
      %1606 = vmatprep.subr.bf16.mxu0 0
      %1607 = vmatpush1.bf16.msra.mxu0 0
      %1608 = vmatprep.subr.bf16.mxu0 0
      %1609 = vmatpush1.bf16.msra.mxu0 0
      %1610 = vmatprep.subr.bf16.mxu0 0
      %1611 = vmatpush1.bf16.msra.mxu0 0
      %1612 = vmatprep.subr.bf16.mxu0 0
      %1613 = vmatpush1.bf16.msra.mxu0 0
      %1614 = vmatprep.subr.bf16.mxu0 0
      %1615 = vmatpush1.bf16.msra.mxu0 0
      %1616 = vmatprep.subr.bf16.mxu0 0
      %1617 = vmatpush1.bf16.msra.mxu0 0
      %1618 = vmatprep.subr.bf16.mxu0 0
      %1619 = vmatpush1.bf16.msra.mxu0 0
      %1620 = vmatprep.subr.bf16.mxu0 0
      %1621 = vmatpush1.bf16.msra.mxu0 0
      %1622 = vmatprep.subr.bf16.mxu0 0
      %1623 = vmatpush1.bf16.msra.mxu0 0
      %1624 = vmatprep.subr.bf16.mxu0 0
      %1625 = vmatpush1.bf16.msra.mxu0 0
      %1626 = vmatprep.subr.bf16.mxu0 0
      %1627 = vmatpush1.bf16.msra.mxu0 0
      %1628 = vmatprep.mubr.bf16.mxu0 0
      %1629 = vmatmul.mubr.bf16.gmra.mrb[0].mxu0 %v1594
      %v1630 = vpop.f32.mrb[0].mxu0
      %v1631 = vadd.f32 %v1577, %v1630
      %v1632 = vpop.f32.mrb[0].mxu0
      %v1633 = vpop.f32.mrb[0].mxu0
      %v1634 = vpop.f32.mrb[0].mxu0
      %1635 = vdwg.mxu0
      %v1637 = vrot.slane %v1523, 1
      %v1642 = vunpack.c.l.b16 %v569
      %v1643 = vunpack.c.l.b16 %v570
      %v1644 = vunpack.c.l.b16 %v571
      %v1645 = vunpack.c.l.b16 %v572
      %v1646 = vpack.c.b16 %v1643, %v1642
      %v1647 = vpack.c.b16 %v1645, %v1644
      %v1651 = vsel %vm937, %v1637, 0
      %1653 = vmatprep.subr.bf16.mxu0 0
      %1654 = vmatpush1.bf16.msra.mxu0 %v1646
      %1655 = vmatprep.subr.bf16.mxu0 0
      %1656 = vmatpush1.bf16.msra.mxu0 %v1647
      %1657 = vmatprep.subr.bf16.mxu0 0
      %1658 = vmatpush1.bf16.msra.mxu0 0
      %1659 = vmatprep.subr.bf16.mxu0 0
      %1660 = vmatpush1.bf16.msra.mxu0 0
      %1661 = vmatprep.subr.bf16.mxu0 0
      %1662 = vmatpush1.bf16.msra.mxu0 0
      %1663 = vmatprep.subr.bf16.mxu0 0
      %1664 = vmatpush1.bf16.msra.mxu0 0
      %1665 = vmatprep.subr.bf16.mxu0 0
      %1666 = vmatpush1.bf16.msra.mxu0 0
      %1667 = vmatprep.subr.bf16.mxu0 0
      %1668 = vmatpush1.bf16.msra.mxu0 0
      %1669 = vmatprep.subr.bf16.mxu0 0
      %1670 = vmatpush1.bf16.msra.mxu0 0
      %1671 = vmatprep.subr.bf16.mxu0 0
      %1672 = vmatpush1.bf16.msra.mxu0 0
      %1673 = vmatprep.subr.bf16.mxu0 0
      %1674 = vmatpush1.bf16.msra.mxu0 0
      %1675 = vmatprep.subr.bf16.mxu0 0
      %1676 = vmatpush1.bf16.msra.mxu0 0
      %1677 = vmatprep.subr.bf16.mxu0 0
      %1678 = vmatpush1.bf16.msra.mxu0 0
      %1679 = vmatprep.subr.bf16.mxu0 0
      %1680 = vmatpush1.bf16.msra.mxu0 0
      %1681 = vmatprep.subr.bf16.mxu0 0
      %1682 = vmatpush1.bf16.msra.mxu0 0
      %1683 = vmatprep.subr.bf16.mxu0 0
      %1684 = vmatpush1.bf16.msra.mxu0 0
      %1685 = vmatprep.mubr.bf16.mxu0 0
      %1686 = vmatmul.mubr.bf16.gmra.mrb[0].mxu0 %v1651
      %v1687 = vpop.f32.mrb[0].mxu0
      %v1688 = vadd.f32 0.0, %v1687
      %v1689 = vpop.f32.mrb[0].mxu0
      %v1690 = vpop.f32.mrb[0].mxu0
      %v1691 = vpop.f32.mrb[0].mxu0
      %1692 = vdwg.mxu0
      %v1693 = vadd.f32 %v1631, %v1688
      %v1694 = vrot.slane %v1525, 1
      %v1699 = vunpack.c.l.b16 %v573
      %v1700 = vunpack.c.l.b16 %v574
      %v1701 = vunpack.c.l.b16 %v575
      %v1702 = vunpack.c.l.b16 %v576
      %v1703 = vpack.c.b16 %v1700, %v1699
      %v1704 = vpack.c.b16 %v1702, %v1701
      %v1708 = vsel %vm937, %v1694, 0
      %1710 = vmatprep.subr.bf16.mxu0 0
      %1711 = vmatpush1.bf16.msra.mxu0 %v1703
      %1712 = vmatprep.subr.bf16.mxu0 0
      %1713 = vmatpush1.bf16.msra.mxu0 %v1704
      %1714 = vmatprep.subr.bf16.mxu0 0
      %1715 = vmatpush1.bf16.msra.mxu0 0
      %1716 = vmatprep.subr.bf16.mxu0 0
      %1717 = vmatpush1.bf16.msra.mxu0 0
      %1718 = vmatprep.subr.bf16.mxu0 0
      %1719 = vmatpush1.bf16.msra.mxu0 0
      %1720 = vmatprep.subr.bf16.mxu0 0
      %1721 = vmatpush1.bf16.msra.mxu0 0
      %1722 = vmatprep.subr.bf16.mxu0 0
      %1723 = vmatpush1.bf16.msra.mxu0 0
      %1724 = vmatprep.subr.bf16.mxu0 0
      %1725 = vmatpush1.bf16.msra.mxu0 0
      %1726 = vmatprep.subr.bf16.mxu0 0
      %1727 = vmatpush1.bf16.msra.mxu0 0
      %1728 = vmatprep.subr.bf16.mxu0 0
      %1729 = vmatpush1.bf16.msra.mxu0 0
      %1730 = vmatprep.subr.bf16.mxu0 0
      %1731 = vmatpush1.bf16.msra.mxu0 0
      %1732 = vmatprep.subr.bf16.mxu0 0
      %1733 = vmatpush1.bf16.msra.mxu0 0
      %1734 = vmatprep.subr.bf16.mxu0 0
      %1735 = vmatpush1.bf16.msra.mxu0 0
      %1736 = vmatprep.subr.bf16.mxu0 0
      %1737 = vmatpush1.bf16.msra.mxu0 0
      %1738 = vmatprep.subr.bf16.mxu0 0
      %1739 = vmatpush1.bf16.msra.mxu0 0
      %1740 = vmatprep.subr.bf16.mxu0 0
      %1741 = vmatpush1.bf16.msra.mxu0 0
      %1742 = vmatprep.mubr.bf16.mxu0 0
      %1743 = vmatmul.mubr.bf16.gmra.mrb[0].mxu0 %v1708
      %v1744 = vpop.f32.mrb[0].mxu0
      %v1745 = vadd.f32 0.0, %v1744
      %v1746 = vpop.f32.mrb[0].mxu0
      %v1747 = vpop.f32.mrb[0].mxu0
      %v1748 = vpop.f32.mrb[0].mxu0
      %1749 = vdwg.mxu0
      %v1750 = vadd.f32 %v1693, %v1745
      %v1751 = vrot.slane %v1523, 2
      %v1756 = vunpack.c.l.b16 %v577
      %v1757 = vunpack.c.l.b16 %v578
      %v1758 = vunpack.c.l.b16 %v579
      %v1759 = vunpack.c.l.b16 %v580
      %v1760 = vpack.c.b16 %v1757, %v1756
      %v1761 = vpack.c.b16 %v1759, %v1758
      %v1765 = vsel %vm937, %v1751, 0
      %1767 = vmatprep.subr.bf16.mxu0 0
      %1768 = vmatpush1.bf16.msra.mxu0 %v1760
      %1769 = vmatprep.subr.bf16.mxu0 0
      %1770 = vmatpush1.bf16.msra.mxu0 %v1761
      %1771 = vmatprep.subr.bf16.mxu0 0
      %1772 = vmatpush1.bf16.msra.mxu0 0
      %1773 = vmatprep.subr.bf16.mxu0 0
      %1774 = vmatpush1.bf16.msra.mxu0 0
      %1775 = vmatprep.subr.bf16.mxu0 0
      %1776 = vmatpush1.bf16.msra.mxu0 0
      %1777 = vmatprep.subr.bf16.mxu0 0
      %1778 = vmatpush1.bf16.msra.mxu0 0
      %1779 = vmatprep.subr.bf16.mxu0 0
      %1780 = vmatpush1.bf16.msra.mxu0 0
      %1781 = vmatprep.subr.bf16.mxu0 0
      %1782 = vmatpush1.bf16.msra.mxu0 0
      %1783 = vmatprep.subr.bf16.mxu0 0
      %1784 = vmatpush1.bf16.msra.mxu0 0
      %1785 = vmatprep.subr.bf16.mxu0 0
      %1786 = vmatpush1.bf16.msra.mxu0 0
      %1787 = vmatprep.subr.bf16.mxu0 0
      %1788 = vmatpush1.bf16.msra.mxu0 0
      %1789 = vmatprep.subr.bf16.mxu0 0
      %1790 = vmatpush1.bf16.msra.mxu0 0
      %1791 = vmatprep.subr.bf16.mxu0 0
      %1792 = vmatpush1.bf16.msra.mxu0 0
      %1793 = vmatprep.subr.bf16.mxu0 0
      %1794 = vmatpush1.bf16.msra.mxu0 0
      %1795 = vmatprep.subr.bf16.mxu0 0
      %1796 = vmatpush1.bf16.msra.mxu0 0
      %1797 = vmatprep.subr.bf16.mxu0 0
      %1798 = vmatpush1.bf16.msra.mxu0 0
      %1799 = vmatprep.mubr.bf16.mxu0 0
      %1800 = vmatmul.mubr.bf16.gmra.mrb[0].mxu0 %v1765
      %v1801 = vpop.f32.mrb[0].mxu0
      %v1802 = vadd.f32 0.0, %v1801
      %v1803 = vpop.f32.mrb[0].mxu0
      %v1804 = vpop.f32.mrb[0].mxu0
      %v1805 = vpop.f32.mrb[0].mxu0
      %1806 = vdwg.mxu0
      %v1807 = vadd.f32 %v1750, %v1802
      %v1808 = vmax.f32 %v1807, 0.0
      %v1809 = vlaneseq
      %v1810 = vshrl.u32 %v1809, 7
      %v1811 = vsub.s32 0, %v1810
      %v1812 = vrot.slane %v1808, %v1811
      %v1813 = vmul.f32 %v1217, %v1812
      %v1814 = vmul.f32 %v1218, %v1812
      %v1815 = vsel %vm937, %v1813, 0.0
      %1816 = vadd.xlane.f32.xlu0 %v1815
      %v1817 = vpop.xlane.xlu0 %1816
      %vm1818 = vcmask 256000
      %v1819 = vsel %vm1818, %v1814, 0.0
      %1820 = vadd.xlane.f32.xlu0 %v1819
      %v1821 = vpop.xlane.xlu0 %1820
      %v1822 = vadd.f32 %v1817, 1e-15
      %v1823 = vadd.f32 %v1821, 1e-15
      %vm1824 = vcmask 1042432
      %v1825 = vsel %vm1824, %v1823, 0.0
      %v1826 = vadd.f32 %v1822, %v1825
      %v1827 = vrot.slane %v1826, 4
      %v1828 = vadd.f32 %v1826, %v1827
      %v1829 = vrot.slane %v1828, 2
      %v1830 = vadd.f32 %v1828, %v1829
      %v1831 = vrot.slane %v1830, 1
      %v1832 = vadd.f32 %v1830, %v1831
      %v1833 = vrcp.pop %v1832
      %v1834 = vmul.f32 %v1822, %v1833
      %v1835 = vmul.f32 %v1823, %v1833
      %v1836 = vmul.f32 %v448, %v1834
      %v1837 = vmul.f32 %v449, %v1835
      %v1838 = vmul.f32 %v450, %v1834
      %v1839 = vmul.f32 %v451, %v1835
      %v1840 = vmul.f32 %v452, %v1834
      %v1841 = vmul.f32 %v453, %v1835
      %v1842 = vmul.f32 %v454, %v1834
      %v1843 = vmul.f32 %v455, %v1835
      %v1844 = vmul.f32 %v456, %v1834
      %v1845 = vmul.f32 %v457, %v1835
      %v1846 = vmul.f32 %v458, %v1834
      %v1847 = vmul.f32 %v459, %v1835
      %v1848 = vmul.f32 %v460, %v1834
      %v1849 = vmul.f32 %v461, %v1835
      %v1850 = vmul.f32 %v462, %v1834
      %v1851 = vmul.f32 %v463, %v1835
      %v1852 = vmul.f32 %v464, %v1834
      %v1853 = vmul.f32 %v465, %v1835
      %v1854 = vmul.f32 %v466, %v1834
      %v1855 = vmul.f32 %v467, %v1835
      %v1856 = vmul.f32 %v468, %v1834
      %v1857 = vmul.f32 %v469, %v1835
      %v1858 = vmul.f32 %v470, %v1834
      %v1859 = vmul.f32 %v471, %v1835
      %v1860 = vmul.f32 %v472, %v1834
      %v1861 = vmul.f32 %v473, %v1835
      %v1862 = vmul.f32 %v474, %v1834
      %v1863 = vmul.f32 %v475, %v1835
      %v1864 = vmul.f32 %v476, %v1834
      %v1865 = vmul.f32 %v477, %v1835
      %v1866 = vmul.f32 %v478, %v1834
      %v1867 = vmul.f32 %v479, %v1835
      %v1868 = vmul.f32 %v480, %v1834
      %v1869 = vmul.f32 %v481, %v1835
      %v1870 = vmul.f32 %v482, %v1834
      %v1871 = vmul.f32 %v483, %v1835
      %v1872 = vmul.f32 %v484, %v1834
      %v1873 = vmul.f32 %v485, %v1835
      %v1874 = vmul.f32 %v486, %v1834
      %v1875 = vmul.f32 %v487, %v1835
      %v1876 = vsel %vm589, %v1836, 0.0
      %vm1877 = vcmask 18432
      %v1878 = vsel %vm1877, %v1837, 0.0
      %v1879 = vadd.f32 %v1876, %v1878
      %v1880 = vrot.slane %v1879, 4
      %v1881 = vadd.f32 %v1879, %v1880
      %v1882 = vrot.slane %v1881, 2
      %v1883 = vadd.f32 %v1881, %v1882
      %v1884 = vrot.slane %v1883, 1
      %v1885 = vadd.f32 %v1883, %v1884
      %v1886 = vsel %vm589, %v1838, 0.0
      %v1887 = vsel %vm1877, %v1839, 0.0
      %v1888 = vadd.f32 %v1886, %v1887
      %v1889 = vrot.slane %v1888, 4
      %v1890 = vadd.f32 %v1888, %v1889
      %v1891 = vrot.slane %v1890, 2
      %v1892 = vadd.f32 %v1890, %v1891
      %v1893 = vrot.slane %v1892, 1
      %v1894 = vadd.f32 %v1892, %v1893
      %v1895 = vsel %vm589, %v1840, 0.0
      %v1896 = vsel %vm1877, %v1841, 0.0
      %v1897 = vadd.f32 %v1895, %v1896
      %v1898 = vrot.slane %v1897, 4
      %v1899 = vadd.f32 %v1897, %v1898
      %v1900 = vrot.slane %v1899, 2
      %v1901 = vadd.f32 %v1899, %v1900
      %v1902 = vrot.slane %v1901, 1
      %v1903 = vadd.f32 %v1901, %v1902
      %v1904 = vsel %vm589, %v1842, 0.0
      %v1905 = vsel %vm1877, %v1843, 0.0
      %v1906 = vadd.f32 %v1904, %v1905
      %v1907 = vrot.slane %v1906, 4
      %v1908 = vadd.f32 %v1906, %v1907
      %v1909 = vrot.slane %v1908, 2
      %v1910 = vadd.f32 %v1908, %v1909
      %v1911 = vrot.slane %v1910, 1
      %v1912 = vadd.f32 %v1910, %v1911
      %v1913 = vsel %vm589, %v1844, 0.0
      %v1914 = vsel %vm1877, %v1845, 0.0
      %v1915 = vadd.f32 %v1913, %v1914
      %v1916 = vrot.slane %v1915, 4
      %v1917 = vadd.f32 %v1915, %v1916
      %v1918 = vrot.slane %v1917, 2
      %v1919 = vadd.f32 %v1917, %v1918
      %v1920 = vrot.slane %v1919, 1
      %v1921 = vadd.f32 %v1919, %v1920
      %v1922 = vsel %vm589, %v1846, 0.0
      %v1923 = vsel %vm1877, %v1847, 0.0
      %v1924 = vadd.f32 %v1922, %v1923
      %v1925 = vrot.slane %v1924, 4
      %v1926 = vadd.f32 %v1924, %v1925
      %v1927 = vrot.slane %v1926, 2
      %v1928 = vadd.f32 %v1926, %v1927
      %v1929 = vrot.slane %v1928, 1
      %v1930 = vadd.f32 %v1928, %v1929
      %v1931 = vsel %vm589, %v1848, 0.0
      %v1932 = vsel %vm1877, %v1849, 0.0
      %v1933 = vadd.f32 %v1931, %v1932
      %v1934 = vrot.slane %v1933, 4
      %v1935 = vadd.f32 %v1933, %v1934
      %v1936 = vrot.slane %v1935, 2
      %v1937 = vadd.f32 %v1935, %v1936
      %v1938 = vrot.slane %v1937, 1
      %v1939 = vadd.f32 %v1937, %v1938
      %v1940 = vsel %vm589, %v1850, 0.0
      %v1941 = vsel %vm1877, %v1851, 0.0
      %v1942 = vadd.f32 %v1940, %v1941
      %v1943 = vrot.slane %v1942, 4
      %v1944 = vadd.f32 %v1942, %v1943
      %v1945 = vrot.slane %v1944, 2
      %v1946 = vadd.f32 %v1944, %v1945
      %v1947 = vrot.slane %v1946, 1
      %v1948 = vadd.f32 %v1946, %v1947
      %v1949 = vsel %vm589, %v1852, 0.0
      %v1950 = vsel %vm1877, %v1853, 0.0
      %v1951 = vadd.f32 %v1949, %v1950
      %v1952 = vrot.slane %v1951, 4
      %v1953 = vadd.f32 %v1951, %v1952
      %v1954 = vrot.slane %v1953, 2
      %v1955 = vadd.f32 %v1953, %v1954
      %v1956 = vrot.slane %v1955, 1
      %v1957 = vadd.f32 %v1955, %v1956
      %v1958 = vsel %vm589, %v1854, 0.0
      %v1959 = vsel %vm1877, %v1855, 0.0
      %v1960 = vadd.f32 %v1958, %v1959
      %v1961 = vrot.slane %v1960, 4
      %v1962 = vadd.f32 %v1960, %v1961
      %v1963 = vrot.slane %v1962, 2
      %v1964 = vadd.f32 %v1962, %v1963
      %v1965 = vrot.slane %v1964, 1
      %v1966 = vadd.f32 %v1964, %v1965
      %v1967 = vsel %vm589, %v1856, 0.0
      %v1968 = vsel %vm1877, %v1857, 0.0
      %v1969 = vadd.f32 %v1967, %v1968
      %v1970 = vrot.slane %v1969, 4
      %v1971 = vadd.f32 %v1969, %v1970
      %v1972 = vrot.slane %v1971, 2
      %v1973 = vadd.f32 %v1971, %v1972
      %v1974 = vrot.slane %v1973, 1
      %v1975 = vadd.f32 %v1973, %v1974
      %v1976 = vsel %vm589, %v1858, 0.0
      %v1977 = vsel %vm1877, %v1859, 0.0
      %v1978 = vadd.f32 %v1976, %v1977
      %v1979 = vrot.slane %v1978, 4
      %v1980 = vadd.f32 %v1978, %v1979
      %v1981 = vrot.slane %v1980, 2
      %v1982 = vadd.f32 %v1980, %v1981
      %v1983 = vrot.slane %v1982, 1
      %v1984 = vadd.f32 %v1982, %v1983
      %v1985 = vsel %vm589, %v1860, 0.0
      %v1986 = vsel %vm1877, %v1861, 0.0
      %v1987 = vadd.f32 %v1985, %v1986
      %v1988 = vrot.slane %v1987, 4
      %v1989 = vadd.f32 %v1987, %v1988
      %v1990 = vrot.slane %v1989, 2
      %v1991 = vadd.f32 %v1989, %v1990
      %v1992 = vrot.slane %v1991, 1
      %v1993 = vadd.f32 %v1991, %v1992
      %v1994 = vsel %vm589, %v1862, 0.0
      %v1995 = vsel %vm1877, %v1863, 0.0
      %v1996 = vadd.f32 %v1994, %v1995
      %v1997 = vrot.slane %v1996, 4
      %v1998 = vadd.f32 %v1996, %v1997
      %v1999 = vrot.slane %v1998, 2
      %v2000 = vadd.f32 %v1998, %v1999
      %v2001 = vrot.slane %v2000, 1
      %v2002 = vadd.f32 %v2000, %v2001
      %v2003 = vsel %vm589, %v1864, 0.0
      %v2004 = vsel %vm1877, %v1865, 0.0
      %v2005 = vadd.f32 %v2003, %v2004
      %v2006 = vrot.slane %v2005, 4
      %v2007 = vadd.f32 %v2005, %v2006
      %v2008 = vrot.slane %v2007, 2
      %v2009 = vadd.f32 %v2007, %v2008
      %v2010 = vrot.slane %v2009, 1
      %v2011 = vadd.f32 %v2009, %v2010
      %v2012 = vsel %vm589, %v1866, 0.0
      %v2013 = vsel %vm1877, %v1867, 0.0
      %v2014 = vadd.f32 %v2012, %v2013
      %v2015 = vrot.slane %v2014, 4
      %v2016 = vadd.f32 %v2014, %v2015
      %v2017 = vrot.slane %v2016, 2
      %v2018 = vadd.f32 %v2016, %v2017
      %v2019 = vrot.slane %v2018, 1
      %v2020 = vadd.f32 %v2018, %v2019
      %v2021 = vsel %vm589, %v1868, 0.0
      %v2022 = vsel %vm1877, %v1869, 0.0
      %v2023 = vadd.f32 %v2021, %v2022
      %v2024 = vrot.slane %v2023, 4
      %v2025 = vadd.f32 %v2023, %v2024
      %v2026 = vrot.slane %v2025, 2
      %v2027 = vadd.f32 %v2025, %v2026
      %v2028 = vrot.slane %v2027, 1
      %v2029 = vadd.f32 %v2027, %v2028
      %v2030 = vsel %vm589, %v1870, 0.0
      %v2031 = vsel %vm1877, %v1871, 0.0
      %v2032 = vadd.f32 %v2030, %v2031
      %v2033 = vrot.slane %v2032, 4
      %v2034 = vadd.f32 %v2032, %v2033
      %v2035 = vrot.slane %v2034, 2
      %v2036 = vadd.f32 %v2034, %v2035
      %v2037 = vrot.slane %v2036, 1
      %v2038 = vadd.f32 %v2036, %v2037
      %v2039 = vsel %vm589, %v1872, 0.0
      %v2040 = vsel %vm1877, %v1873, 0.0
      %v2041 = vadd.f32 %v2039, %v2040
      %v2042 = vrot.slane %v2041, 4
      %v2043 = vadd.f32 %v2041, %v2042
      %v2044 = vrot.slane %v2043, 2
      %v2045 = vadd.f32 %v2043, %v2044
      %v2046 = vrot.slane %v2045, 1
      %v2047 = vadd.f32 %v2045, %v2046
      %v2048 = vsel %vm589, %v1874, 0.0
      %v2049 = vsel %vm1877, %v1875, 0.0
      %v2050 = vadd.f32 %v2048, %v2049
      %v2051 = vrot.slane %v2050, 4
      %v2052 = vadd.f32 %v2050, %v2051
      %v2053 = vrot.slane %v2052, 2
      %v2054 = vadd.f32 %v2052, %v2053
      %v2055 = vrot.slane %v2054, 1
      %v2056 = vadd.f32 %v2054, %v2055
      %vm2077 = vcmask 1041409
      %v2078 = vsel %vm2077, %v1894, %v1885
      %vm2079 = vcmask 1042434
      %v2080 = vsel %vm2079, %v1903, %v2078
      %vm2081 = vcmask 1043459
      %v2082 = vsel %vm2081, %v1912, %v2080
      %vm2083 = vcmask 1044484
      %v2084 = vsel %vm2083, %v1921, %v2082
      %vm2085 = vcmask 1045509
      %v2086 = vsel %vm2085, %v1930, %v2084
      %vm2087 = vcmask 1046534
      %v2088 = vsel %vm2087, %v1939, %v2086
      %vm2089 = vcmask 1047559
      %v2090 = vsel %vm2089, %v1948, %v2088
      %v2091 = vsel %vm2077, %v1966, %v1957
      %v2092 = vsel %vm2079, %v1975, %v2091
      %v2093 = vsel %vm2081, %v1984, %v2092
      %v2094 = vsel %vm2083, %v1993, %v2093
      %v2095 = vsel %vm2085, %v2002, %v2094
      %v2096 = vsel %vm2087, %v2011, %v2095
      %v2097 = vsel %vm2089, %v2020, %v2096
      %v2098 = vsel %vm2077, %v2038, %v2029
      %v2099 = vsel %vm2079, %v2047, %v2098
      %v2100 = vsel %vm2081, %v2056, %v2099
      %vm2103 = vcmask 162816
      %v2105 = vsel %vm2103, %v528, 0
      %vm2107 = vcmask 1043456
      %v2108 = vsel %vm2107, %v2100, 0
      %2110 = vmatprep.subr.mxu0 0.0
      %2111 = vmatpush1.msra.mxu0 %v2090
      %2112 = vmatprep.subr.mxu0 0.0
      %2113 = vmatpush1.msra.mxu0 %v2097
      %2114 = vmatprep.subr.mxu0 0.0
      %2115 = vmatpush1.msra.mxu0 %v2108
      %2116 = vmatprep.subr.mxu0 0.0
      %2117 = vmatpush1.msra.mxu0 0.0
      %2118 = vmatprep.subr.mxu0 0.0
      %2119 = vmatpush1.msra.mxu0 0.0
      %2120 = vmatprep.subr.mxu0 0.0
      %2121 = vmatpush1.msra.mxu0 0.0
      %2122 = vmatprep.subr.mxu0 0.0
      %2123 = vmatpush1.msra.mxu0 0.0
      %2124 = vmatprep.subr.mxu0 0.0
      %2125 = vmatpush1.msra.mxu0 0.0
      %2126 = vmatprep.subr.mxu0 0.0
      %2127 = vmatpush1.msra.mxu0 0.0
      %2128 = vmatprep.subr.mxu0 0.0
      %2129 = vmatpush1.msra.mxu0 0.0
      %2130 = vmatprep.subr.mxu0 0.0
      %2131 = vmatpush1.msra.mxu0 0.0
      %2132 = vmatprep.subr.mxu0 0.0
      %2133 = vmatpush1.msra.mxu0 0.0
      %2134 = vmatprep.subr.mxu0 0.0
      %2135 = vmatpush1.msra.mxu0 0.0
      %2136 = vmatprep.subr.mxu0 0.0
      %2137 = vmatpush1.msra.mxu0 0.0
      %2138 = vmatprep.subr.mxu0 0.0
      %2139 = vmatpush1.msra.mxu0 0.0
      %2140 = vmatprep.subr.mxu0 0.0
      %2141 = vmatpush1.msra.mxu0 0.0
      %2142 = vmatprep.subr.mxu0 0.0
      %2143 = vmatpush1.msra.mxu0 0.0
      %2144 = vmatprep.subr.mxu0 0.0
      %2145 = vmatpush1.msra.mxu0 0.0
      %2146 = vmatprep.subr.mxu0 0.0
      %2147 = vmatpush1.msra.mxu0 0.0
      %2148 = vmatprep.subr.mxu0 0.0
      %2149 = vmatpush1.msra.mxu0 0.0
      %2150 = vmatprep.subr.mxu0 0.0
      %2151 = vmatpush1.msra.mxu0 0.0
      %2152 = vmatprep.subr.mxu0 0.0
      %2153 = vmatpush1.msra.mxu0 0.0
      %2154 = vmatprep.subr.mxu0 0.0
      %2155 = vmatpush1.msra.mxu0 0.0
      %2156 = vmatprep.subr.mxu0 0.0
      %2157 = vmatpush1.msra.mxu0 0.0
      %2158 = vmatprep.subr.mxu0 0.0
      %2159 = vmatpush1.msra.mxu0 0.0
      %2160 = vmatprep.subr.mxu0 0.0
      %2161 = vmatpush1.msra.mxu0 0.0
      %2162 = vmatprep.subr.mxu0 0.0
      %2163 = vmatpush1.msra.mxu0 0.0
      %2164 = vmatprep.subr.mxu0 0.0
      %2165 = vmatpush1.msra.mxu0 0.0
      %2166 = vmatprep.subr.mxu0 0.0
      %2167 = vmatpush1.msra.mxu0 0.0
      %2168 = vmatprep.subr.mxu0 0.0
      %2169 = vmatpush1.msra.mxu0 0.0
      %2170 = vmatprep.subr.mxu0 0.0
      %2171 = vmatpush1.msra.mxu0 0.0
      %2172 = vmatprep.subr.mxu0 0.0
      %2173 = vmatpush1.msra.mxu0 0.0
      %2174 = vmatprep.mubr.f32.mxu0 0.0
      %2175 = vmatmul.mubr.f32.gmra.mrb[0].mxu0 %v2105
      %v2176 = vpop.f32.mrb[0].mxu0
      %v2177 = vadd.f32 0.0, %v2176
      %v2178 = vpop.f32.mrb[0].mxu0
      %2179 = vdwg.mxu0
      %2180 = vst.msk [vmem:[%s425] sm:$0xff] %vm589, %v2177
      %v2181 = vpack.c.bf16 %v438, %v437
      %v2183 = vshrl.u32 %v2181, 16
      %v2185 = vshll.u32 %v2181, 16
      %v2187 = vrot.slane %v2185, 1
      %v2188 = vor.u32 %v2183, %v2187
      %v2190 = vsel %vm589, %v2188, 0
      %2192 = vmatprep.subr.bf16.mxu0 0
      %2193 = vmatpush1.bf16.msra.mxu0 %v598
      %2194 = vmatprep.subr.bf16.mxu0 0
      %2195 = vmatpush1.bf16.msra.mxu0 0
      %2196 = vmatprep.subr.bf16.mxu0 0
      %2197 = vmatpush1.bf16.msra.mxu0 0
      %2198 = vmatprep.subr.bf16.mxu0 0
      %2199 = vmatpush1.bf16.msra.mxu0 0
      %2200 = vmatprep.subr.bf16.mxu0 0
      %2201 = vmatpush1.bf16.msra.mxu0 0
      %2202 = vmatprep.subr.bf16.mxu0 0
      %2203 = vmatpush1.bf16.msra.mxu0 0
      %2204 = vmatprep.subr.bf16.mxu0 0
      %2205 = vmatpush1.bf16.msra.mxu0 0
      %2206 = vmatprep.subr.bf16.mxu0 0
      %2207 = vmatpush1.bf16.msra.mxu0 0
      %2208 = vmatprep.subr.bf16.mxu0 0
      %2209 = vmatpush1.bf16.msra.mxu0 0
      %2210 = vmatprep.subr.bf16.mxu0 0
      %2211 = vmatpush1.bf16.msra.mxu0 0
      %2212 = vmatprep.subr.bf16.mxu0 0
      %2213 = vmatpush1.bf16.msra.mxu0 0
      %2214 = vmatprep.subr.bf16.mxu0 0
      %2215 = vmatpush1.bf16.msra.mxu0 0
      %2216 = vmatprep.subr.bf16.mxu0 0
      %2217 = vmatpush1.bf16.msra.mxu0 0
      %2218 = vmatprep.subr.bf16.mxu0 0
      %2219 = vmatpush1.bf16.msra.mxu0 0
      %2220 = vmatprep.subr.bf16.mxu0 0
      %2221 = vmatpush1.bf16.msra.mxu0 0
      %2222 = vmatprep.subr.bf16.mxu0 0
      %2223 = vmatpush1.bf16.msra.mxu0 0
      %2224 = vmatprep.mubr.bf16.mxu0 0
      %2225 = vmatmul.mubr.bf16.gmra.mrb[0].mxu0 %v2190
      %v2226 = vpop.f32.mrb[0].mxu0
      %v2227 = vadd.f32 0.0, %v2226
      %v2228 = vpop.f32.mrb[0].mxu0
      %v2229 = vpop.f32.mrb[0].mxu0
      %v2230 = vadd.f32 0.0, %v2229
      %v2231 = vpop.f32.mrb[0].mxu0
      %2232 = vdwg.mxu0
      %v2233 = vsel %vm589, %v2181, 0
      %2235 = vmatprep.subr.bf16.mxu0 0
      %2236 = vmatpush1.bf16.msra.mxu0 %v644
      %2237 = vmatprep.subr.bf16.mxu0 0
      %2238 = vmatpush1.bf16.msra.mxu0 0
      %2239 = vmatprep.subr.bf16.mxu0 0
      %2240 = vmatpush1.bf16.msra.mxu0 0
      %2241 = vmatprep.subr.bf16.mxu0 0
      %2242 = vmatpush1.bf16.msra.mxu0 0
      %2243 = vmatprep.subr.bf16.mxu0 0
      %2244 = vmatpush1.bf16.msra.mxu0 0
      %2245 = vmatprep.subr.bf16.mxu0 0
      %2246 = vmatpush1.bf16.msra.mxu0 0
      %2247 = vmatprep.subr.bf16.mxu0 0
      %2248 = vmatpush1.bf16.msra.mxu0 0
      %2249 = vmatprep.subr.bf16.mxu0 0
      %2250 = vmatpush1.bf16.msra.mxu0 0
      %2251 = vmatprep.subr.bf16.mxu0 0
      %2252 = vmatpush1.bf16.msra.mxu0 0
      %2253 = vmatprep.subr.bf16.mxu0 0
      %2254 = vmatpush1.bf16.msra.mxu0 0
      %2255 = vmatprep.subr.bf16.mxu0 0
      %2256 = vmatpush1.bf16.msra.mxu0 0
      %2257 = vmatprep.subr.bf16.mxu0 0
      %2258 = vmatpush1.bf16.msra.mxu0 0
      %2259 = vmatprep.subr.bf16.mxu0 0
      %2260 = vmatpush1.bf16.msra.mxu0 0
      %2261 = vmatprep.subr.bf16.mxu0 0
      %2262 = vmatpush1.bf16.msra.mxu0 0
      %2263 = vmatprep.subr.bf16.mxu0 0
      %2264 = vmatpush1.bf16.msra.mxu0 0
      %2265 = vmatprep.subr.bf16.mxu0 0
      %2266 = vmatpush1.bf16.msra.mxu0 0
      %2267 = vmatprep.mubr.bf16.mxu0 0
      %2268 = vmatmul.mubr.bf16.gmra.mrb[0].mxu0 %v2233
      %v2269 = vpop.f32.mrb[0].mxu0
      %v2270 = vadd.f32 %v2227, %v2269
      %v2271 = vpop.f32.mrb[0].mxu0
      %v2272 = vpop.f32.mrb[0].mxu0
      %v2273 = vadd.f32 %v2230, %v2272
      %v2274 = vpop.f32.mrb[0].mxu0
      %2275 = vdwg.mxu0
      %v2276 = vpack.c.bf16 %v439, %v439
      %v2279 = vrot.slane %v2181, 1
      %v2280 = vrot.slane %v2276, 1
      %v2281 = vsel %vm690, %v2279, %v2280
      %v2283 = vsel %vm589, %v2281, 0
      %2285 = vmatprep.subr.bf16.mxu0 0
      %2286 = vmatpush1.bf16.msra.mxu0 %v698
      %2287 = vmatprep.subr.bf16.mxu0 0
      %2288 = vmatpush1.bf16.msra.mxu0 0
      %2289 = vmatprep.subr.bf16.mxu0 0
      %2290 = vmatpush1.bf16.msra.mxu0 0
      %2291 = vmatprep.subr.bf16.mxu0 0
      %2292 = vmatpush1.bf16.msra.mxu0 0
      %2293 = vmatprep.subr.bf16.mxu0 0
      %2294 = vmatpush1.bf16.msra.mxu0 0
      %2295 = vmatprep.subr.bf16.mxu0 0
      %2296 = vmatpush1.bf16.msra.mxu0 0
      %2297 = vmatprep.subr.bf16.mxu0 0
      %2298 = vmatpush1.bf16.msra.mxu0 0
      %2299 = vmatprep.subr.bf16.mxu0 0
      %2300 = vmatpush1.bf16.msra.mxu0 0
      %2301 = vmatprep.subr.bf16.mxu0 0
      %2302 = vmatpush1.bf16.msra.mxu0 0
      %2303 = vmatprep.subr.bf16.mxu0 0
      %2304 = vmatpush1.bf16.msra.mxu0 0
      %2305 = vmatprep.subr.bf16.mxu0 0
      %2306 = vmatpush1.bf16.msra.mxu0 0
      %2307 = vmatprep.subr.bf16.mxu0 0
      %2308 = vmatpush1.bf16.msra.mxu0 0
      %2309 = vmatprep.subr.bf16.mxu0 0
      %2310 = vmatpush1.bf16.msra.mxu0 0
      %2311 = vmatprep.subr.bf16.mxu0 0
      %2312 = vmatpush1.bf16.msra.mxu0 0
      %2313 = vmatprep.subr.bf16.mxu0 0
      %2314 = vmatpush1.bf16.msra.mxu0 0
      %2315 = vmatprep.subr.bf16.mxu0 0
      %2316 = vmatpush1.bf16.msra.mxu0 0
      %2317 = vmatprep.mubr.bf16.mxu0 0
      %2318 = vmatmul.mubr.bf16.gmra.mrb[0].mxu0 %v2283
      %v2319 = vpop.f32.mrb[0].mxu0
      %v2320 = vadd.f32 0.0, %v2319
      %v2321 = vpop.f32.mrb[0].mxu0
      %v2322 = vpop.f32.mrb[0].mxu0
      %v2323 = vadd.f32 0.0, %v2322
      %v2324 = vpop.f32.mrb[0].mxu0
      %2325 = vdwg.mxu0
      %v2326 = vadd.f32 %v2270, %v2320
      %v2327 = vadd.f32 %v2273, %v2323
      %v2328 = vrot.slane %v2183, 1
      %v2329 = vrot.slane %v2185, 2
      %v2330 = vor.u32 %v2328, %v2329
      %v2332 = vshrl.u32 %v2276, 16
      %v2334 = vrot.slane %v2332, 1
      %v2335 = vshll.u32 %v2276, 16
      %v2337 = vrot.slane %v2335, 2
      %v2338 = vor.u32 %v2334, %v2337
      %v2339 = vsel %vm743, %v2330, %v2338
      %v2341 = vsel %vm589, %v2339, 0
      %2343 = vmatprep.subr.bf16.mxu0 0
      %2344 = vmatpush1.bf16.msra.mxu0 %v760
      %2345 = vmatprep.subr.bf16.mxu0 0
      %2346 = vmatpush1.bf16.msra.mxu0 0
      %2347 = vmatprep.subr.bf16.mxu0 0
      %2348 = vmatpush1.bf16.msra.mxu0 0
      %2349 = vmatprep.subr.bf16.mxu0 0
      %2350 = vmatpush1.bf16.msra.mxu0 0
      %2351 = vmatprep.subr.bf16.mxu0 0
      %2352 = vmatpush1.bf16.msra.mxu0 0
      %2353 = vmatprep.subr.bf16.mxu0 0
      %2354 = vmatpush1.bf16.msra.mxu0 0
      %2355 = vmatprep.subr.bf16.mxu0 0
      %2356 = vmatpush1.bf16.msra.mxu0 0
      %2357 = vmatprep.subr.bf16.mxu0 0
      %2358 = vmatpush1.bf16.msra.mxu0 0
      %2359 = vmatprep.subr.bf16.mxu0 0
      %2360 = vmatpush1.bf16.msra.mxu0 0
      %2361 = vmatprep.subr.bf16.mxu0 0
      %2362 = vmatpush1.bf16.msra.mxu0 0
      %2363 = vmatprep.subr.bf16.mxu0 0
      %2364 = vmatpush1.bf16.msra.mxu0 0
      %2365 = vmatprep.subr.bf16.mxu0 0
      %2366 = vmatpush1.bf16.msra.mxu0 0
      %2367 = vmatprep.subr.bf16.mxu0 0
      %2368 = vmatpush1.bf16.msra.mxu0 0
      %2369 = vmatprep.subr.bf16.mxu0 0
      %2370 = vmatpush1.bf16.msra.mxu0 0
      %2371 = vmatprep.subr.bf16.mxu0 0
      %2372 = vmatpush1.bf16.msra.mxu0 0
      %2373 = vmatprep.subr.bf16.mxu0 0
      %2374 = vmatpush1.bf16.msra.mxu0 0
      %2375 = vmatprep.mubr.bf16.mxu0 0
      %2376 = vmatmul.mubr.bf16.gmra.mrb[0].mxu0 %v2341
      %v2377 = vpop.f32.mrb[0].mxu0
      %v2378 = vadd.f32 0.0, %v2377
      %v2379 = vpop.f32.mrb[0].mxu0
      %v2380 = vpop.f32.mrb[0].mxu0
      %v2381 = vadd.f32 0.0, %v2380
      %v2382 = vpop.f32.mrb[0].mxu0
      %2383 = vdwg.mxu0
      %v2384 = vadd.f32 %v2326, %v2378
      %v2385 = vadd.f32 %v2327, %v2381
      %v2386 = vrot.slane %v2181, 2
      %v2387 = vrot.slane %v2276, 2
      %v2388 = vsel %vm805, %v2386, %v2387
      %v2390 = vsel %vm589, %v2388, 0
      %2392 = vmatprep.subr.bf16.mxu0 0
      %2393 = vmatpush1.bf16.msra.mxu0 %v813
      %2394 = vmatprep.subr.bf16.mxu0 0
      %2395 = vmatpush1.bf16.msra.mxu0 0
      %2396 = vmatprep.subr.bf16.mxu0 0
      %2397 = vmatpush1.bf16.msra.mxu0 0
      %2398 = vmatprep.subr.bf16.mxu0 0
      %2399 = vmatpush1.bf16.msra.mxu0 0
      %2400 = vmatprep.subr.bf16.mxu0 0
      %2401 = vmatpush1.bf16.msra.mxu0 0
      %2402 = vmatprep.subr.bf16.mxu0 0
      %2403 = vmatpush1.bf16.msra.mxu0 0
      %2404 = vmatprep.subr.bf16.mxu0 0
      %2405 = vmatpush1.bf16.msra.mxu0 0
      %2406 = vmatprep.subr.bf16.mxu0 0
      %2407 = vmatpush1.bf16.msra.mxu0 0
      %2408 = vmatprep.subr.bf16.mxu0 0
      %2409 = vmatpush1.bf16.msra.mxu0 0
      %2410 = vmatprep.subr.bf16.mxu0 0
      %2411 = vmatpush1.bf16.msra.mxu0 0
      %2412 = vmatprep.subr.bf16.mxu0 0
      %2413 = vmatpush1.bf16.msra.mxu0 0
      %2414 = vmatprep.subr.bf16.mxu0 0
      %2415 = vmatpush1.bf16.msra.mxu0 0
      %2416 = vmatprep.subr.bf16.mxu0 0
      %2417 = vmatpush1.bf16.msra.mxu0 0
      %2418 = vmatprep.subr.bf16.mxu0 0
      %2419 = vmatpush1.bf16.msra.mxu0 0
      %2420 = vmatprep.subr.bf16.mxu0 0
      %2421 = vmatpush1.bf16.msra.mxu0 0
      %2422 = vmatprep.subr.bf16.mxu0 0
      %2423 = vmatpush1.bf16.msra.mxu0 0
      %2424 = vmatprep.mubr.bf16.mxu0 0
      %2425 = vmatmul.mubr.bf16.gmra.mrb[0].mxu0 %v2390
      %v2426 = vpop.f32.mrb[0].mxu0
      %v2427 = vadd.f32 0.0, %v2426
      %v2428 = vpop.f32.mrb[0].mxu0
      %v2429 = vpop.f32.mrb[0].mxu0
      %v2430 = vadd.f32 0.0, %v2429
      %v2431 = vpop.f32.mrb[0].mxu0
      %2432 = vdwg.mxu0
      %v2433 = vadd.f32 %v2384, %v2427
      %v2434 = vadd.f32 %v2385, %v2430
      %v2435 = vrot.slane %v2183, 2
      %v2436 = vrot.slane %v2185, 3
      %v2437 = vor.u32 %v2435, %v2436
      %v2438 = vrot.slane %v2332, 2
      %v2439 = vrot.slane %v2335, 3
      %v2440 = vor.u32 %v2438, %v2439
      %v2441 = vsel %vm858, %v2437, %v2440
      %v2443 = vsel %vm589, %v2441, 0
      %2445 = vmatprep.subr.bf16.mxu0 0
      %2446 = vmatpush1.bf16.msra.mxu0 %v870
      %2447 = vmatprep.subr.bf16.mxu0 0
      %2448 = vmatpush1.bf16.msra.mxu0 0
      %2449 = vmatprep.subr.bf16.mxu0 0
      %2450 = vmatpush1.bf16.msra.mxu0 0
      %2451 = vmatprep.subr.bf16.mxu0 0
      %2452 = vmatpush1.bf16.msra.mxu0 0
      %2453 = vmatprep.subr.bf16.mxu0 0
      %2454 = vmatpush1.bf16.msra.mxu0 0
      %2455 = vmatprep.subr.bf16.mxu0 0
      %2456 = vmatpush1.bf16.msra.mxu0 0
      %2457 = vmatprep.subr.bf16.mxu0 0
      %2458 = vmatpush1.bf16.msra.mxu0 0
      %2459 = vmatprep.subr.bf16.mxu0 0
      %2460 = vmatpush1.bf16.msra.mxu0 0
      %2461 = vmatprep.subr.bf16.mxu0 0
      %2462 = vmatpush1.bf16.msra.mxu0 0
      %2463 = vmatprep.subr.bf16.mxu0 0
      %2464 = vmatpush1.bf16.msra.mxu0 0
      %2465 = vmatprep.subr.bf16.mxu0 0
      %2466 = vmatpush1.bf16.msra.mxu0 0
      %2467 = vmatprep.subr.bf16.mxu0 0
      %2468 = vmatpush1.bf16.msra.mxu0 0
      %2469 = vmatprep.subr.bf16.mxu0 0
      %2470 = vmatpush1.bf16.msra.mxu0 0
      %2471 = vmatprep.subr.bf16.mxu0 0
      %2472 = vmatpush1.bf16.msra.mxu0 0
      %2473 = vmatprep.subr.bf16.mxu0 0
      %2474 = vmatpush1.bf16.msra.mxu0 0
      %2475 = vmatprep.subr.bf16.mxu0 0
      %2476 = vmatpush1.bf16.msra.mxu0 0
      %2477 = vmatprep.mubr.bf16.mxu0 0
      %2478 = vmatmul.mubr.bf16.gmra.mrb[0].mxu0 %v2443
      %v2479 = vpop.f32.mrb[0].mxu0
      %v2480 = vadd.f32 0.0, %v2479
      %v2481 = vpop.f32.mrb[0].mxu0
      %v2482 = vpop.f32.mrb[0].mxu0
      %v2483 = vadd.f32 0.0, %v2482
      %v2484 = vpop.f32.mrb[0].mxu0
      %2485 = vdwg.mxu0
      %v2486 = vadd.f32 %v2433, %v2480
      %v2487 = vadd.f32 %v2434, %v2483
      %v2488 = vmax.f32 %v2486, 0.0
      %v2489 = vmax.f32 %v2487, 0.0
      %v2490 = vpack.c.bf16 %v2489, %v2488
      %v2492 = vshrl.u32 %v2490, 16
      %v2494 = vshll.u32 %v2490, 16
      %v2496 = vrot.slane %v2494, 1
      %v2497 = vor.u32 %v2492, %v2496
      %v2499 = vsel %vm937, %v2497, 0
      %2501 = vmatprep.subr.bf16.mxu0 0
      %2502 = vmatpush1.bf16.msra.mxu0 %v933
      %2503 = vmatprep.subr.bf16.mxu0 0
      %2504 = vmatpush1.bf16.msra.mxu0 %v934
      %2505 = vmatprep.subr.bf16.mxu0 0
      %2506 = vmatpush1.bf16.msra.mxu0 0
      %2507 = vmatprep.subr.bf16.mxu0 0
      %2508 = vmatpush1.bf16.msra.mxu0 0
      %2509 = vmatprep.subr.bf16.mxu0 0
      %2510 = vmatpush1.bf16.msra.mxu0 0
      %2511 = vmatprep.subr.bf16.mxu0 0
      %2512 = vmatpush1.bf16.msra.mxu0 0
      %2513 = vmatprep.subr.bf16.mxu0 0
      %2514 = vmatpush1.bf16.msra.mxu0 0
      %2515 = vmatprep.subr.bf16.mxu0 0
      %2516 = vmatpush1.bf16.msra.mxu0 0
      %2517 = vmatprep.subr.bf16.mxu0 0
      %2518 = vmatpush1.bf16.msra.mxu0 0
      %2519 = vmatprep.subr.bf16.mxu0 0
      %2520 = vmatpush1.bf16.msra.mxu0 0
      %2521 = vmatprep.subr.bf16.mxu0 0
      %2522 = vmatpush1.bf16.msra.mxu0 0
      %2523 = vmatprep.subr.bf16.mxu0 0
      %2524 = vmatpush1.bf16.msra.mxu0 0
      %2525 = vmatprep.subr.bf16.mxu0 0
      %2526 = vmatpush1.bf16.msra.mxu0 0
      %2527 = vmatprep.subr.bf16.mxu0 0
      %2528 = vmatpush1.bf16.msra.mxu0 0
      %2529 = vmatprep.subr.bf16.mxu0 0
      %2530 = vmatpush1.bf16.msra.mxu0 0
      %2531 = vmatprep.subr.bf16.mxu0 0
      %2532 = vmatpush1.bf16.msra.mxu0 0
      %2533 = vmatprep.mubr.bf16.mxu0 0
      %2534 = vmatmul.mubr.bf16.gmra.mrb[0].mxu0 %v2499
      %v2535 = vpop.f32.mrb[0].mxu0
      %v2536 = vadd.f32 0.0, %v2535
      %v2537 = vpop.f32.mrb[0].mxu0
      %v2538 = vpop.f32.mrb[0].mxu0
      %v2539 = vadd.f32 0.0, %v2538
      %v2540 = vpop.f32.mrb[0].mxu0
      %2541 = vdwg.mxu0
      %v2542 = vsel %vm937, %v2490, 0
      %2544 = vmatprep.subr.bf16.mxu0 0
      %2545 = vmatpush1.bf16.msra.mxu0 %v990
      %2546 = vmatprep.subr.bf16.mxu0 0
      %2547 = vmatpush1.bf16.msra.mxu0 %v991
      %2548 = vmatprep.subr.bf16.mxu0 0
      %2549 = vmatpush1.bf16.msra.mxu0 0
      %2550 = vmatprep.subr.bf16.mxu0 0
      %2551 = vmatpush1.bf16.msra.mxu0 0
      %2552 = vmatprep.subr.bf16.mxu0 0
      %2553 = vmatpush1.bf16.msra.mxu0 0
      %2554 = vmatprep.subr.bf16.mxu0 0
      %2555 = vmatpush1.bf16.msra.mxu0 0
      %2556 = vmatprep.subr.bf16.mxu0 0
      %2557 = vmatpush1.bf16.msra.mxu0 0
      %2558 = vmatprep.subr.bf16.mxu0 0
      %2559 = vmatpush1.bf16.msra.mxu0 0
      %2560 = vmatprep.subr.bf16.mxu0 0
      %2561 = vmatpush1.bf16.msra.mxu0 0
      %2562 = vmatprep.subr.bf16.mxu0 0
      %2563 = vmatpush1.bf16.msra.mxu0 0
      %2564 = vmatprep.subr.bf16.mxu0 0
      %2565 = vmatpush1.bf16.msra.mxu0 0
      %2566 = vmatprep.subr.bf16.mxu0 0
      %2567 = vmatpush1.bf16.msra.mxu0 0
      %2568 = vmatprep.subr.bf16.mxu0 0
      %2569 = vmatpush1.bf16.msra.mxu0 0
      %2570 = vmatprep.subr.bf16.mxu0 0
      %2571 = vmatpush1.bf16.msra.mxu0 0
      %2572 = vmatprep.subr.bf16.mxu0 0
      %2573 = vmatpush1.bf16.msra.mxu0 0
      %2574 = vmatprep.subr.bf16.mxu0 0
      %2575 = vmatpush1.bf16.msra.mxu0 0
      %2576 = vmatprep.mubr.bf16.mxu0 0
      %2577 = vmatmul.mubr.bf16.gmra.mrb[0].mxu0 %v2542
      %v2578 = vpop.f32.mrb[0].mxu0
      %v2579 = vadd.f32 %v2536, %v2578
      %v2580 = vpop.f32.mrb[0].mxu0
      %v2581 = vpop.f32.mrb[0].mxu0
      %v2582 = vadd.f32 %v2539, %v2581
      %v2583 = vpop.f32.mrb[0].mxu0
      %2584 = vdwg.mxu0
      %v2586 = vrot.slane %v2490, 1
      %v2588 = vsel %vm937, %v2586, 0
      %2590 = vmatprep.subr.bf16.mxu0 0
      %2591 = vmatpush1.bf16.msra.mxu0 %v1047
      %2592 = vmatprep.subr.bf16.mxu0 0
      %2593 = vmatpush1.bf16.msra.mxu0 %v1048
      %2594 = vmatprep.subr.bf16.mxu0 0
      %2595 = vmatpush1.bf16.msra.mxu0 0
      %2596 = vmatprep.subr.bf16.mxu0 0
      %2597 = vmatpush1.bf16.msra.mxu0 0
      %2598 = vmatprep.subr.bf16.mxu0 0
      %2599 = vmatpush1.bf16.msra.mxu0 0
      %2600 = vmatprep.subr.bf16.mxu0 0
      %2601 = vmatpush1.bf16.msra.mxu0 0
      %2602 = vmatprep.subr.bf16.mxu0 0
      %2603 = vmatpush1.bf16.msra.mxu0 0
      %2604 = vmatprep.subr.bf16.mxu0 0
      %2605 = vmatpush1.bf16.msra.mxu0 0
      %2606 = vmatprep.subr.bf16.mxu0 0
      %2607 = vmatpush1.bf16.msra.mxu0 0
      %2608 = vmatprep.subr.bf16.mxu0 0
      %2609 = vmatpush1.bf16.msra.mxu0 0
      %2610 = vmatprep.subr.bf16.mxu0 0
      %2611 = vmatpush1.bf16.msra.mxu0 0
      %2612 = vmatprep.subr.bf16.mxu0 0
      %2613 = vmatpush1.bf16.msra.mxu0 0
      %2614 = vmatprep.subr.bf16.mxu0 0
      %2615 = vmatpush1.bf16.msra.mxu0 0
      %2616 = vmatprep.subr.bf16.mxu0 0
      %2617 = vmatpush1.bf16.msra.mxu0 0
      %2618 = vmatprep.subr.bf16.mxu0 0
      %2619 = vmatpush1.bf16.msra.mxu0 0
      %2620 = vmatprep.subr.bf16.mxu0 0
      %2621 = vmatpush1.bf16.msra.mxu0 0
      %2622 = vmatprep.mubr.bf16.mxu0 0
      %2623 = vmatmul.mubr.bf16.gmra.mrb[0].mxu0 %v2588
      %v2624 = vpop.f32.mrb[0].mxu0
      %v2625 = vadd.f32 0.0, %v2624
      %v2626 = vpop.f32.mrb[0].mxu0
      %v2627 = vpop.f32.mrb[0].mxu0
      %v2628 = vadd.f32 0.0, %v2627
      %v2629 = vpop.f32.mrb[0].mxu0
      %2630 = vdwg.mxu0
      %v2631 = vadd.f32 %v2579, %v2625
      %v2632 = vadd.f32 %v2582, %v2628
      %v2633 = vrot.slane %v2492, 1
      %v2634 = vrot.slane %v2494, 2
      %v2635 = vor.u32 %v2633, %v2634
      %v2637 = vsel %vm937, %v2635, 0
      %2639 = vmatprep.subr.bf16.mxu0 0
      %2640 = vmatpush1.bf16.msra.mxu0 %v1108
      %2641 = vmatprep.subr.bf16.mxu0 0
      %2642 = vmatpush1.bf16.msra.mxu0 %v1109
      %2643 = vmatprep.subr.bf16.mxu0 0
      %2644 = vmatpush1.bf16.msra.mxu0 0
      %2645 = vmatprep.subr.bf16.mxu0 0
      %2646 = vmatpush1.bf16.msra.mxu0 0
      %2647 = vmatprep.subr.bf16.mxu0 0
      %2648 = vmatpush1.bf16.msra.mxu0 0
      %2649 = vmatprep.subr.bf16.mxu0 0
      %2650 = vmatpush1.bf16.msra.mxu0 0
      %2651 = vmatprep.subr.bf16.mxu0 0
      %2652 = vmatpush1.bf16.msra.mxu0 0
      %2653 = vmatprep.subr.bf16.mxu0 0
      %2654 = vmatpush1.bf16.msra.mxu0 0
      %2655 = vmatprep.subr.bf16.mxu0 0
      %2656 = vmatpush1.bf16.msra.mxu0 0
      %2657 = vmatprep.subr.bf16.mxu0 0
      %2658 = vmatpush1.bf16.msra.mxu0 0
      %2659 = vmatprep.subr.bf16.mxu0 0
      %2660 = vmatpush1.bf16.msra.mxu0 0
      %2661 = vmatprep.subr.bf16.mxu0 0
      %2662 = vmatpush1.bf16.msra.mxu0 0
      %2663 = vmatprep.subr.bf16.mxu0 0
      %2664 = vmatpush1.bf16.msra.mxu0 0
      %2665 = vmatprep.subr.bf16.mxu0 0
      %2666 = vmatpush1.bf16.msra.mxu0 0
      %2667 = vmatprep.subr.bf16.mxu0 0
      %2668 = vmatpush1.bf16.msra.mxu0 0
      %2669 = vmatprep.subr.bf16.mxu0 0
      %2670 = vmatpush1.bf16.msra.mxu0 0
      %2671 = vmatprep.mubr.bf16.mxu0 0
      %2672 = vmatmul.mubr.bf16.gmra.mrb[0].mxu0 %v2637
      %v2673 = vpop.f32.mrb[0].mxu0
      %v2674 = vadd.f32 0.0, %v2673
      %v2675 = vpop.f32.mrb[0].mxu0
      %v2676 = vpop.f32.mrb[0].mxu0
      %v2677 = vadd.f32 0.0, %v2676
      %v2678 = vpop.f32.mrb[0].mxu0
      %2679 = vdwg.mxu0
      %v2680 = vadd.f32 %v2631, %v2674
      %v2681 = vadd.f32 %v2632, %v2677
      %v2682 = vrot.slane %v2490, 2
      %v2684 = vsel %vm937, %v2682, 0
      %2686 = vmatprep.subr.bf16.mxu0 0
      %2687 = vmatpush1.bf16.msra.mxu0 %v1167
      %2688 = vmatprep.subr.bf16.mxu0 0
      %2689 = vmatpush1.bf16.msra.mxu0 %v1168
      %2690 = vmatprep.subr.bf16.mxu0 0
      %2691 = vmatpush1.bf16.msra.mxu0 0
      %2692 = vmatprep.subr.bf16.mxu0 0
      %2693 = vmatpush1.bf16.msra.mxu0 0
      %2694 = vmatprep.subr.bf16.mxu0 0
      %2695 = vmatpush1.bf16.msra.mxu0 0
      %2696 = vmatprep.subr.bf16.mxu0 0
      %2697 = vmatpush1.bf16.msra.mxu0 0
      %2698 = vmatprep.subr.bf16.mxu0 0
      %2699 = vmatpush1.bf16.msra.mxu0 0
      %2700 = vmatprep.subr.bf16.mxu0 0
      %2701 = vmatpush1.bf16.msra.mxu0 0
      %2702 = vmatprep.subr.bf16.mxu0 0
      %2703 = vmatpush1.bf16.msra.mxu0 0
      %2704 = vmatprep.subr.bf16.mxu0 0
      %2705 = vmatpush1.bf16.msra.mxu0 0
      %2706 = vmatprep.subr.bf16.mxu0 0
      %2707 = vmatpush1.bf16.msra.mxu0 0
      %2708 = vmatprep.subr.bf16.mxu0 0
      %2709 = vmatpush1.bf16.msra.mxu0 0
      %2710 = vmatprep.subr.bf16.mxu0 0
      %2711 = vmatpush1.bf16.msra.mxu0 0
      %2712 = vmatprep.subr.bf16.mxu0 0
      %2713 = vmatpush1.bf16.msra.mxu0 0
      %2714 = vmatprep.subr.bf16.mxu0 0
      %2715 = vmatpush1.bf16.msra.mxu0 0
      %2716 = vmatprep.subr.bf16.mxu0 0
      %2717 = vmatpush1.bf16.msra.mxu0 0
      %2718 = vmatprep.mubr.bf16.mxu0 0
      %2719 = vmatmul.mubr.bf16.gmra.mrb[0].mxu0 %v2684
      %v2720 = vpop.f32.mrb[0].mxu0
      %v2721 = vadd.f32 0.0, %v2720
      %v2722 = vpop.f32.mrb[0].mxu0
      %v2723 = vpop.f32.mrb[0].mxu0
      %v2724 = vadd.f32 0.0, %v2723
      %v2725 = vpop.f32.mrb[0].mxu0
      %2726 = vdwg.mxu0
      %v2727 = vadd.f32 %v2680, %v2721
      %v2728 = vadd.f32 %v2681, %v2724
      %v2729 = vmax.f32 %v2727, 0.0
      %v2730 = vmax.f32 %v2728, 0.0
      %v2731 = vpack.c.bf16 %v446, %v446
      %v2733 = vshrl.u32 %v2731, 16
      %v2735 = vshll.u32 %v2731, 16
      %v2737 = vrot.slane %v2735, 1
      %v2738 = vor.u32 %v2733, %v2737
      %v2740 = vsel %vm589, %v2738, 0
      %2742 = vmatprep.subr.bf16.mxu0 0
      %2743 = vmatpush1.bf16.msra.mxu0 %v1231
      %2744 = vmatprep.subr.bf16.mxu0 0
      %2745 = vmatpush1.bf16.msra.mxu0 0
      %2746 = vmatprep.subr.bf16.mxu0 0
      %2747 = vmatpush1.bf16.msra.mxu0 0
      %2748 = vmatprep.subr.bf16.mxu0 0
      %2749 = vmatpush1.bf16.msra.mxu0 0
      %2750 = vmatprep.subr.bf16.mxu0 0
      %2751 = vmatpush1.bf16.msra.mxu0 0
      %2752 = vmatprep.subr.bf16.mxu0 0
      %2753 = vmatpush1.bf16.msra.mxu0 0
      %2754 = vmatprep.subr.bf16.mxu0 0
      %2755 = vmatpush1.bf16.msra.mxu0 0
      %2756 = vmatprep.subr.bf16.mxu0 0
      %2757 = vmatpush1.bf16.msra.mxu0 0
      %2758 = vmatprep.subr.bf16.mxu0 0
      %2759 = vmatpush1.bf16.msra.mxu0 0
      %2760 = vmatprep.subr.bf16.mxu0 0
      %2761 = vmatpush1.bf16.msra.mxu0 0
      %2762 = vmatprep.subr.bf16.mxu0 0
      %2763 = vmatpush1.bf16.msra.mxu0 0
      %2764 = vmatprep.subr.bf16.mxu0 0
      %2765 = vmatpush1.bf16.msra.mxu0 0
      %2766 = vmatprep.subr.bf16.mxu0 0
      %2767 = vmatpush1.bf16.msra.mxu0 0
      %2768 = vmatprep.subr.bf16.mxu0 0
      %2769 = vmatpush1.bf16.msra.mxu0 0
      %2770 = vmatprep.subr.bf16.mxu0 0
      %2771 = vmatpush1.bf16.msra.mxu0 0
      %2772 = vmatprep.subr.bf16.mxu0 0
      %2773 = vmatpush1.bf16.msra.mxu0 0
      %2774 = vmatprep.mubr.bf16.mxu0 0
      %2775 = vmatmul.mubr.bf16.gmra.mrb[0].mxu0 %v2740
      %v2776 = vpop.f32.mrb[0].mxu0
      %v2777 = vadd.f32 0.0, %v2776
      %v2778 = vpop.f32.mrb[0].mxu0
      %v2779 = vpop.f32.mrb[0].mxu0
      %v2780 = vpop.f32.mrb[0].mxu0
      %2781 = vdwg.mxu0
      %v2782 = vsel %vm589, %v2731, 0
      %2784 = vmatprep.subr.bf16.mxu0 0
      %2785 = vmatpush1.bf16.msra.mxu0 %v1276
      %2786 = vmatprep.subr.bf16.mxu0 0
      %2787 = vmatpush1.bf16.msra.mxu0 0
      %2788 = vmatprep.subr.bf16.mxu0 0
      %2789 = vmatpush1.bf16.msra.mxu0 0
      %2790 = vmatprep.subr.bf16.mxu0 0
      %2791 = vmatpush1.bf16.msra.mxu0 0
      %2792 = vmatprep.subr.bf16.mxu0 0
      %2793 = vmatpush1.bf16.msra.mxu0 0
      %2794 = vmatprep.subr.bf16.mxu0 0
      %2795 = vmatpush1.bf16.msra.mxu0 0
      %2796 = vmatprep.subr.bf16.mxu0 0
      %2797 = vmatpush1.bf16.msra.mxu0 0
      %2798 = vmatprep.subr.bf16.mxu0 0
      %2799 = vmatpush1.bf16.msra.mxu0 0
      %2800 = vmatprep.subr.bf16.mxu0 0
      %2801 = vmatpush1.bf16.msra.mxu0 0
      %2802 = vmatprep.subr.bf16.mxu0 0
      %2803 = vmatpush1.bf16.msra.mxu0 0
      %2804 = vmatprep.subr.bf16.mxu0 0
      %2805 = vmatpush1.bf16.msra.mxu0 0
      %2806 = vmatprep.subr.bf16.mxu0 0
      %2807 = vmatpush1.bf16.msra.mxu0 0
      %2808 = vmatprep.subr.bf16.mxu0 0
      %2809 = vmatpush1.bf16.msra.mxu0 0
      %2810 = vmatprep.subr.bf16.mxu0 0
      %2811 = vmatpush1.bf16.msra.mxu0 0
      %2812 = vmatprep.subr.bf16.mxu0 0
      %2813 = vmatpush1.bf16.msra.mxu0 0
      %2814 = vmatprep.subr.bf16.mxu0 0
      %2815 = vmatpush1.bf16.msra.mxu0 0
      %2816 = vmatprep.mubr.bf16.mxu0 0
      %2817 = vmatmul.mubr.bf16.gmra.mrb[0].mxu0 %v2782
      %v2818 = vpop.f32.mrb[0].mxu0
      %v2819 = vadd.f32 %v2777, %v2818
      %v2820 = vpop.f32.mrb[0].mxu0
      %v2821 = vpop.f32.mrb[0].mxu0
      %v2822 = vpop.f32.mrb[0].mxu0
      %2823 = vdwg.mxu0
      %v2825 = vrot.slane %v2731, 1
      %v2827 = vsel %vm589, %v2825, 0
      %2829 = vmatprep.subr.bf16.mxu0 0
      %2830 = vmatpush1.bf16.msra.mxu0 %v1324
      %2831 = vmatprep.subr.bf16.mxu0 0
      %2832 = vmatpush1.bf16.msra.mxu0 0
      %2833 = vmatprep.subr.bf16.mxu0 0
      %2834 = vmatpush1.bf16.msra.mxu0 0
      %2835 = vmatprep.subr.bf16.mxu0 0
      %2836 = vmatpush1.bf16.msra.mxu0 0
      %2837 = vmatprep.subr.bf16.mxu0 0
      %2838 = vmatpush1.bf16.msra.mxu0 0
      %2839 = vmatprep.subr.bf16.mxu0 0
      %2840 = vmatpush1.bf16.msra.mxu0 0
      %2841 = vmatprep.subr.bf16.mxu0 0
      %2842 = vmatpush1.bf16.msra.mxu0 0
      %2843 = vmatprep.subr.bf16.mxu0 0
      %2844 = vmatpush1.bf16.msra.mxu0 0
      %2845 = vmatprep.subr.bf16.mxu0 0
      %2846 = vmatpush1.bf16.msra.mxu0 0
      %2847 = vmatprep.subr.bf16.mxu0 0
      %2848 = vmatpush1.bf16.msra.mxu0 0
      %2849 = vmatprep.subr.bf16.mxu0 0
      %2850 = vmatpush1.bf16.msra.mxu0 0
      %2851 = vmatprep.subr.bf16.mxu0 0
      %2852 = vmatpush1.bf16.msra.mxu0 0
      %2853 = vmatprep.subr.bf16.mxu0 0
      %2854 = vmatpush1.bf16.msra.mxu0 0
      %2855 = vmatprep.subr.bf16.mxu0 0
      %2856 = vmatpush1.bf16.msra.mxu0 0
      %2857 = vmatprep.subr.bf16.mxu0 0
      %2858 = vmatpush1.bf16.msra.mxu0 0
      %2859 = vmatprep.subr.bf16.mxu0 0
      %2860 = vmatpush1.bf16.msra.mxu0 0
      %2861 = vmatprep.mubr.bf16.mxu0 0
      %2862 = vmatmul.mubr.bf16.gmra.mrb[0].mxu0 %v2827
      %v2863 = vpop.f32.mrb[0].mxu0
      %v2864 = vadd.f32 0.0, %v2863
      %v2865 = vpop.f32.mrb[0].mxu0
      %v2866 = vpop.f32.mrb[0].mxu0
      %v2867 = vpop.f32.mrb[0].mxu0
      %2868 = vdwg.mxu0
      %v2869 = vadd.f32 %v2819, %v2864
      %v2870 = vrot.slane %v2733, 1
      %v2871 = vrot.slane %v2735, 2
      %v2872 = vor.u32 %v2870, %v2871
      %v2874 = vsel %vm589, %v2872, 0
      %2876 = vmatprep.subr.bf16.mxu0 0
      %2877 = vmatpush1.bf16.msra.mxu0 %v1374
      %2878 = vmatprep.subr.bf16.mxu0 0
      %2879 = vmatpush1.bf16.msra.mxu0 0
      %2880 = vmatprep.subr.bf16.mxu0 0
      %2881 = vmatpush1.bf16.msra.mxu0 0
      %2882 = vmatprep.subr.bf16.mxu0 0
      %2883 = vmatpush1.bf16.msra.mxu0 0
      %2884 = vmatprep.subr.bf16.mxu0 0
      %2885 = vmatpush1.bf16.msra.mxu0 0
      %2886 = vmatprep.subr.bf16.mxu0 0
      %2887 = vmatpush1.bf16.msra.mxu0 0
      %2888 = vmatprep.subr.bf16.mxu0 0
      %2889 = vmatpush1.bf16.msra.mxu0 0
      %2890 = vmatprep.subr.bf16.mxu0 0
      %2891 = vmatpush1.bf16.msra.mxu0 0
      %2892 = vmatprep.subr.bf16.mxu0 0
      %2893 = vmatpush1.bf16.msra.mxu0 0
      %2894 = vmatprep.subr.bf16.mxu0 0
      %2895 = vmatpush1.bf16.msra.mxu0 0
      %2896 = vmatprep.subr.bf16.mxu0 0
      %2897 = vmatpush1.bf16.msra.mxu0 0
      %2898 = vmatprep.subr.bf16.mxu0 0
      %2899 = vmatpush1.bf16.msra.mxu0 0
      %2900 = vmatprep.subr.bf16.mxu0 0
      %2901 = vmatpush1.bf16.msra.mxu0 0
      %2902 = vmatprep.subr.bf16.mxu0 0
      %2903 = vmatpush1.bf16.msra.mxu0 0
      %2904 = vmatprep.subr.bf16.mxu0 0
      %2905 = vmatpush1.bf16.msra.mxu0 0
      %2906 = vmatprep.subr.bf16.mxu0 0
      %2907 = vmatpush1.bf16.msra.mxu0 0
      %2908 = vmatprep.mubr.bf16.mxu0 0
      %2909 = vmatmul.mubr.bf16.gmra.mrb[0].mxu0 %v2874
      %v2910 = vpop.f32.mrb[0].mxu0
      %v2911 = vadd.f32 0.0, %v2910
      %v2912 = vpop.f32.mrb[0].mxu0
      %v2913 = vpop.f32.mrb[0].mxu0
      %v2914 = vpop.f32.mrb[0].mxu0
      %2915 = vdwg.mxu0
      %v2916 = vadd.f32 %v2869, %v2911
      %v2917 = vpack.c.bf16 %v447, %v446
      %v2919 = vrot.slane %v2917, 2
      %v2921 = vsel %vm589, %v2919, 0
      %2923 = vmatprep.subr.bf16.mxu0 0
      %2924 = vmatpush1.bf16.msra.mxu0 %v1424
      %2925 = vmatprep.subr.bf16.mxu0 0
      %2926 = vmatpush1.bf16.msra.mxu0 0
      %2927 = vmatprep.subr.bf16.mxu0 0
      %2928 = vmatpush1.bf16.msra.mxu0 0
      %2929 = vmatprep.subr.bf16.mxu0 0
      %2930 = vmatpush1.bf16.msra.mxu0 0
      %2931 = vmatprep.subr.bf16.mxu0 0
      %2932 = vmatpush1.bf16.msra.mxu0 0
      %2933 = vmatprep.subr.bf16.mxu0 0
      %2934 = vmatpush1.bf16.msra.mxu0 0
      %2935 = vmatprep.subr.bf16.mxu0 0
      %2936 = vmatpush1.bf16.msra.mxu0 0
      %2937 = vmatprep.subr.bf16.mxu0 0
      %2938 = vmatpush1.bf16.msra.mxu0 0
      %2939 = vmatprep.subr.bf16.mxu0 0
      %2940 = vmatpush1.bf16.msra.mxu0 0
      %2941 = vmatprep.subr.bf16.mxu0 0
      %2942 = vmatpush1.bf16.msra.mxu0 0
      %2943 = vmatprep.subr.bf16.mxu0 0
      %2944 = vmatpush1.bf16.msra.mxu0 0
      %2945 = vmatprep.subr.bf16.mxu0 0
      %2946 = vmatpush1.bf16.msra.mxu0 0
      %2947 = vmatprep.subr.bf16.mxu0 0
      %2948 = vmatpush1.bf16.msra.mxu0 0
      %2949 = vmatprep.subr.bf16.mxu0 0
      %2950 = vmatpush1.bf16.msra.mxu0 0
      %2951 = vmatprep.subr.bf16.mxu0 0
      %2952 = vmatpush1.bf16.msra.mxu0 0
      %2953 = vmatprep.subr.bf16.mxu0 0
      %2954 = vmatpush1.bf16.msra.mxu0 0
      %2955 = vmatprep.mubr.bf16.mxu0 0
      %2956 = vmatmul.mubr.bf16.gmra.mrb[0].mxu0 %v2921
      %v2957 = vpop.f32.mrb[0].mxu0
      %v2958 = vadd.f32 0.0, %v2957
      %v2959 = vpop.f32.mrb[0].mxu0
      %v2960 = vpop.f32.mrb[0].mxu0
      %v2961 = vpop.f32.mrb[0].mxu0
      %2962 = vdwg.mxu0
      %v2963 = vadd.f32 %v2916, %v2958
      %v2965 = vshrl.u32 %v2917, 16
      %v2967 = vrot.slane %v2965, 2
      %v2968 = vshll.u32 %v2917, 16
      %v2970 = vrot.slane %v2968, 3
      %v2971 = vor.u32 %v2967, %v2970
      %v2973 = vsel %vm589, %v2971, 0
      %2975 = vmatprep.subr.bf16.mxu0 0
      %2976 = vmatpush1.bf16.msra.mxu0 %v1479
      %2977 = vmatprep.subr.bf16.mxu0 0
      %2978 = vmatpush1.bf16.msra.mxu0 0
      %2979 = vmatprep.subr.bf16.mxu0 0
      %2980 = vmatpush1.bf16.msra.mxu0 0
      %2981 = vmatprep.subr.bf16.mxu0 0
      %2982 = vmatpush1.bf16.msra.mxu0 0
      %2983 = vmatprep.subr.bf16.mxu0 0
      %2984 = vmatpush1.bf16.msra.mxu0 0
      %2985 = vmatprep.subr.bf16.mxu0 0
      %2986 = vmatpush1.bf16.msra.mxu0 0
      %2987 = vmatprep.subr.bf16.mxu0 0
      %2988 = vmatpush1.bf16.msra.mxu0 0
      %2989 = vmatprep.subr.bf16.mxu0 0
      %2990 = vmatpush1.bf16.msra.mxu0 0
      %2991 = vmatprep.subr.bf16.mxu0 0
      %2992 = vmatpush1.bf16.msra.mxu0 0
      %2993 = vmatprep.subr.bf16.mxu0 0
      %2994 = vmatpush1.bf16.msra.mxu0 0
      %2995 = vmatprep.subr.bf16.mxu0 0
      %2996 = vmatpush1.bf16.msra.mxu0 0
      %2997 = vmatprep.subr.bf16.mxu0 0
      %2998 = vmatpush1.bf16.msra.mxu0 0
      %2999 = vmatprep.subr.bf16.mxu0 0
      %3000 = vmatpush1.bf16.msra.mxu0 0
      %3001 = vmatprep.subr.bf16.mxu0 0
      %3002 = vmatpush1.bf16.msra.mxu0 0
      %3003 = vmatprep.subr.bf16.mxu0 0
      %3004 = vmatpush1.bf16.msra.mxu0 0
      %3005 = vmatprep.subr.bf16.mxu0 0
      %3006 = vmatpush1.bf16.msra.mxu0 0
      %3007 = vmatprep.mubr.bf16.mxu0 0
      %3008 = vmatmul.mubr.bf16.gmra.mrb[0].mxu0 %v2973
      %v3009 = vpop.f32.mrb[0].mxu0
      %v3010 = vadd.f32 0.0, %v3009
      %v3011 = vpop.f32.mrb[0].mxu0
      %v3012 = vpop.f32.mrb[0].mxu0
      %v3013 = vpop.f32.mrb[0].mxu0
      %3014 = vdwg.mxu0
      %v3015 = vadd.f32 %v2963, %v3010
      %v3016 = vmax.f32 %v3015, 0.0
      %v3017 = vpack.c.bf16 %v3016, %v3016
      %v3019 = vshrl.u32 %v3017, 16
      %v3022 = vsel %vm937, %v3019, 0
      %3024 = vmatprep.subr.bf16.mxu0 0
      %3025 = vmatpush1.bf16.msra.mxu0 %v1535
      %3026 = vmatprep.subr.bf16.mxu0 0
      %3027 = vmatpush1.bf16.msra.mxu0 %v1536
      %3028 = vmatprep.subr.bf16.mxu0 0
      %3029 = vmatpush1.bf16.msra.mxu0 0
      %3030 = vmatprep.subr.bf16.mxu0 0
      %3031 = vmatpush1.bf16.msra.mxu0 0
      %3032 = vmatprep.subr.bf16.mxu0 0
      %3033 = vmatpush1.bf16.msra.mxu0 0
      %3034 = vmatprep.subr.bf16.mxu0 0
      %3035 = vmatpush1.bf16.msra.mxu0 0
      %3036 = vmatprep.subr.bf16.mxu0 0
      %3037 = vmatpush1.bf16.msra.mxu0 0
      %3038 = vmatprep.subr.bf16.mxu0 0
      %3039 = vmatpush1.bf16.msra.mxu0 0
      %3040 = vmatprep.subr.bf16.mxu0 0
      %3041 = vmatpush1.bf16.msra.mxu0 0
      %3042 = vmatprep.subr.bf16.mxu0 0
      %3043 = vmatpush1.bf16.msra.mxu0 0
      %3044 = vmatprep.subr.bf16.mxu0 0
      %3045 = vmatpush1.bf16.msra.mxu0 0
      %3046 = vmatprep.subr.bf16.mxu0 0
      %3047 = vmatpush1.bf16.msra.mxu0 0
      %3048 = vmatprep.subr.bf16.mxu0 0
      %3049 = vmatpush1.bf16.msra.mxu0 0
      %3050 = vmatprep.subr.bf16.mxu0 0
      %3051 = vmatpush1.bf16.msra.mxu0 0
      %3052 = vmatprep.subr.bf16.mxu0 0
      %3053 = vmatpush1.bf16.msra.mxu0 0
      %3054 = vmatprep.subr.bf16.mxu0 0
      %3055 = vmatpush1.bf16.msra.mxu0 0
      %3056 = vmatprep.mubr.bf16.mxu0 0
      %3057 = vmatmul.mubr.bf16.gmra.mrb[0].mxu0 %v3022
      %v3058 = vpop.f32.mrb[0].mxu0
      %v3059 = vadd.f32 0.0, %v3058
      %v3060 = vpop.f32.mrb[0].mxu0
      %v3061 = vpop.f32.mrb[0].mxu0
      %v3062 = vpop.f32.mrb[0].mxu0
      %3063 = vdwg.mxu0
      %v3064 = vsel %vm937, %v3017, 0
      %3066 = vmatprep.subr.bf16.mxu0 0
      %3067 = vmatpush1.bf16.msra.mxu0 %v1590
      %3068 = vmatprep.subr.bf16.mxu0 0
      %3069 = vmatpush1.bf16.msra.mxu0 %v1591
      %3070 = vmatprep.subr.bf16.mxu0 0
      %3071 = vmatpush1.bf16.msra.mxu0 0
      %3072 = vmatprep.subr.bf16.mxu0 0
      %3073 = vmatpush1.bf16.msra.mxu0 0
      %3074 = vmatprep.subr.bf16.mxu0 0
      %3075 = vmatpush1.bf16.msra.mxu0 0
      %3076 = vmatprep.subr.bf16.mxu0 0
      %3077 = vmatpush1.bf16.msra.mxu0 0
      %3078 = vmatprep.subr.bf16.mxu0 0
      %3079 = vmatpush1.bf16.msra.mxu0 0
      %3080 = vmatprep.subr.bf16.mxu0 0
      %3081 = vmatpush1.bf16.msra.mxu0 0
      %3082 = vmatprep.subr.bf16.mxu0 0
      %3083 = vmatpush1.bf16.msra.mxu0 0
      %3084 = vmatprep.subr.bf16.mxu0 0
      %3085 = vmatpush1.bf16.msra.mxu0 0
      %3086 = vmatprep.subr.bf16.mxu0 0
      %3087 = vmatpush1.bf16.msra.mxu0 0
      %3088 = vmatprep.subr.bf16.mxu0 0
      %3089 = vmatpush1.bf16.msra.mxu0 0
      %3090 = vmatprep.subr.bf16.mxu0 0
      %3091 = vmatpush1.bf16.msra.mxu0 0
      %3092 = vmatprep.subr.bf16.mxu0 0
      %3093 = vmatpush1.bf16.msra.mxu0 0
      %3094 = vmatprep.subr.bf16.mxu0 0
      %3095 = vmatpush1.bf16.msra.mxu0 0
      %3096 = vmatprep.subr.bf16.mxu0 0
      %3097 = vmatpush1.bf16.msra.mxu0 0
      %3098 = vmatprep.mubr.bf16.mxu0 0
      %3099 = vmatmul.mubr.bf16.gmra.mrb[0].mxu0 %v3064
      %v3100 = vpop.f32.mrb[0].mxu0
      %v3101 = vadd.f32 %v3059, %v3100
      %v3102 = vpop.f32.mrb[0].mxu0
      %v3103 = vpop.f32.mrb[0].mxu0
      %v3104 = vpop.f32.mrb[0].mxu0
      %3105 = vdwg.mxu0
      %v3107 = vrot.slane %v3017, 1
      %v3109 = vsel %vm937, %v3107, 0
      %3111 = vmatprep.subr.bf16.mxu0 0
      %3112 = vmatpush1.bf16.msra.mxu0 %v1646
      %3113 = vmatprep.subr.bf16.mxu0 0
      %3114 = vmatpush1.bf16.msra.mxu0 %v1647
      %3115 = vmatprep.subr.bf16.mxu0 0
      %3116 = vmatpush1.bf16.msra.mxu0 0
      %3117 = vmatprep.subr.bf16.mxu0 0
      %3118 = vmatpush1.bf16.msra.mxu0 0
      %3119 = vmatprep.subr.bf16.mxu0 0
      %3120 = vmatpush1.bf16.msra.mxu0 0
      %3121 = vmatprep.subr.bf16.mxu0 0
      %3122 = vmatpush1.bf16.msra.mxu0 0
      %3123 = vmatprep.subr.bf16.mxu0 0
      %3124 = vmatpush1.bf16.msra.mxu0 0
      %3125 = vmatprep.subr.bf16.mxu0 0
      %3126 = vmatpush1.bf16.msra.mxu0 0
      %3127 = vmatprep.subr.bf16.mxu0 0
      %3128 = vmatpush1.bf16.msra.mxu0 0
      %3129 = vmatprep.subr.bf16.mxu0 0
      %3130 = vmatpush1.bf16.msra.mxu0 0
      %3131 = vmatprep.subr.bf16.mxu0 0
      %3132 = vmatpush1.bf16.msra.mxu0 0
      %3133 = vmatprep.subr.bf16.mxu0 0
      %3134 = vmatpush1.bf16.msra.mxu0 0
      %3135 = vmatprep.subr.bf16.mxu0 0
      %3136 = vmatpush1.bf16.msra.mxu0 0
      %3137 = vmatprep.subr.bf16.mxu0 0
      %3138 = vmatpush1.bf16.msra.mxu0 0
      %3139 = vmatprep.subr.bf16.mxu0 0
      %3140 = vmatpush1.bf16.msra.mxu0 0
      %3141 = vmatprep.subr.bf16.mxu0 0
      %3142 = vmatpush1.bf16.msra.mxu0 0
      %3143 = vmatprep.mubr.bf16.mxu0 0
      %3144 = vmatmul.mubr.bf16.gmra.mrb[0].mxu0 %v3109
      %v3145 = vpop.f32.mrb[0].mxu0
      %v3146 = vadd.f32 0.0, %v3145
      %v3147 = vpop.f32.mrb[0].mxu0
      %v3148 = vpop.f32.mrb[0].mxu0
      %v3149 = vpop.f32.mrb[0].mxu0
      %3150 = vdwg.mxu0
      %v3151 = vadd.f32 %v3101, %v3146
      %v3152 = vrot.slane %v3019, 1
      %v3154 = vsel %vm937, %v3152, 0
      %3156 = vmatprep.subr.bf16.mxu0 0
      %3157 = vmatpush1.bf16.msra.mxu0 %v1703
      %3158 = vmatprep.subr.bf16.mxu0 0
      %3159 = vmatpush1.bf16.msra.mxu0 %v1704
      %3160 = vmatprep.subr.bf16.mxu0 0
      %3161 = vmatpush1.bf16.msra.mxu0 0
      %3162 = vmatprep.subr.bf16.mxu0 0
      %3163 = vmatpush1.bf16.msra.mxu0 0
      %3164 = vmatprep.subr.bf16.mxu0 0
      %3165 = vmatpush1.bf16.msra.mxu0 0
      %3166 = vmatprep.subr.bf16.mxu0 0
      %3167 = vmatpush1.bf16.msra.mxu0 0
      %3168 = vmatprep.subr.bf16.mxu0 0
      %3169 = vmatpush1.bf16.msra.mxu0 0
      %3170 = vmatprep.subr.bf16.mxu0 0
      %3171 = vmatpush1.bf16.msra.mxu0 0
      %3172 = vmatprep.subr.bf16.mxu0 0
      %3173 = vmatpush1.bf16.msra.mxu0 0
      %3174 = vmatprep.subr.bf16.mxu0 0
      %3175 = vmatpush1.bf16.msra.mxu0 0
      %3176 = vmatprep.subr.bf16.mxu0 0
      %3177 = vmatpush1.bf16.msra.mxu0 0
      %3178 = vmatprep.subr.bf16.mxu0 0
      %3179 = vmatpush1.bf16.msra.mxu0 0
      %3180 = vmatprep.subr.bf16.mxu0 0
      %3181 = vmatpush1.bf16.msra.mxu0 0
      %3182 = vmatprep.subr.bf16.mxu0 0
      %3183 = vmatpush1.bf16.msra.mxu0 0
      %3184 = vmatprep.subr.bf16.mxu0 0
      %3185 = vmatpush1.bf16.msra.mxu0 0
      %3186 = vmatprep.subr.bf16.mxu0 0
      %3187 = vmatpush1.bf16.msra.mxu0 0
      %3188 = vmatprep.mubr.bf16.mxu0 0
      %3189 = vmatmul.mubr.bf16.gmra.mrb[0].mxu0 %v3154
      %v3190 = vpop.f32.mrb[0].mxu0
      %v3191 = vadd.f32 0.0, %v3190
      %v3192 = vpop.f32.mrb[0].mxu0
      %v3193 = vpop.f32.mrb[0].mxu0
      %v3194 = vpop.f32.mrb[0].mxu0
      %3195 = vdwg.mxu0
      %v3196 = vadd.f32 %v3151, %v3191
      %v3197 = vrot.slane %v3017, 2
      %v3199 = vsel %vm937, %v3197, 0
      %3201 = vmatprep.subr.bf16.mxu0 0
      %3202 = vmatpush1.bf16.msra.mxu0 %v1760
      %3203 = vmatprep.subr.bf16.mxu0 0
      %3204 = vmatpush1.bf16.msra.mxu0 %v1761
      %3205 = vmatprep.subr.bf16.mxu0 0
      %3206 = vmatpush1.bf16.msra.mxu0 0
      %3207 = vmatprep.subr.bf16.mxu0 0
      %3208 = vmatpush1.bf16.msra.mxu0 0
      %3209 = vmatprep.subr.bf16.mxu0 0
      %3210 = vmatpush1.bf16.msra.mxu0 0
      %3211 = vmatprep.subr.bf16.mxu0 0
      %3212 = vmatpush1.bf16.msra.mxu0 0
      %3213 = vmatprep.subr.bf16.mxu0 0
      %3214 = vmatpush1.bf16.msra.mxu0 0
      %3215 = vmatprep.subr.bf16.mxu0 0
      %3216 = vmatpush1.bf16.msra.mxu0 0
      %3217 = vmatprep.subr.bf16.mxu0 0
      %3218 = vmatpush1.bf16.msra.mxu0 0
      %3219 = vmatprep.subr.bf16.mxu0 0
      %3220 = vmatpush1.bf16.msra.mxu0 0
      %3221 = vmatprep.subr.bf16.mxu0 0
      %3222 = vmatpush1.bf16.msra.mxu0 0
      %3223 = vmatprep.subr.bf16.mxu0 0
      %3224 = vmatpush1.bf16.msra.mxu0 0
      %3225 = vmatprep.subr.bf16.mxu0 0
      %3226 = vmatpush1.bf16.msra.mxu0 0
      %3227 = vmatprep.subr.bf16.mxu0 0
      %3228 = vmatpush1.bf16.msra.mxu0 0
      %3229 = vmatprep.subr.bf16.mxu0 0
      %3230 = vmatpush1.bf16.msra.mxu0 0
      %3231 = vmatprep.subr.bf16.mxu0 0
      %3232 = vmatpush1.bf16.msra.mxu0 0
      %3233 = vmatprep.mubr.bf16.mxu0 0
      %3234 = vmatmul.mubr.bf16.gmra.mrb[0].mxu0 %v3199
      %v3235 = vpop.f32.mrb[0].mxu0
      %v3236 = vadd.f32 0.0, %v3235
      %v3237 = vpop.f32.mrb[0].mxu0
      %v3238 = vpop.f32.mrb[0].mxu0
      %v3239 = vpop.f32.mrb[0].mxu0
      %3240 = vdwg.mxu0
      %v3241 = vadd.f32 %v3196, %v3236
      %v3242 = vmax.f32 %v3241, 0.0
      %v3243 = vlaneseq
      %v3244 = vshrl.u32 %v3243, 7
      %v3245 = vsub.s32 0, %v3244
      %v3246 = vrot.slane %v3242, %v3245
      %v3247 = vmul.f32 %v2729, %v3246
      %v3248 = vmul.f32 %v2730, %v3246
      %v3249 = vsel %vm937, %v3247, 0.0
      %3250 = vadd.xlane.f32.xlu0 %v3249
      %v3251 = vpop.xlane.xlu0 %3250
      %v3252 = vsel %vm1818, %v3248, 0.0
      %3253 = vadd.xlane.f32.xlu0 %v3252
      %v3254 = vpop.xlane.xlu0 %3253
      %v3255 = vadd.f32 %v3251, 1e-15
      %v3256 = vadd.f32 %v3254, 1e-15
      %v3257 = vsel %vm1824, %v3256, 0.0
      %v3258 = vadd.f32 %v3255, %v3257
      %v3259 = vrot.slane %v3258, 4
      %v3260 = vadd.f32 %v3258, %v3259
      %v3261 = vrot.slane %v3260, 2
      %v3262 = vadd.f32 %v3260, %v3261
      %v3263 = vrot.slane %v3262, 1
      %v3264 = vadd.f32 %v3262, %v3263
      %v3265 = vrcp.pop %v3264
      %v3266 = vmul.f32 %v3255, %v3265
      %v3267 = vmul.f32 %v3256, %v3265
      %v3268 = vmul.f32 %v488, %v3266
      %v3269 = vmul.f32 %v489, %v3267
      %v3270 = vmul.f32 %v490, %v3266
      %v3271 = vmul.f32 %v491, %v3267
      %v3272 = vmul.f32 %v492, %v3266
      %v3273 = vmul.f32 %v493, %v3267
      %v3274 = vmul.f32 %v494, %v3266
      %v3275 = vmul.f32 %v495, %v3267
      %v3276 = vmul.f32 %v496, %v3266
      %v3277 = vmul.f32 %v497, %v3267
      %v3278 = vmul.f32 %v498, %v3266
      %v3279 = vmul.f32 %v499, %v3267
      %v3280 = vmul.f32 %v500, %v3266
      %v3281 = vmul.f32 %v501, %v3267
      %v3282 = vmul.f32 %v502, %v3266
      %v3283 = vmul.f32 %v503, %v3267
      %v3284 = vmul.f32 %v504, %v3266
      %v3285 = vmul.f32 %v505, %v3267
      %v3286 = vmul.f32 %v506, %v3266
      %v3287 = vmul.f32 %v507, %v3267
      %v3288 = vmul.f32 %v508, %v3266
      %v3289 = vmul.f32 %v509, %v3267
      %v3290 = vmul.f32 %v510, %v3266
      %v3291 = vmul.f32 %v511, %v3267
      %v3292 = vmul.f32 %v512, %v3266
      %v3293 = vmul.f32 %v513, %v3267
      %v3294 = vmul.f32 %v514, %v3266
      %v3295 = vmul.f32 %v515, %v3267
      %v3296 = vmul.f32 %v516, %v3266
      %v3297 = vmul.f32 %v517, %v3267
      %v3298 = vmul.f32 %v518, %v3266
      %v3299 = vmul.f32 %v519, %v3267
      %v3300 = vmul.f32 %v520, %v3266
      %v3301 = vmul.f32 %v521, %v3267
      %v3302 = vmul.f32 %v522, %v3266
      %v3303 = vmul.f32 %v523, %v3267
      %v3304 = vmul.f32 %v524, %v3266
      %v3305 = vmul.f32 %v525, %v3267
      %v3306 = vmul.f32 %v526, %v3266
      %v3307 = vmul.f32 %v527, %v3267
      %v3308 = vsel %vm589, %v3268, 0.0
      %v3309 = vsel %vm1877, %v3269, 0.0
      %v3310 = vadd.f32 %v3308, %v3309
      %v3311 = vrot.slane %v3310, 4
      %v3312 = vadd.f32 %v3310, %v3311
      %v3313 = vrot.slane %v3312, 2
      %v3314 = vadd.f32 %v3312, %v3313
      %v3315 = vrot.slane %v3314, 1
      %v3316 = vadd.f32 %v3314, %v3315
      %v3317 = vsel %vm589, %v3270, 0.0
      %v3318 = vsel %vm1877, %v3271, 0.0
      %v3319 = vadd.f32 %v3317, %v3318
      %v3320 = vrot.slane %v3319, 4
      %v3321 = vadd.f32 %v3319, %v3320
      %v3322 = vrot.slane %v3321, 2
      %v3323 = vadd.f32 %v3321, %v3322
      %v3324 = vrot.slane %v3323, 1
      %v3325 = vadd.f32 %v3323, %v3324
      %v3326 = vsel %vm589, %v3272, 0.0
      %v3327 = vsel %vm1877, %v3273, 0.0
      %v3328 = vadd.f32 %v3326, %v3327
      %v3329 = vrot.slane %v3328, 4
      %v3330 = vadd.f32 %v3328, %v3329
      %v3331 = vrot.slane %v3330, 2
      %v3332 = vadd.f32 %v3330, %v3331
      %v3333 = vrot.slane %v3332, 1
      %v3334 = vadd.f32 %v3332, %v3333
      %v3335 = vsel %vm589, %v3274, 0.0
      %v3336 = vsel %vm1877, %v3275, 0.0
      %v3337 = vadd.f32 %v3335, %v3336
      %v3338 = vrot.slane %v3337, 4
      %v3339 = vadd.f32 %v3337, %v3338
      %v3340 = vrot.slane %v3339, 2
      %v3341 = vadd.f32 %v3339, %v3340
      %v3342 = vrot.slane %v3341, 1
      %v3343 = vadd.f32 %v3341, %v3342
      %v3344 = vsel %vm589, %v3276, 0.0
      %v3345 = vsel %vm1877, %v3277, 0.0
      %v3346 = vadd.f32 %v3344, %v3345
      %v3347 = vrot.slane %v3346, 4
      %v3348 = vadd.f32 %v3346, %v3347
      %v3349 = vrot.slane %v3348, 2
      %v3350 = vadd.f32 %v3348, %v3349
      %v3351 = vrot.slane %v3350, 1
      %v3352 = vadd.f32 %v3350, %v3351
      %v3353 = vsel %vm589, %v3278, 0.0
      %v3354 = vsel %vm1877, %v3279, 0.0
      %v3355 = vadd.f32 %v3353, %v3354
      %v3356 = vrot.slane %v3355, 4
      %v3357 = vadd.f32 %v3355, %v3356
      %v3358 = vrot.slane %v3357, 2
      %v3359 = vadd.f32 %v3357, %v3358
      %v3360 = vrot.slane %v3359, 1
      %v3361 = vadd.f32 %v3359, %v3360
      %v3362 = vsel %vm589, %v3280, 0.0
      %v3363 = vsel %vm1877, %v3281, 0.0
      %v3364 = vadd.f32 %v3362, %v3363
      %v3365 = vrot.slane %v3364, 4
      %v3366 = vadd.f32 %v3364, %v3365
      %v3367 = vrot.slane %v3366, 2
      %v3368 = vadd.f32 %v3366, %v3367
      %v3369 = vrot.slane %v3368, 1
      %v3370 = vadd.f32 %v3368, %v3369
      %v3371 = vsel %vm589, %v3282, 0.0
      %v3372 = vsel %vm1877, %v3283, 0.0
      %v3373 = vadd.f32 %v3371, %v3372
      %v3374 = vrot.slane %v3373, 4
      %v3375 = vadd.f32 %v3373, %v3374
      %v3376 = vrot.slane %v3375, 2
      %v3377 = vadd.f32 %v3375, %v3376
      %v3378 = vrot.slane %v3377, 1
      %v3379 = vadd.f32 %v3377, %v3378
      %v3380 = vsel %vm589, %v3284, 0.0
      %v3381 = vsel %vm1877, %v3285, 0.0
      %v3382 = vadd.f32 %v3380, %v3381
      %v3383 = vrot.slane %v3382, 4
      %v3384 = vadd.f32 %v3382, %v3383
      %v3385 = vrot.slane %v3384, 2
      %v3386 = vadd.f32 %v3384, %v3385
      %v3387 = vrot.slane %v3386, 1
      %v3388 = vadd.f32 %v3386, %v3387
      %v3389 = vsel %vm589, %v3286, 0.0
      %v3390 = vsel %vm1877, %v3287, 0.0
      %v3391 = vadd.f32 %v3389, %v3390
      %v3392 = vrot.slane %v3391, 4
      %v3393 = vadd.f32 %v3391, %v3392
      %v3394 = vrot.slane %v3393, 2
      %v3395 = vadd.f32 %v3393, %v3394
      %v3396 = vrot.slane %v3395, 1
      %v3397 = vadd.f32 %v3395, %v3396
      %v3398 = vsel %vm589, %v3288, 0.0
      %v3399 = vsel %vm1877, %v3289, 0.0
      %v3400 = vadd.f32 %v3398, %v3399
      %v3401 = vrot.slane %v3400, 4
      %v3402 = vadd.f32 %v3400, %v3401
      %v3403 = vrot.slane %v3402, 2
      %v3404 = vadd.f32 %v3402, %v3403
      %v3405 = vrot.slane %v3404, 1
      %v3406 = vadd.f32 %v3404, %v3405
      %v3407 = vsel %vm589, %v3290, 0.0
      %v3408 = vsel %vm1877, %v3291, 0.0
      %v3409 = vadd.f32 %v3407, %v3408
      %v3410 = vrot.slane %v3409, 4
      %v3411 = vadd.f32 %v3409, %v3410
      %v3412 = vrot.slane %v3411, 2
      %v3413 = vadd.f32 %v3411, %v3412
      %v3414 = vrot.slane %v3413, 1
      %v3415 = vadd.f32 %v3413, %v3414
      %v3416 = vsel %vm589, %v3292, 0.0
      %v3417 = vsel %vm1877, %v3293, 0.0
      %v3418 = vadd.f32 %v3416, %v3417
      %v3419 = vrot.slane %v3418, 4
      %v3420 = vadd.f32 %v3418, %v3419
      %v3421 = vrot.slane %v3420, 2
      %v3422 = vadd.f32 %v3420, %v3421
      %v3423 = vrot.slane %v3422, 1
      %v3424 = vadd.f32 %v3422, %v3423
      %v3425 = vsel %vm589, %v3294, 0.0
      %v3426 = vsel %vm1877, %v3295, 0.0
      %v3427 = vadd.f32 %v3425, %v3426
      %v3428 = vrot.slane %v3427, 4
      %v3429 = vadd.f32 %v3427, %v3428
      %v3430 = vrot.slane %v3429, 2
      %v3431 = vadd.f32 %v3429, %v3430
      %v3432 = vrot.slane %v3431, 1
      %v3433 = vadd.f32 %v3431, %v3432
      %v3434 = vsel %vm589, %v3296, 0.0
      %v3435 = vsel %vm1877, %v3297, 0.0
      %v3436 = vadd.f32 %v3434, %v3435
      %v3437 = vrot.slane %v3436, 4
      %v3438 = vadd.f32 %v3436, %v3437
      %v3439 = vrot.slane %v3438, 2
      %v3440 = vadd.f32 %v3438, %v3439
      %v3441 = vrot.slane %v3440, 1
      %v3442 = vadd.f32 %v3440, %v3441
      %v3443 = vsel %vm589, %v3298, 0.0
      %v3444 = vsel %vm1877, %v3299, 0.0
      %v3445 = vadd.f32 %v3443, %v3444
      %v3446 = vrot.slane %v3445, 4
      %v3447 = vadd.f32 %v3445, %v3446
      %v3448 = vrot.slane %v3447, 2
      %v3449 = vadd.f32 %v3447, %v3448
      %v3450 = vrot.slane %v3449, 1
      %v3451 = vadd.f32 %v3449, %v3450
      %v3452 = vsel %vm589, %v3300, 0.0
      %v3453 = vsel %vm1877, %v3301, 0.0
      %v3454 = vadd.f32 %v3452, %v3453
      %v3455 = vrot.slane %v3454, 4
      %v3456 = vadd.f32 %v3454, %v3455
      %v3457 = vrot.slane %v3456, 2
      %v3458 = vadd.f32 %v3456, %v3457
      %v3459 = vrot.slane %v3458, 1
      %v3460 = vadd.f32 %v3458, %v3459
      %v3461 = vsel %vm589, %v3302, 0.0
      %v3462 = vsel %vm1877, %v3303, 0.0
      %v3463 = vadd.f32 %v3461, %v3462
      %v3464 = vrot.slane %v3463, 4
      %v3465 = vadd.f32 %v3463, %v3464
      %v3466 = vrot.slane %v3465, 2
      %v3467 = vadd.f32 %v3465, %v3466
      %v3468 = vrot.slane %v3467, 1
      %v3469 = vadd.f32 %v3467, %v3468
      %v3470 = vsel %vm589, %v3304, 0.0
      %v3471 = vsel %vm1877, %v3305, 0.0
      %v3472 = vadd.f32 %v3470, %v3471
      %v3473 = vrot.slane %v3472, 4
      %v3474 = vadd.f32 %v3472, %v3473
      %v3475 = vrot.slane %v3474, 2
      %v3476 = vadd.f32 %v3474, %v3475
      %v3477 = vrot.slane %v3476, 1
      %v3478 = vadd.f32 %v3476, %v3477
      %v3479 = vsel %vm589, %v3306, 0.0
      %v3480 = vsel %vm1877, %v3307, 0.0
      %v3481 = vadd.f32 %v3479, %v3480
      %v3482 = vrot.slane %v3481, 4
      %v3483 = vadd.f32 %v3481, %v3482
      %v3484 = vrot.slane %v3483, 2
      %v3485 = vadd.f32 %v3483, %v3484
      %v3486 = vrot.slane %v3485, 1
      %v3487 = vadd.f32 %v3485, %v3486
      %v3508 = vsel %vm2077, %v3325, %v3316
      %v3509 = vsel %vm2079, %v3334, %v3508
      %v3510 = vsel %vm2081, %v3343, %v3509
      %v3511 = vsel %vm2083, %v3352, %v3510
      %v3512 = vsel %vm2085, %v3361, %v3511
      %v3513 = vsel %vm2087, %v3370, %v3512
      %v3514 = vsel %vm2089, %v3379, %v3513
      %v3515 = vsel %vm2077, %v3397, %v3388
      %v3516 = vsel %vm2079, %v3406, %v3515
      %v3517 = vsel %vm2081, %v3415, %v3516
      %v3518 = vsel %vm2083, %v3424, %v3517
      %v3519 = vsel %vm2085, %v3433, %v3518
      %v3520 = vsel %vm2087, %v3442, %v3519
      %v3521 = vsel %vm2089, %v3451, %v3520
      %v3522 = vsel %vm2077, %v3469, %v3460
      %v3523 = vsel %vm2079, %v3478, %v3522
      %v3524 = vsel %vm2081, %v3487, %v3523
      %v3527 = vsel %vm2107, %v3524, 0
      %3529 = vmatprep.subr.mxu0 0.0
      %3530 = vmatpush1.msra.mxu0 %v3514
      %3531 = vmatprep.subr.mxu0 0.0
      %3532 = vmatpush1.msra.mxu0 %v3521
      %3533 = vmatprep.subr.mxu0 0.0
      %3534 = vmatpush1.msra.mxu0 %v3527
      %3535 = vmatprep.subr.mxu0 0.0
      %3536 = vmatpush1.msra.mxu0 0.0
      %3537 = vmatprep.subr.mxu0 0.0
      %3538 = vmatpush1.msra.mxu0 0.0
      %3539 = vmatprep.subr.mxu0 0.0
      %3540 = vmatpush1.msra.mxu0 0.0
      %3541 = vmatprep.subr.mxu0 0.0
      %3542 = vmatpush1.msra.mxu0 0.0
      %3543 = vmatprep.subr.mxu0 0.0
      %3544 = vmatpush1.msra.mxu0 0.0
      %3545 = vmatprep.subr.mxu0 0.0
      %3546 = vmatpush1.msra.mxu0 0.0
      %3547 = vmatprep.subr.mxu0 0.0
      %3548 = vmatpush1.msra.mxu0 0.0
      %3549 = vmatprep.subr.mxu0 0.0
      %3550 = vmatpush1.msra.mxu0 0.0
      %3551 = vmatprep.subr.mxu0 0.0
      %3552 = vmatpush1.msra.mxu0 0.0
      %3553 = vmatprep.subr.mxu0 0.0
      %3554 = vmatpush1.msra.mxu0 0.0
      %3555 = vmatprep.subr.mxu0 0.0
      %3556 = vmatpush1.msra.mxu0 0.0
      %3557 = vmatprep.subr.mxu0 0.0
      %3558 = vmatpush1.msra.mxu0 0.0
      %3559 = vmatprep.subr.mxu0 0.0
      %3560 = vmatpush1.msra.mxu0 0.0
      %3561 = vmatprep.subr.mxu0 0.0
      %3562 = vmatpush1.msra.mxu0 0.0
      %3563 = vmatprep.subr.mxu0 0.0
      %3564 = vmatpush1.msra.mxu0 0.0
      %3565 = vmatprep.subr.mxu0 0.0
      %3566 = vmatpush1.msra.mxu0 0.0
      %3567 = vmatprep.subr.mxu0 0.0
      %3568 = vmatpush1.msra.mxu0 0.0
      %3569 = vmatprep.subr.mxu0 0.0
      %3570 = vmatpush1.msra.mxu0 0.0
      %3571 = vmatprep.subr.mxu0 0.0
      %3572 = vmatpush1.msra.mxu0 0.0
      %3573 = vmatprep.subr.mxu0 0.0
      %3574 = vmatpush1.msra.mxu0 0.0
      %3575 = vmatprep.subr.mxu0 0.0
      %3576 = vmatpush1.msra.mxu0 0.0
      %3577 = vmatprep.subr.mxu0 0.0
      %3578 = vmatpush1.msra.mxu0 0.0
      %3579 = vmatprep.subr.mxu0 0.0
      %3580 = vmatpush1.msra.mxu0 0.0
      %3581 = vmatprep.subr.mxu0 0.0
      %3582 = vmatpush1.msra.mxu0 0.0
      %3583 = vmatprep.subr.mxu0 0.0
      %3584 = vmatpush1.msra.mxu0 0.0
      %3585 = vmatprep.subr.mxu0 0.0
      %3586 = vmatpush1.msra.mxu0 0.0
      %3587 = vmatprep.subr.mxu0 0.0
      %3588 = vmatpush1.msra.mxu0 0.0
      %3589 = vmatprep.subr.mxu0 0.0
      %3590 = vmatpush1.msra.mxu0 0.0
      %3591 = vmatprep.subr.mxu0 0.0
      %3592 = vmatpush1.msra.mxu0 0.0
      %3593 = vmatprep.mubr.f32.mxu0 0.0
      %3594 = vmatmul.mubr.f32.gmra.mrb[0].mxu0 %v2105
      %v3595 = vpop.f32.mrb[0].mxu0
      %v3596 = vadd.f32 0.0, %v3595
      %v3597 = vpop.f32.mrb[0].mxu0
      %3598 = vdwg.mxu0
      %s3599 = scalar_lea.vmem %s425, 8
      %3600 = vst.msk [vmem:[%s3599] sm:$0xff] %vm589, %v3596
      %p3601 = scmp.lt.s32.totalorder %s19, 1
      %s3602 = scalar_select %p3601, %s19, 1
      %s3603 = smul.addr %s3602, 2
      %s3604 = smul.addr %s3603, 8
      %s3605 = scalar_lea.vmem %s8, %s3604
      // Predicated region
      $region53: #{_lambda_.2} parent=51 // pred_check
        %p3606 = pneg %p240
      $region54: #{_lambda_.2} parent=51 // pred_check_branch
        %3608 = sbr.rel (%p3606) target = $region56
      $region55: #{_lambda_.2} parent=51 // pred_region
        _
      $region56: #{_lambda_.2} parent=51 // pred_fallthru
        _
    $region52: #{_lambda_.2} parent=5 // pred_fallthru
      _
    %p3609 = scmp.le.s32.totalorder 2, %s14
    // Predicated region
    $region57: #{_lambda_.2} parent=5 // pred_check
      %p3610 = pneg %p3609
    $region58: #{_lambda_.2} parent=5 // pred_check_branch
      %3612 = sbr.rel (%p3610) target = $region60
    $region59: #{_lambda_.2} parent=5 // pred_region
      %s3613 = ssub.s32 %s14, 2
      // Predicated region
      $region61: #{_lambda_.2} parent=59 // pred_check
        %p3614 = pneg %p246
      $region62: #{_lambda_.2} parent=59 // pred_check_branch
        %3616 = sbr.rel (%p3614) target = $region64
      $region63: #{_lambda_.2} parent=59 // pred_region
        %p3617 = scmp.lt.s32.totalorder %s20, 1
        %s3618 = scalar_select %p3617, %s20, 1
        %s3619 = smul.addr %s3618, 2
        %s3620 = smul.addr %s3619, 8
        %s3621 = scalar_lea.vmem %s8, %s3620
      $region64: #{_lambda_.2} parent=59 // pred_fallthru
        _
    $region60: #{_lambda_.2} parent=5 // pred_fallthru
      _
  $region6: #{_lambda_.2} parent=0 // loop_footer
    %s18 = sadd.s32 1, %s14
  $region7: #{_lambda_.2} parent=0 // loop_footer_branch
    %13 = sbr.rel target = $region3
  $region8: #{_lambda_.2} parent=0 // loop_exit
    _

</llo_original>
